<compile_context>
chip_gen: v6e
topology: v6e:2x2x1
jax: 0.10.0
libtpu: 0.0.40
codegen_flags: <defaults>
</compile_context>

<pallas_src>
import functools

import jax
import jax.numpy as jnp
from jax import lax
from jax.experimental import pallas as pl
from jax.experimental.pallas import tpu as pltpu


# ---------------------------------------------------------------------------
# small in-kernel helpers (operate on values, everything stays in VMEM/vregs)
# ---------------------------------------------------------------------------
def _layer_norm(z, gamma, beta, eps):
    mean = jnp.mean(z, axis=-1, keepdims=True)
    c = z - mean
    var = jnp.mean(c * c, axis=-1, keepdims=True)
    return c * lax.rsqrt(var + eps) * gamma + beta


def _swap01(x):
    # (a, b, d) -> (b, a, d).  einshape is the layout-aware Mosaic path; fall
    # back to jnp.swapaxes if the API signature differs in this JAX build.
    try:
        return pltpu.einshape("abd->bad", x)
    except Exception:  # pragma: no cover - trace-time API fallback only
        return jnp.swapaxes(x, 0, 1)


def _mha_one_batch(qb, kb, vb, bias_b, num_heads):
    """qb:(Sq,E) f32 (already scaled); kb,vb:(Skv,E) f32; bias_b:(mq,Skv) f32 additive."""
    sq, E = qb.shape
    skv = kb.shape[0]
    dh = E // num_heads

    # heads -> leading batch dim, then one batched MXU push for QK^T and PV
    qh = _swap01(qb.reshape(sq, num_heads, dh)).astype(jnp.bfloat16)    # (H,Sq,Dh)
    kh = _swap01(kb.reshape(skv, num_heads, dh)).astype(jnp.bfloat16)   # (H,Sk,Dh)
    vh = _swap01(vb.reshape(skv, num_heads, dh)).astype(jnp.bfloat16)   # (H,Sk,Dh)

    scores = lax.dot_general(qh, kh, (((2,), (2,)), ((0,), (0,))),
                             preferred_element_type=jnp.float32)        # (H,Sq,Sk)
    logits = scores + bias_b[None]            # additive mask, broadcast over heads
    m = jnp.max(logits, axis=-1, keepdims=True)
    p = jnp.exp(logits - m)                   # un-normalized probabilities (f32)
    denom = jnp.sum(p, axis=-1, keepdims=True)

    ctx = lax.dot_general(p.astype(jnp.bfloat16), vh,
                          (((2,), (1,)), ((0,), (0,))),
                          preferred_element_type=jnp.float32)           # (H,Sq,Dh)
    ctx = ctx * pl.reciprocal(denom, approx=True)    # normalize after PV (EUP)
    ctx = _swap01(ctx)                                                  # (Sq,H,Dh)
    return ctx.reshape(sq, E)


def _attn_add_ln(x_rows, k_rows, v_rows, bias, wq, wk, wv, wo, gamma, beta,
                 *, bt, sq, skv, num_heads, scale, eps):
    """x_rows:(bt*Sq,E) f32; k_rows/v_rows:(bt*Skv,E) f32; bias:(bt,mq,Skv) f32."""
    E = x_rows.shape[-1]
    xb = x_rows.astype(jnp.bfloat16)
    kb = k_rows.astype(jnp.bfloat16)
    vb = v_rows.astype(jnp.bfloat16)

    # projections over the flattened row dim (M = bt*S) for MXU fill;
    # softmax scale folded into Q once (equivalent to masked_fill-then-/sqrt(E)).
    q = jnp.dot(xb, wq, preferred_element_type=jnp.float32) * scale
    k = jnp.dot(kb, wk, preferred_element_type=jnp.float32)
    v = jnp.dot(vb, wv, preferred_element_type=jnp.float32)

    q3 = q.reshape(bt, sq, E)
    k3 = k.reshape(bt, skv, E)
    v3 = v.reshape(bt, skv, E)
    outs = [_mha_one_batch(q3[i], k3[i], v3[i], bias[i], num_heads)
            for i in range(bt)]
    attn = outs[0] if bt == 1 else jnp.concatenate(outs, axis=0)        # (bt*Sq,E)

    proj = jnp.dot(attn.astype(jnp.bfloat16), wo,
                   preferred_element_type=jnp.float32)
    return _layer_norm(proj + x_rows, gamma, beta, eps)


# ---------------------------------------------------------------------------
# fused DecoderBlock kernel: grid = (bs // bt,), everything else in one body
# ---------------------------------------------------------------------------
def _decoder_block_kernel(x_ref, kin_ref, vin_ref, tbias_ref, sbias_ref,
                          swq_ref, swk_ref, swv_ref, swo_ref, ng_ref, nb_ref,
                          cwq_ref, cwk_ref, cwv_ref, cwo_ref, g1_ref, b1_ref,
                          w0_ref, b0_ref, w1_ref, b1f_ref, g2_ref, b2_ref,
                          o_ref, *, num_heads, scale, eps):
    bt, sq, E = x_ref.shape
    sk = kin_ref.shape[1]

    x = x_ref[...].astype(jnp.float32).reshape(bt * sq, E)
    kin = kin_ref[...].astype(jnp.float32).reshape(bt * sk, E)
    vin = vin_ref[...].astype(jnp.float32).reshape(bt * sk, E)
    tbias = tbias_ref[...]                       # (bt, Sq, Sq) additive bias
    sbias = sbias_ref[...]                       # (bt, 1,  Sk) additive bias

    # 1) masked self-attention + residual + DecoderBlock.norm (dropout = id)
    query = _attn_add_ln(
        x, x, x, tbias,
        swq_ref[...], swk_ref[...], swv_ref[...], swo_ref[...],
        ng_ref[...], nb_ref[...],
        bt=bt, sq=sq, skv=sq, num_heads=num_heads, scale=scale, eps=eps)

    # 2) cross-attention + residual + layer_norm1 (query never leaves VMEM)
    x1 = _attn_add_ln(
        query, kin, vin, sbias,
        cwq_ref[...], cwk_ref[...], cwv_ref[...], cwo_ref[...],
        g1_ref[...], b1_ref[...],
        bt=bt, sq=sq, skv=sk, num_heads=num_heads, scale=scale, eps=eps)

    # 3) FFN (ff0 -> ReLU -> ff1) + residual + layer_norm2
    h = jnp.dot(x1.astype(jnp.bfloat16), w0_ref[...],
                preferred_element_type=jnp.float32) + b0_ref[...]
    h = jnp.maximum(h, 0.0)
    y = jnp.dot(h.astype(jnp.bfloat16), w1_ref[...],
                preferred_element_type=jnp.float32) + b1f_ref[...]
    out = _layer_norm(x1 + y, g2_ref[...], b2_ref[...], eps)

    o_ref[...] = out.reshape(bt, sq, E).astype(o_ref.dtype)


# ---------------------------------------------------------------------------
# wrapper
# ---------------------------------------------------------------------------
def _const_spec(shape):
    """BlockSpec for grid-invariant (weight) blocks; single-buffered if supported."""
    index_map = lambda b: (0,) * len(shape)
    try:
        return pl.BlockSpec(shape, index_map, pipeline_mode=pl.Buffered(1))
    except Exception:  # older/newer API without pipeline_mode / Buffered
        return pl.BlockSpec(shape, index_map)


def _pick_batch_tile(bs, max_tile=8):
    # largest batch tile that still leaves >=2 grid steps (v7x megacore) while
    # folding as many batches as possible into the matmul M dimension.
    best = 1
    for t in range(1, min(bs, max_tile) + 1):
        if bs % t == 0 and bs // t >= 2:
            best = t
    return best


def decoder_block_forward(params, x, K, V, src_mask, trg_mask,
                          *, embed_dim, num_heads, eps=1e-5, batch_tile=None):
    p = params
    bs, sq, E = x.shape
    sk = K.shape[1]
    F = p["ff0_w"].shape[1]
    assert E == embed_dim and E % num_heads == 0

    bt = batch_tile if batch_tile is not None else _pick_batch_tile(bs)
    assert bs % bt == 0
    grid = (bs // bt,)
    scale = 1.0 / (float(E) ** 0.5)

    # additive mask biases in their natural (un-broadcast) shapes
    def to_bias(mask):
        m = jnp.asarray(mask).reshape(bs, mask.shape[-2], mask.shape[-1])
        return jnp.where(m == 0, jnp.float32(-1e20), jnp.float32(0.0))

    tbias = to_bias(trg_mask)        # (bs, Sq, Sq)
    sbias = to_bias(src_mask)        # (bs, 1,  Sk)

    bf = jnp.bfloat16
    weights = [
        p["self_wq"].astype(bf), p["self_wk"].astype(bf),
        p["self_wv"].astype(bf), p["self_wfc"].astype(bf),
        p["norm_g"].reshape(1, E), p["norm_b"].reshape(1, E),
        p["cross_wq"].astype(bf), p["cross_wk"].astype(bf),
        p["cross_wv"].astype(bf), p["cross_wfc"].astype(bf),
        p["ln1_g"].reshape(1, E), p["ln1_b"].reshape(1, E),
        p["ff0_w"].astype(bf), p["ff0_b"].reshape(1, F),
        p["ff1_w"].astype(bf), p["ff1_b"].reshape(1, E),
        p["ln2_g"].reshape(1, E), p["ln2_b"].reshape(1, E),
    ]
    weight_specs = [_const_spec(tuple(w.shape)) for w in weights]

    dh = E // num_heads
    flops = (2 * E * E * (4 * bs * sq + 2 * bs * sq + 2 * bs * sk)   # projections
             + 4 * bs * num_heads * dh * sq * (sq + sk)              # QK^T + PV
             + 4 * bs * sq * E * F)                                  # FFN
    transcendentals = bs * num_heads * sq * (sq + sk)
    bytes_accessed = (4 * (2 * bs * sq * E + 2 * bs * sk * E + bs * sq * sq + bs * sk)
                      + 2 * (8 * E * E + 2 * E * F) + 4 * (7 * E + F))

    return pl.pallas_call(
        functools.partial(_decoder_block_kernel,
                          num_heads=num_heads, scale=scale, eps=eps),
        out_shape=jax.ShapeDtypeStruct((bs, sq, E), x.dtype),
        grid=grid,
        in_specs=[
            pl.BlockSpec((bt, sq, E), lambda b: (b, 0, 0)),      # x (decoder input)
            pl.BlockSpec((bt, sk, E), lambda b: (b, 0, 0)),      # encoder K input
            pl.BlockSpec((bt, sk, E), lambda b: (b, 0, 0)),      # encoder V input
            pl.BlockSpec((bt, sq, sq), lambda b: (b, 0, 0)),     # trg additive bias
            pl.BlockSpec((bt, 1, sk), lambda b: (b, 0, 0)),      # src additive bias
            *weight_specs,
        ],
        out_specs=pl.BlockSpec((bt, sq, E), lambda b: (b, 0, 0)),
        compiler_params=pltpu.CompilerParams(
            dimension_semantics=("parallel",)),
        cost_estimate=pl.CostEstimate(flops=int(flops),
                                      transcendentals=int(transcendentals),
                                      bytes_accessed=int(bytes_accessed)),
    )(x, K, V, tbias, sbias, *weights)


def init_params(key, embed_dim, num_heads, forward_expansion):
    E = embed_dim
    F = forward_expansion * embed_dim
    ks = jax.random.split(key, 10)

    def w(k, shape, scale=0.02):
        return (scale * jax.random.normal(k, shape)).astype(jnp.float32)

    return dict(
        # DecoderBlock.attention (self-attention), no biases (matches nn.Linear(bias=False))
        self_wq=w(ks[0], (E, E)), self_wk=w(ks[1], (E, E)),
        self_wv=w(ks[2], (E, E)), self_wfc=w(ks[3], (E, E)),
        # DecoderBlock.norm
        norm_g=jnp.ones((E,), jnp.float32), norm_b=jnp.zeros((E,), jnp.float32),
        # TransformerBlock.attention (cross-attention)
        cross_wq=w(ks[4], (E, E)), cross_wk=w(ks[5], (E, E)),
        cross_wv=w(ks[6], (E, E)), cross_wfc=w(ks[7], (E, E)),
        # TransformerBlock layer norms
        ln1_g=jnp.ones((E,), jnp.float32), ln1_b=jnp.zeros((E,), jnp.float32),
        ln2_g=jnp.ones((E,), jnp.float32), ln2_b=jnp.zeros((E,), jnp.float32),
        # FFN (nn.Linear has bias by default)
        ff0_w=w(ks[8], (E, F)), ff0_b=jnp.zeros((F,), jnp.float32),
        ff1_w=w(ks[9], (F, E)), ff1_b=jnp.zeros((E,), jnp.float32),
    )


if __name__ == "__main__":
    embed_dim, num_heads, forward_expansion = 128, 4, 2
    bs, trg_len, src_len = 2, 8, 16

    key = jax.random.PRNGKey(0)
    kx, kk, kv, kp = jax.random.split(key, 4)
    x = jax.random.normal(kx, (bs, trg_len, embed_dim), jnp.float32)
    K = jax.random.normal(kk, (bs, src_len, embed_dim), jnp.float32)
    V = jax.random.normal(kv, (bs, src_len, embed_dim), jnp.float32)

    # causal target mask (bs, 1, Lq, Lq), full source mask (bs, 1, 1, Lk)
    trg_mask = jnp.broadcast_to(
        jnp.tril(jnp.ones((trg_len, trg_len), jnp.float32))[None, None],
        (bs, 1, trg_len, trg_len))
    src_mask = jnp.ones((bs, 1, 1, src_len), jnp.float32)

    params = init_params(kp, embed_dim, num_heads, forward_expansion)

    fwd = jax.jit(functools.partial(
        decoder_block_forward, embed_dim=embed_dim, num_heads=num_heads))
    out = fwd(params, x, K, V, src_mask, trg_mask)
    out = jax.block_until_ready(out)
    assert out.shape == (bs, trg_len, embed_dim)
    assert bool(jnp.all(jnp.isfinite(out)))
    print("KERNEL_OK")
</pallas_src>

<mosaic_0001>
module attributes {stable_mosaic.version = 11 : i64} {
  func.func @_decoder_block_kernel(%arg0: i32, %arg1: memref<1x8x128xf32, #tpu.memory_space<vmem>>, %arg2: memref<1x16x128xf32, #tpu.memory_space<vmem>>, %arg3: memref<1x16x128xf32, #tpu.memory_space<vmem>>, %arg4: memref<1x8x8xf32, #tpu.memory_space<vmem>>, %arg5: memref<1x1x16xf32, #tpu.memory_space<vmem>>, %arg6: memref<128x128xbf16, #tpu.memory_space<vmem>>, %arg7: memref<128x128xbf16, #tpu.memory_space<vmem>>, %arg8: memref<128x128xbf16, #tpu.memory_space<vmem>>, %arg9: memref<128x128xbf16, #tpu.memory_space<vmem>>, %arg10: memref<1x128xf32, #tpu.memory_space<vmem>>, %arg11: memref<1x128xf32, #tpu.memory_space<vmem>>, %arg12: memref<128x128xbf16, #tpu.memory_space<vmem>>, %arg13: memref<128x128xbf16, #tpu.memory_space<vmem>>, %arg14: memref<128x128xbf16, #tpu.memory_space<vmem>>, %arg15: memref<128x128xbf16, #tpu.memory_space<vmem>>, %arg16: memref<1x128xf32, #tpu.memory_space<vmem>>, %arg17: memref<1x128xf32, #tpu.memory_space<vmem>>, %arg18: memref<128x256xbf16, #tpu.memory_space<vmem>>, %arg19: memref<1x256xf32, #tpu.memory_space<vmem>>, %arg20: memref<256x128xbf16, #tpu.memory_space<vmem>>, %arg21: memref<1x128xf32, #tpu.memory_space<vmem>>, %arg22: memref<1x128xf32, #tpu.memory_space<vmem>>, %arg23: memref<1x128xf32, #tpu.memory_space<vmem>>, %arg24: memref<1x8x128xf32, #tpu.memory_space<vmem>>) attributes {dimension_semantics = [#tpu.dimension_semantics<parallel>], iteration_bounds = array<i64: 2>, scalar_prefetch = 0 : i64, scratch_operands = 0 : i64, tpu.core_type = #tpu.core_type<tc>, window_params = [{transform_indices = @transform_0, window_bounds = array<i64: 1, 8, 128>}, {transform_indices = @transform_1, window_bounds = array<i64: 1, 16, 128>}, {transform_indices = @transform_2, window_bounds = array<i64: 1, 16, 128>}, {transform_indices = @transform_3, window_bounds = array<i64: 1, 8, 8>}, {transform_indices = @transform_4, window_bounds = array<i64: 1, 1, 16>}, {pipeline_mode = #tpu.pipeline_mode<synchronous>, transform_indices = @transform_5, window_bounds = array<i64: 128, 128>}, {pipeline_mode = #tpu.pipeline_mode<synchronous>, transform_indices = @transform_6, window_bounds = array<i64: 128, 128>}, {pipeline_mode = #tpu.pipeline_mode<synchronous>, transform_indices = @transform_7, window_bounds = array<i64: 128, 128>}, {pipeline_mode = #tpu.pipeline_mode<synchronous>, transform_indices = @transform_8, window_bounds = array<i64: 128, 128>}, {pipeline_mode = #tpu.pipeline_mode<synchronous>, transform_indices = @transform_9, window_bounds = array<i64: 1, 128>}, {pipeline_mode = #tpu.pipeline_mode<synchronous>, transform_indices = @transform_10, window_bounds = array<i64: 1, 128>}, {pipeline_mode = #tpu.pipeline_mode<synchronous>, transform_indices = @transform_11, window_bounds = array<i64: 128, 128>}, {pipeline_mode = #tpu.pipeline_mode<synchronous>, transform_indices = @transform_12, window_bounds = array<i64: 128, 128>}, {pipeline_mode = #tpu.pipeline_mode<synchronous>, transform_indices = @transform_13, window_bounds = array<i64: 128, 128>}, {pipeline_mode = #tpu.pipeline_mode<synchronous>, transform_indices = @transform_14, window_bounds = array<i64: 128, 128>}, {pipeline_mode = #tpu.pipeline_mode<synchronous>, transform_indices = @transform_15, window_bounds = array<i64: 1, 128>}, {pipeline_mode = #tpu.pipeline_mode<synchronous>, transform_indices = @transform_16, window_bounds = array<i64: 1, 128>}, {pipeline_mode = #tpu.pipeline_mode<synchronous>, transform_indices = @transform_17, window_bounds = array<i64: 128, 256>}, {pipeline_mode = #tpu.pipeline_mode<synchronous>, transform_indices = @transform_18, window_bounds = array<i64: 1, 256>}, {pipeline_mode = #tpu.pipeline_mode<synchronous>, transform_indices = @transform_19, window_bounds = array<i64: 256, 128>}, {pipeline_mode = #tpu.pipeline_mode<synchronous>, transform_indices = @transform_20, window_bounds = array<i64: 1, 128>}, {pipeline_mode = #tpu.pipeline_mode<synchronous>, transform_indices = @transform_21, window_bounds = array<i64: 1, 128>}, {pipeline_mode = #tpu.pipeline_mode<synchronous>, transform_indices = @transform_22, window_bounds = array<i64: 1, 128>}, {transform_indices = @transform_23, window_bounds = array<i64: 1, 8, 128>}]} {
    %c0 = arith.constant 0 : index
    %c0_0 = arith.constant 0 : index
    %c0_1 = arith.constant 0 : index
    %0 = vector.load %arg1[%c0, %c0_0, %c0_1] : memref<1x8x128xf32, #tpu.memory_space<vmem>>, vector<1x8x128xf32>
    %1 = vector.shape_cast %0 : vector<1x8x128xf32> to vector<8x128xf32>
    %c0_2 = arith.constant 0 : index
    %c0_3 = arith.constant 0 : index
    %c0_4 = arith.constant 0 : index
    %2 = vector.load %arg2[%c0_2, %c0_3, %c0_4] : memref<1x16x128xf32, #tpu.memory_space<vmem>>, vector<1x16x128xf32>
    %3 = vector.shape_cast %2 : vector<1x16x128xf32> to vector<16x128xf32>
    %c0_5 = arith.constant 0 : index
    %c0_6 = arith.constant 0 : index
    %c0_7 = arith.constant 0 : index
    %4 = vector.load %arg3[%c0_5, %c0_6, %c0_7] : memref<1x16x128xf32, #tpu.memory_space<vmem>>, vector<1x16x128xf32>
    %5 = vector.shape_cast %4 : vector<1x16x128xf32> to vector<16x128xf32>
    %c0_8 = arith.constant 0 : index
    %c0_9 = arith.constant 0 : index
    %c0_10 = arith.constant 0 : index
    %6 = vector.load %arg4[%c0_8, %c0_9, %c0_10] : memref<1x8x8xf32, #tpu.memory_space<vmem>>, vector<1x8x8xf32>
    %c0_11 = arith.constant 0 : index
    %c0_12 = arith.constant 0 : index
    %c0_13 = arith.constant 0 : index
    %7 = vector.load %arg5[%c0_11, %c0_12, %c0_13] : memref<1x1x16xf32, #tpu.memory_space<vmem>>, vector<1x1x16xf32>
    %c0_14 = arith.constant 0 : index
    %c0_15 = arith.constant 0 : index
    %8 = vector.load %arg6[%c0_14, %c0_15] : memref<128x128xbf16, #tpu.memory_space<vmem>>, vector<128x128xbf16>
    %c0_16 = arith.constant 0 : index
    %c0_17 = arith.constant 0 : index
    %9 = vector.load %arg7[%c0_16, %c0_17] : memref<128x128xbf16, #tpu.memory_space<vmem>>, vector<128x128xbf16>
    %c0_18 = arith.constant 0 : index
    %c0_19 = arith.constant 0 : index
    %10 = vector.load %arg8[%c0_18, %c0_19] : memref<128x128xbf16, #tpu.memory_space<vmem>>, vector<128x128xbf16>
    %c0_20 = arith.constant 0 : index
    %c0_21 = arith.constant 0 : index
    %11 = vector.load %arg9[%c0_20, %c0_21] : memref<128x128xbf16, #tpu.memory_space<vmem>>, vector<128x128xbf16>
    %c0_22 = arith.constant 0 : index
    %c0_23 = arith.constant 0 : index
    %12 = vector.load %arg10[%c0_22, %c0_23] : memref<1x128xf32, #tpu.memory_space<vmem>>, vector<1x128xf32>
    %c0_24 = arith.constant 0 : index
    %c0_25 = arith.constant 0 : index
    %13 = vector.load %arg11[%c0_24, %c0_25] : memref<1x128xf32, #tpu.memory_space<vmem>>, vector<1x128xf32>
    %14 = arith.truncf %1 : vector<8x128xf32> to vector<8x128xbf16>
    %15 = arith.truncf %1 : vector<8x128xf32> to vector<8x128xbf16>
    %16 = arith.truncf %1 : vector<8x128xf32> to vector<8x128xbf16>
    %cst = arith.constant dense<0.000000e+00> : vector<8x128xf32>
    %17 = tpu.matmul %14, %8, %cst {dimension_numbers = #tpu.dot_dimension_numbers<[1], [0], [0], [1], [0, 0, 1, 1], [], []>} : vector<8x128xbf16>, vector<128x128xbf16>, vector<8x128xf32> -> vector<8x128xf32>
    %cst_26 = arith.constant 0.0883883461 : f32
    %18 = vector.broadcast %cst_26 : f32 to vector<8x128xf32>
    %19 = arith.mulf %17, %18 : vector<8x128xf32>
    %cst_27 = arith.constant dense<0.000000e+00> : vector<8x128xf32>
    %20 = tpu.matmul %15, %9, %cst_27 {dimension_numbers = #tpu.dot_dimension_numbers<[1], [0], [0], [1], [0, 0, 1, 1], [], []>} : vector<8x128xbf16>, vector<128x128xbf16>, vector<8x128xf32> -> vector<8x128xf32>
    %cst_28 = arith.constant dense<0.000000e+00> : vector<8x128xf32>
    %21 = tpu.matmul %16, %10, %cst_28 {dimension_numbers = #tpu.dot_dimension_numbers<[1], [0], [0], [1], [0, 0, 1, 1], [], []>} : vector<8x128xbf16>, vector<128x128xbf16>, vector<8x128xf32> -> vector<8x128xf32>
    %22 = vector.shape_cast %19 : vector<8x128xf32> to vector<1x8x128xf32>
    %23 = vector.shape_cast %20 : vector<8x128xf32> to vector<1x8x128xf32>
    %24 = vector.shape_cast %21 : vector<8x128xf32> to vector<1x8x128xf32>
    %25 = vector.shape_cast %22 : vector<1x8x128xf32> to vector<8x128xf32>
    %26 = vector.shape_cast %23 : vector<1x8x128xf32> to vector<8x128xf32>
    %27 = vector.shape_cast %24 : vector<1x8x128xf32> to vector<8x128xf32>
    %28 = vector.shape_cast %6 : vector<1x8x8xf32> to vector<8x8xf32>
    %29 = vector.shape_cast %25 : vector<8x128xf32> to vector<8x4x32xf32>
    %30 = tpu.transpose %29, [1, 0, 2] : vector<8x4x32xf32> -> vector<4x8x32xf32>
    %31 = arith.truncf %30 : vector<4x8x32xf32> to vector<4x8x32xbf16>
    %32 = vector.shape_cast %26 : vector<8x128xf32> to vector<8x4x32xf32>
    %33 = tpu.transpose %32, [1, 0, 2] : vector<8x4x32xf32> -> vector<4x8x32xf32>
    %34 = arith.truncf %33 : vector<4x8x32xf32> to vector<4x8x32xbf16>
    %35 = vector.shape_cast %27 : vector<8x128xf32> to vector<8x4x32xf32>
    %36 = tpu.transpose %35, [1, 0, 2] : vector<8x4x32xf32> -> vector<4x8x32xf32>
    %37 = arith.truncf %36 : vector<4x8x32xf32> to vector<4x8x32xbf16>
    %cst_29 = arith.constant dense<0.000000e+00> : vector<4x8x8xf32>
    %38 = tpu.matmul %31, %34, %cst_29 {dimension_numbers = #tpu.dot_dimension_numbers<[2], [2], [1], [1], [0, 0, 0, 1, 1, 1], [0], [0]>} : vector<4x8x32xbf16>, vector<4x8x32xbf16>, vector<4x8x8xf32> -> vector<4x8x8xf32>
    %39 = vector.shape_cast %28 : vector<8x8xf32> to vector<1x8x8xf32>
    %40 = vector.broadcast %39 : vector<1x8x8xf32> to vector<4x8x8xf32>
    %41 = arith.addf %38, %40 : vector<4x8x8xf32>
    %cst_30 = arith.constant dense<0xFF800000> : vector<4x8xf32>
    %42 = vector.multi_reduction <maximumf>, %41, %cst_30 [2] : vector<4x8x8xf32> to vector<4x8xf32>
    %43 = vector.shape_cast %42 : vector<4x8xf32> to vector<4x8x1xf32>
    %44 = vector.broadcast %43 : vector<4x8x1xf32> to vector<4x8x8xf32>
    %45 = arith.subf %41, %44 : vector<4x8x8xf32>
    %46 = math.exp %45 : vector<4x8x8xf32>
    %cst_31 = arith.constant dense<0.000000e+00> : vector<4x8xf32>
    %47 = vector.multi_reduction <add>, %46, %cst_31 [2] : vector<4x8x8xf32> to vector<4x8xf32>
    %48 = vector.shape_cast %47 : vector<4x8xf32> to vector<4x8x1xf32>
    %49 = arith.truncf %46 : vector<4x8x8xf32> to vector<4x8x8xbf16>
    %cst_32 = arith.constant dense<0.000000e+00> : vector<4x8x32xf32>
    %50 = tpu.matmul %49, %37, %cst_32 {dimension_numbers = #tpu.dot_dimension_numbers<[2], [1], [1], [2], [0, 0, 0, 1, 1, 2], [0], [0]>} : vector<4x8x8xbf16>, vector<4x8x32xbf16>, vector<4x8x32xf32> -> vector<4x8x32xf32>
    %51 = tpu.reciprocal %48 {approx = true} : vector<4x8x1xf32> -> vector<4x8x1xf32>
    %52 = vector.broadcast %51 : vector<4x8x1xf32> to vector<4x8x32xf32>
    %53 = arith.mulf %50, %52 : vector<4x8x32xf32>
    %54 = tpu.transpose %53, [1, 0, 2] : vector<4x8x32xf32> -> vector<8x4x32xf32>
    %55 = vector.shape_cast %54 : vector<8x4x32xf32> to vector<8x128xf32>
    %56 = arith.truncf %55 : vector<8x128xf32> to vector<8x128xbf16>
    %cst_33 = arith.constant dense<0.000000e+00> : vector<8x128xf32>
    %57 = tpu.matmul %56, %11, %cst_33 {dimension_numbers = #tpu.dot_dimension_numbers<[1], [0], [0], [1], [0, 0, 1, 1], [], []>} : vector<8x128xbf16>, vector<128x128xbf16>, vector<8x128xf32> -> vector<8x128xf32>
    %58 = arith.addf %57, %1 : vector<8x128xf32>
    %cst_34 = arith.constant dense<0.000000e+00> : vector<8xf32>
    %59 = vector.multi_reduction <add>, %58, %cst_34 [1] : vector<8x128xf32> to vector<8xf32>
    %60 = vector.shape_cast %59 : vector<8xf32> to vector<8x1xf32>
    %cst_35 = arith.constant 1.280000e+02 : f32
    %61 = vector.broadcast %cst_35 : f32 to vector<8x1xf32>
    %62 = arith.divf %60, %61 : vector<8x1xf32>
    %63 = vector.broadcast %62 : vector<8x1xf32> to vector<8x128xf32>
    %64 = arith.subf %58, %63 : vector<8x128xf32>
    %65 = arith.mulf %64, %64 : vector<8x128xf32>
    %cst_36 = arith.constant dense<0.000000e+00> : vector<8xf32>
    %66 = vector.multi_reduction <add>, %65, %cst_36 [1] : vector<8x128xf32> to vector<8xf32>
    %67 = vector.shape_cast %66 : vector<8xf32> to vector<8x1xf32>
    %cst_37 = arith.constant 1.280000e+02 : f32
    %68 = vector.broadcast %cst_37 : f32 to vector<8x1xf32>
    %69 = arith.divf %67, %68 : vector<8x1xf32>
    %cst_38 = arith.constant 9.99999974E-6 : f32
    %70 = vector.broadcast %cst_38 : f32 to vector<8x1xf32>
    %71 = arith.addf %69, %70 : vector<8x1xf32>
    %72 = math.rsqrt %71 : vector<8x1xf32>
    %73 = vector.broadcast %72 : vector<8x1xf32> to vector<8x128xf32>
    %74 = arith.mulf %64, %73 : vector<8x128xf32>
    %75 = vector.broadcast %12 : vector<1x128xf32> to vector<8x128xf32>
    %76 = arith.mulf %74, %75 : vector<8x128xf32>
    %77 = vector.broadcast %13 : vector<1x128xf32> to vector<8x128xf32>
    %78 = arith.addf %76, %77 : vector<8x128xf32>
    %c0_39 = arith.constant 0 : index
    %c0_40 = arith.constant 0 : index
    %79 = vector.load %arg12[%c0_39, %c0_40] : memref<128x128xbf16, #tpu.memory_space<vmem>>, vector<128x128xbf16>
    %c0_41 = arith.constant 0 : index
    %c0_42 = arith.constant 0 : index
    %80 = vector.load %arg13[%c0_41, %c0_42] : memref<128x128xbf16, #tpu.memory_space<vmem>>, vector<128x128xbf16>
    %c0_43 = arith.constant 0 : index
    %c0_44 = arith.constant 0 : index
    %81 = vector.load %arg14[%c0_43, %c0_44] : memref<128x128xbf16, #tpu.memory_space<vmem>>, vector<128x128xbf16>
    %c0_45 = arith.constant 0 : index
    %c0_46 = arith.constant 0 : index
    %82 = vector.load %arg15[%c0_45, %c0_46] : memref<128x128xbf16, #tpu.memory_space<vmem>>, vector<128x128xbf16>
    %c0_47 = arith.constant 0 : index
    %c0_48 = arith.constant 0 : index
    %83 = vector.load %arg16[%c0_47, %c0_48] : memref<1x128xf32, #tpu.memory_space<vmem>>, vector<1x128xf32>
    %c0_49 = arith.constant 0 : index
    %c0_50 = arith.constant 0 : index
    %84 = vector.load %arg17[%c0_49, %c0_50] : memref<1x128xf32, #tpu.memory_space<vmem>>, vector<1x128xf32>
    %85 = arith.truncf %78 : vector<8x128xf32> to vector<8x128xbf16>
    %86 = arith.truncf %3 : vector<16x128xf32> to vector<16x128xbf16>
    %87 = arith.truncf %5 : vector<16x128xf32> to vector<16x128xbf16>
    %cst_51 = arith.constant dense<0.000000e+00> : vector<8x128xf32>
    %88 = tpu.matmul %85, %79, %cst_51 {dimension_numbers = #tpu.dot_dimension_numbers<[1], [0], [0], [1], [0, 0, 1, 1], [], []>} : vector<8x128xbf16>, vector<128x128xbf16>, vector<8x128xf32> -> vector<8x128xf32>
    %cst_52 = arith.constant 0.0883883461 : f32
    %89 = vector.broadcast %cst_52 : f32 to vector<8x128xf32>
    %90 = arith.mulf %88, %89 : vector<8x128xf32>
    %cst_53 = arith.constant dense<0.000000e+00> : vector<16x128xf32>
    %91 = tpu.matmul %86, %80, %cst_53 {dimension_numbers = #tpu.dot_dimension_numbers<[1], [0], [0], [1], [0, 0, 1, 1], [], []>} : vector<16x128xbf16>, vector<128x128xbf16>, vector<16x128xf32> -> vector<16x128xf32>
    %cst_54 = arith.constant dense<0.000000e+00> : vector<16x128xf32>
    %92 = tpu.matmul %87, %81, %cst_54 {dimension_numbers = #tpu.dot_dimension_numbers<[1], [0], [0], [1], [0, 0, 1, 1], [], []>} : vector<16x128xbf16>, vector<128x128xbf16>, vector<16x128xf32> -> vector<16x128xf32>
    %93 = vector.shape_cast %90 : vector<8x128xf32> to vector<1x8x128xf32>
    %94 = vector.shape_cast %91 : vector<16x128xf32> to vector<1x16x128xf32>
    %95 = vector.shape_cast %92 : vector<16x128xf32> to vector<1x16x128xf32>
    %96 = vector.shape_cast %93 : vector<1x8x128xf32> to vector<8x128xf32>
    %97 = vector.shape_cast %94 : vector<1x16x128xf32> to vector<16x128xf32>
    %98 = vector.shape_cast %95 : vector<1x16x128xf32> to vector<16x128xf32>
    %99 = vector.shape_cast %7 : vector<1x1x16xf32> to vector<1x16xf32>
    %100 = vector.shape_cast %96 : vector<8x128xf32> to vector<8x4x32xf32>
    %101 = tpu.transpose %100, [1, 0, 2] : vector<8x4x32xf32> -> vector<4x8x32xf32>
    %102 = arith.truncf %101 : vector<4x8x32xf32> to vector<4x8x32xbf16>
    %103 = vector.shape_cast %97 : vector<16x128xf32> to vector<16x4x32xf32>
    %104 = tpu.transpose %103, [1, 0, 2] : vector<16x4x32xf32> -> vector<4x16x32xf32>
    %105 = arith.truncf %104 : vector<4x16x32xf32> to vector<4x16x32xbf16>
    %106 = vector.shape_cast %98 : vector<16x128xf32> to vector<16x4x32xf32>
    %107 = tpu.transpose %106, [1, 0, 2] : vector<16x4x32xf32> -> vector<4x16x32xf32>
    %108 = arith.truncf %107 : vector<4x16x32xf32> to vector<4x16x32xbf16>
    %cst_55 = arith.constant dense<0.000000e+00> : vector<4x8x16xf32>
    %109 = tpu.matmul %102, %105, %cst_55 {dimension_numbers = #tpu.dot_dimension_numbers<[2], [2], [1], [1], [0, 0, 0, 1, 1, 1], [0], [0]>} : vector<4x8x32xbf16>, vector<4x16x32xbf16>, vector<4x8x16xf32> -> vector<4x8x16xf32>
    %110 = vector.shape_cast %99 : vector<1x16xf32> to vector<1x1x16xf32>
    %111 = vector.broadcast %110 : vector<1x1x16xf32> to vector<4x8x16xf32>
    %112 = arith.addf %109, %111 : vector<4x8x16xf32>
    %cst_56 = arith.constant dense<0xFF800000> : vector<4x8xf32>
    %113 = vector.multi_reduction <maximumf>, %112, %cst_56 [2] : vector<4x8x16xf32> to vector<4x8xf32>
    %114 = vector.shape_cast %113 : vector<4x8xf32> to vector<4x8x1xf32>
    %115 = vector.broadcast %114 : vector<4x8x1xf32> to vector<4x8x16xf32>
    %116 = arith.subf %112, %115 : vector<4x8x16xf32>
    %117 = math.exp %116 : vector<4x8x16xf32>
    %cst_57 = arith.constant dense<0.000000e+00> : vector<4x8xf32>
    %118 = vector.multi_reduction <add>, %117, %cst_57 [2] : vector<4x8x16xf32> to vector<4x8xf32>
    %119 = vector.shape_cast %118 : vector<4x8xf32> to vector<4x8x1xf32>
    %120 = arith.truncf %117 : vector<4x8x16xf32> to vector<4x8x16xbf16>
    %cst_58 = arith.constant dense<0.000000e+00> : vector<4x8x32xf32>
    %121 = tpu.matmul %120, %108, %cst_58 {dimension_numbers = #tpu.dot_dimension_numbers<[2], [1], [1], [2], [0, 0, 0, 1, 1, 2], [0], [0]>} : vector<4x8x16xbf16>, vector<4x16x32xbf16>, vector<4x8x32xf32> -> vector<4x8x32xf32>
    %122 = tpu.reciprocal %119 {approx = true} : vector<4x8x1xf32> -> vector<4x8x1xf32>
    %123 = vector.broadcast %122 : vector<4x8x1xf32> to vector<4x8x32xf32>
    %124 = arith.mulf %121, %123 : vector<4x8x32xf32>
    %125 = tpu.transpose %124, [1, 0, 2] : vector<4x8x32xf32> -> vector<8x4x32xf32>
    %126 = vector.shape_cast %125 : vector<8x4x32xf32> to vector<8x128xf32>
    %127 = arith.truncf %126 : vector<8x128xf32> to vector<8x128xbf16>
    %cst_59 = arith.constant dense<0.000000e+00> : vector<8x128xf32>
    %128 = tpu.matmul %127, %82, %cst_59 {dimension_numbers = #tpu.dot_dimension_numbers<[1], [0], [0], [1], [0, 0, 1, 1], [], []>} : vector<8x128xbf16>, vector<128x128xbf16>, vector<8x128xf32> -> vector<8x128xf32>
    %129 = arith.addf %128, %78 : vector<8x128xf32>
    %cst_60 = arith.constant dense<0.000000e+00> : vector<8xf32>
    %130 = vector.multi_reduction <add>, %129, %cst_60 [1] : vector<8x128xf32> to vector<8xf32>
    %131 = vector.shape_cast %130 : vector<8xf32> to vector<8x1xf32>
    %cst_61 = arith.constant 1.280000e+02 : f32
    %132 = vector.broadcast %cst_61 : f32 to vector<8x1xf32>
    %133 = arith.divf %131, %132 : vector<8x1xf32>
    %134 = vector.broadcast %133 : vector<8x1xf32> to vector<8x128xf32>
    %135 = arith.subf %129, %134 : vector<8x128xf32>
    %136 = arith.mulf %135, %135 : vector<8x128xf32>
    %cst_62 = arith.constant dense<0.000000e+00> : vector<8xf32>
    %137 = vector.multi_reduction <add>, %136, %cst_62 [1] : vector<8x128xf32> to vector<8xf32>
    %138 = vector.shape_cast %137 : vector<8xf32> to vector<8x1xf32>
    %cst_63 = arith.constant 1.280000e+02 : f32
    %139 = vector.broadcast %cst_63 : f32 to vector<8x1xf32>
    %140 = arith.divf %138, %139 : vector<8x1xf32>
    %cst_64 = arith.constant 9.99999974E-6 : f32
    %141 = vector.broadcast %cst_64 : f32 to vector<8x1xf32>
    %142 = arith.addf %140, %141 : vector<8x1xf32>
    %143 = math.rsqrt %142 : vector<8x1xf32>
    %144 = vector.broadcast %143 : vector<8x1xf32> to vector<8x128xf32>
    %145 = arith.mulf %135, %144 : vector<8x128xf32>
    %146 = vector.broadcast %83 : vector<1x128xf32> to vector<8x128xf32>
    %147 = arith.mulf %145, %146 : vector<8x128xf32>
    %148 = vector.broadcast %84 : vector<1x128xf32> to vector<8x128xf32>
    %149 = arith.addf %147, %148 : vector<8x128xf32>
    %150 = arith.truncf %149 : vector<8x128xf32> to vector<8x128xbf16>
    %c0_65 = arith.constant 0 : index
    %c0_66 = arith.constant 0 : index
    %151 = vector.load %arg18[%c0_65, %c0_66] : memref<128x256xbf16, #tpu.memory_space<vmem>>, vector<128x256xbf16>
    %cst_67 = arith.constant dense<0.000000e+00> : vector<8x256xf32>
    %152 = tpu.matmul %150, %151, %cst_67 {dimension_numbers = #tpu.dot_dimension_numbers<[1], [0], [0], [1], [0, 0, 1, 1], [], []>} : vector<8x128xbf16>, vector<128x256xbf16>, vector<8x256xf32> -> vector<8x256xf32>
    %c0_68 = arith.constant 0 : index
    %c0_69 = arith.constant 0 : index
    %153 = vector.load %arg19[%c0_68, %c0_69] : memref<1x256xf32, #tpu.memory_space<vmem>>, vector<1x256xf32>
    %154 = vector.broadcast %153 : vector<1x256xf32> to vector<8x256xf32>
    %155 = arith.addf %152, %154 : vector<8x256xf32>
    %cst_70 = arith.constant 0.000000e+00 : f32
    %156 = vector.broadcast %cst_70 : f32 to vector<8x256xf32>
    %157 = arith.maximumf %155, %156 : vector<8x256xf32>
    %158 = arith.truncf %157 : vector<8x256xf32> to vector<8x256xbf16>
    %c0_71 = arith.constant 0 : index
    %c0_72 = arith.constant 0 : index
    %159 = vector.load %arg20[%c0_71, %c0_72] : memref<256x128xbf16, #tpu.memory_space<vmem>>, vector<256x128xbf16>
    %cst_73 = arith.constant dense<0.000000e+00> : vector<8x128xf32>
    %160 = tpu.matmul %158, %159, %cst_73 {dimension_numbers = #tpu.dot_dimension_numbers<[1], [0], [0], [1], [0, 0, 1, 1], [], []>} : vector<8x256xbf16>, vector<256x128xbf16>, vector<8x128xf32> -> vector<8x128xf32>
    %c0_74 = arith.constant 0 : index
    %c0_75 = arith.constant 0 : index
    %161 = vector.load %arg21[%c0_74, %c0_75] : memref<1x128xf32, #tpu.memory_space<vmem>>, vector<1x128xf32>
    %162 = vector.broadcast %161 : vector<1x128xf32> to vector<8x128xf32>
    %163 = arith.addf %160, %162 : vector<8x128xf32>
    %164 = arith.addf %149, %163 : vector<8x128xf32>
    %c0_76 = arith.constant 0 : index
    %c0_77 = arith.constant 0 : index
    %165 = vector.load %arg22[%c0_76, %c0_77] : memref<1x128xf32, #tpu.memory_space<vmem>>, vector<1x128xf32>
    %c0_78 = arith.constant 0 : index
    %c0_79 = arith.constant 0 : index
    %166 = vector.load %arg23[%c0_78, %c0_79] : memref<1x128xf32, #tpu.memory_space<vmem>>, vector<1x128xf32>
    %cst_80 = arith.constant dense<0.000000e+00> : vector<8xf32>
    %167 = vector.multi_reduction <add>, %164, %cst_80 [1] : vector<8x128xf32> to vector<8xf32>
    %168 = vector.shape_cast %167 : vector<8xf32> to vector<8x1xf32>
    %cst_81 = arith.constant 1.280000e+02 : f32
    %169 = vector.broadcast %cst_81 : f32 to vector<8x1xf32>
    %170 = arith.divf %168, %169 : vector<8x1xf32>
    %171 = vector.broadcast %170 : vector<8x1xf32> to vector<8x128xf32>
    %172 = arith.subf %164, %171 : vector<8x128xf32>
    %173 = arith.mulf %172, %172 : vector<8x128xf32>
    %cst_82 = arith.constant dense<0.000000e+00> : vector<8xf32>
    %174 = vector.multi_reduction <add>, %173, %cst_82 [1] : vector<8x128xf32> to vector<8xf32>
    %175 = vector.shape_cast %174 : vector<8xf32> to vector<8x1xf32>
    %cst_83 = arith.constant 1.280000e+02 : f32
    %176 = vector.broadcast %cst_83 : f32 to vector<8x1xf32>
    %177 = arith.divf %175, %176 : vector<8x1xf32>
    %cst_84 = arith.constant 9.99999974E-6 : f32
    %178 = vector.broadcast %cst_84 : f32 to vector<8x1xf32>
    %179 = arith.addf %177, %178 : vector<8x1xf32>
    %180 = math.rsqrt %179 : vector<8x1xf32>
    %181 = vector.broadcast %180 : vector<8x1xf32> to vector<8x128xf32>
    %182 = arith.mulf %172, %181 : vector<8x128xf32>
    %183 = vector.broadcast %165 : vector<1x128xf32> to vector<8x128xf32>
    %184 = arith.mulf %182, %183 : vector<8x128xf32>
    %185 = vector.broadcast %166 : vector<1x128xf32> to vector<8x128xf32>
    %186 = arith.addf %184, %185 : vector<8x128xf32>
    %187 = vector.shape_cast %186 : vector<8x128xf32> to vector<1x8x128xf32>
    %c0_85 = arith.constant 0 : index
    %c0_86 = arith.constant 0 : index
    %c0_87 = arith.constant 0 : index
    %188 = vector.load %arg24[%c0_85, %c0_86, %c0_87] : memref<1x8x128xf32, #tpu.memory_space<vmem>>, vector<1x8x128xf32>
    tpu.vector_store %arg24[%c0_85, %c0_86, %c0_87], %187 {strides = array<i32>} : memref<1x8x128xf32, #tpu.memory_space<vmem>>, vector<1x8x128xf32>,
    return
  }
  func.func @transform_0(%arg0: i32) -> (i32, i32, i32) {
    %c0_i32 = arith.constant 0 : i32
    %c0_i32_0 = arith.constant 0 : i32
    %c0_i32_1 = arith.constant 0 : i32
    return %arg0, %c0_i32, %c0_i32_0 : i32, i32, i32
  }
  func.func @transform_1(%arg0: i32) -> (i32, i32, i32) {
    %c0_i32 = arith.constant 0 : i32
    %c0_i32_0 = arith.constant 0 : i32
    %c0_i32_1 = arith.constant 0 : i32
    return %arg0, %c0_i32, %c0_i32_0 : i32, i32, i32
  }
  func.func @transform_2(%arg0: i32) -> (i32, i32, i32) {
    %c0_i32 = arith.constant 0 : i32
    %c0_i32_0 = arith.constant 0 : i32
    %c0_i32_1 = arith.constant 0 : i32
    return %arg0, %c0_i32, %c0_i32_0 : i32, i32, i32
  }
  func.func @transform_3(%arg0: i32) -> (i32, i32, i32) {
    %c0_i32 = arith.constant 0 : i32
    %c0_i32_0 = arith.constant 0 : i32
    %c0_i32_1 = arith.constant 0 : i32
    return %arg0, %c0_i32, %c0_i32_0 : i32, i32, i32
  }
  func.func @transform_4(%arg0: i32) -> (i32, i32, i32) {
    %c0_i32 = arith.constant 0 : i32
    %c0_i32_0 = arith.constant 0 : i32
    %c0_i32_1 = arith.constant 0 : i32
    return %arg0, %c0_i32, %c0_i32_0 : i32, i32, i32
  }
  func.func @transform_5(%arg0: i32) -> (i32, i32) {
    %c0_i32 = arith.constant 0 : i32
    %c0_i32_0 = arith.constant 0 : i32
    %c0_i32_1 = arith.constant 0 : i32
    return %c0_i32, %c0_i32_0 : i32, i32
  }
  func.func @transform_6(%arg0: i32) -> (i32, i32) {
    %c0_i32 = arith.constant 0 : i32
    %c0_i32_0 = arith.constant 0 : i32
    %c0_i32_1 = arith.constant 0 : i32
    return %c0_i32, %c0_i32_0 : i32, i32
  }
  func.func @transform_7(%arg0: i32) -> (i32, i32) {
    %c0_i32 = arith.constant 0 : i32
    %c0_i32_0 = arith.constant 0 : i32
    %c0_i32_1 = arith.constant 0 : i32
    return %c0_i32, %c0_i32_0 : i32, i32
  }
  func.func @transform_8(%arg0: i32) -> (i32, i32) {
    %c0_i32 = arith.constant 0 : i32
    %c0_i32_0 = arith.constant 0 : i32
    %c0_i32_1 = arith.constant 0 : i32
    return %c0_i32, %c0_i32_0 : i32, i32
  }
  func.func @transform_9(%arg0: i32) -> (i32, i32) {
    %c0_i32 = arith.constant 0 : i32
    %c0_i32_0 = arith.constant 0 : i32
    %c0_i32_1 = arith.constant 0 : i32
    return %c0_i32, %c0_i32_0 : i32, i32
  }
  func.func @transform_10(%arg0: i32) -> (i32, i32) {
    %c0_i32 = arith.constant 0 : i32
    %c0_i32_0 = arith.constant 0 : i32
    %c0_i32_1 = arith.constant 0 : i32
    return %c0_i32, %c0_i32_0 : i32, i32
  }
  func.func @transform_11(%arg0: i32) -> (i32, i32) {
    %c0_i32 = arith.constant 0 : i32
    %c0_i32_0 = arith.constant 0 : i32
    %c0_i32_1 = arith.constant 0 : i32
    return %c0_i32, %c0_i32_0 : i32, i32
  }
  func.func @transform_12(%arg0: i32) -> (i32, i32) {
    %c0_i32 = arith.constant 0 : i32
    %c0_i32_0 = arith.constant 0 : i32
    %c0_i32_1 = arith.constant 0 : i32
    return %c0_i32, %c0_i32_0 : i32, i32
  }
  func.func @transform_13(%arg0: i32) -> (i32, i32) {
    %c0_i32 = arith.constant 0 : i32
    %c0_i32_0 = arith.constant 0 : i32
    %c0_i32_1 = arith.constant 0 : i32
    return %c0_i32, %c0_i32_0 : i32, i32
  }
  func.func @transform_14(%arg0: i32) -> (i32, i32) {
    %c0_i32 = arith.constant 0 : i32
    %c0_i32_0 = arith.constant 0 : i32
    %c0_i32_1 = arith.constant 0 : i32
    return %c0_i32, %c0_i32_0 : i32, i32
  }
  func.func @transform_15(%arg0: i32) -> (i32, i32) {
    %c0_i32 = arith.constant 0 : i32
    %c0_i32_0 = arith.constant 0 : i32
    %c0_i32_1 = arith.constant 0 : i32
    return %c0_i32, %c0_i32_0 : i32, i32
  }
  func.func @transform_16(%arg0: i32) -> (i32, i32) {
    %c0_i32 = arith.constant 0 : i32
    %c0_i32_0 = arith.constant 0 : i32
    %c0_i32_1 = arith.constant 0 : i32
    return %c0_i32, %c0_i32_0 : i32, i32
  }
  func.func @transform_17(%arg0: i32) -> (i32, i32) {
    %c0_i32 = arith.constant 0 : i32
    %c0_i32_0 = arith.constant 0 : i32
    %c0_i32_1 = arith.constant 0 : i32
    return %c0_i32, %c0_i32_0 : i32, i32
  }
  func.func @transform_18(%arg0: i32) -> (i32, i32) {
    %c0_i32 = arith.constant 0 : i32
    %c0_i32_0 = arith.constant 0 : i32
    %c0_i32_1 = arith.constant 0 : i32
    return %c0_i32, %c0_i32_0 : i32, i32
  }
  func.func @transform_19(%arg0: i32) -> (i32, i32) {
    %c0_i32 = arith.constant 0 : i32
    %c0_i32_0 = arith.constant 0 : i32
    %c0_i32_1 = arith.constant 0 : i32
    return %c0_i32, %c0_i32_0 : i32, i32
  }
  func.func @transform_20(%arg0: i32) -> (i32, i32) {
    %c0_i32 = arith.constant 0 : i32
    %c0_i32_0 = arith.constant 0 : i32
    %c0_i32_1 = arith.constant 0 : i32
    return %c0_i32, %c0_i32_0 : i32, i32
  }
  func.func @transform_21(%arg0: i32) -> (i32, i32) {
    %c0_i32 = arith.constant 0 : i32
    %c0_i32_0 = arith.constant 0 : i32
    %c0_i32_1 = arith.constant 0 : i32
    return %c0_i32, %c0_i32_0 : i32, i32
  }
  func.func @transform_22(%arg0: i32) -> (i32, i32) {
    %c0_i32 = arith.constant 0 : i32
    %c0_i32_0 = arith.constant 0 : i32
    %c0_i32_1 = arith.constant 0 : i32
    return %c0_i32, %c0_i32_0 : i32, i32
  }
  func.func @transform_23(%arg0: i32) -> (i32, i32, i32) {
    %c0_i32 = arith.constant 0 : i32
    %c0_i32_0 = arith.constant 0 : i32
    %c0_i32_1 = arith.constant 0 : i32
    return %arg0, %c0_i32, %c0_i32_0 : i32, i32, i32
  }
}

</mosaic_0001>

<llo_original>
// kernel: decoder_block_forward.1
$region0: #{decoder_block_forward.1}
  #allocation0 [shape = 'u32[]', space=smem, size = 0x4, offset = 0x4, fixed_abs, tag = 'smem constant byte address 0x4 - core index']
  #allocation1 [shape = 'u32[144,128]{1,0:T(1,128)}', space=vmem, size = 0x12000, scoped, tag = 'internal scratch']
  %s0 = inlined_call_operand.vmem [shape: f32[2,8,128], index: 0, kind: input, shape index: {}]
  %s1 = inlined_call_operand.vmem [shape: f32[2,16,128], index: 1, kind: input, shape index: {}]
  %s2 = inlined_call_operand.vmem [shape: f32[2,16,128], index: 2, kind: input, shape index: {}]
  %s3 = inlined_call_operand.vmem [shape: f32[2,8,8], index: 3, kind: input, shape index: {}]
  %s4 = inlined_call_operand.vmem [shape: f32[2,1,16], index: 4, kind: input, shape index: {}]
  %s5 = inlined_call_operand.vmem [shape: bf16[128,128], index: 5, kind: input, shape index: {}]
  %s6 = inlined_call_operand.vmem [shape: bf16[128,128], index: 6, kind: input, shape index: {}]
  %s7 = inlined_call_operand.vmem [shape: bf16[128,128], index: 7, kind: input, shape index: {}]
  %s8 = inlined_call_operand.vmem [shape: bf16[128,128], index: 8, kind: input, shape index: {}]
  %s9 = inlined_call_operand.vmem [shape: f32[1,128], index: 9, kind: input, shape index: {}]
  %s10 = inlined_call_operand.vmem [shape: f32[1,128], index: 10, kind: input, shape index: {}]
  %s11 = inlined_call_operand.vmem [shape: bf16[128,128], index: 11, kind: input, shape index: {}]
  %s12 = inlined_call_operand.vmem [shape: bf16[128,128], index: 12, kind: input, shape index: {}]
  %s13 = inlined_call_operand.vmem [shape: bf16[128,128], index: 13, kind: input, shape index: {}]
  %s14 = inlined_call_operand.vmem [shape: bf16[128,128], index: 14, kind: input, shape index: {}]
  %s15 = inlined_call_operand.vmem [shape: f32[1,128], index: 15, kind: input, shape index: {}]
  %s16 = inlined_call_operand.vmem [shape: f32[1,128], index: 16, kind: input, shape index: {}]
  %s17 = inlined_call_operand.vmem [shape: bf16[128,256], index: 17, kind: input, shape index: {}]
  %s18 = inlined_call_operand.vmem [shape: f32[1,256], index: 18, kind: input, shape index: {}]
  %s19 = inlined_call_operand.vmem [shape: bf16[256,128], index: 19, kind: input, shape index: {}]
  %s20 = inlined_call_operand.vmem [shape: f32[1,128], index: 20, kind: input, shape index: {}]
  %s21 = inlined_call_operand.vmem [shape: f32[1,128], index: 21, kind: input, shape index: {}]
  %s22 = inlined_call_operand.vmem [shape: f32[1,128], index: 22, kind: input, shape index: {}]
  %s23 = inlined_call_operand.hbm [shape: f32[2,8,128], index: 23, kind: output, shape index: {}]
  %s24 = sld [smem:[#allocation0]]
  $region125: #{decoder_block_forward.1} parent=0
    _
  %s26 = ssub.s32 1, %s24
  %s27 = scalar_select 0, %s26, %s24
  $region1: #{decoder_block_forward.1} parent=0
    #allocation2 [shape = 'u8[8192]{0}', space=vmem, size = 0x2000, scoped, tag = 'output window, operand 0']
    #allocation3 [shape = 's32[2]{0}', space=sflag, size = 0x8, scoped, tag = 'scoped memory for decoder_block_forward.1']
    %28 = vsyncpa [#allocation3], 0
    %s29 = scalar_lea.sflag [#allocation3], 1
    %30 = vsyncpa %s29, 0
    loop: start=0, step=1, limit=4
    $region2: #{decoder_block_forward.1} parent=1 // loop_pre_header
      _
    $region3: #{decoder_block_forward.1} parent=1 // loop_header
      %s32 = sphi 0, %s36
      %p33 = scmp.ge.s32.totalorder %s32, 4
      %s42 = sphi 0, %s44
      %s45 = sphi 0, %s42
      %s46 = sphi 0, %s45
      %s62 = sphi 0, %s46
      %s68 = sphi 0, %s70
      %s71 = sphi 0, %s68
      %s72 = sphi 0, %s71
      %s88 = sphi 0, %s72
      %s94 = sphi 0, %s96
      %s97 = sphi 0, %s94
      %s98 = sphi 0, %s97
      %s114 = sphi 0, %s98
      %s120 = sphi 0, %s122
      %s123 = sphi 0, %s120
      %s124 = sphi 0, %s123
      %s140 = sphi 0, %s124
      %s146 = sphi 0, %s148
      %s149 = sphi 0, %s146
      %s150 = sphi 0, %s149
      %s166 = sphi 0, %s150
      %s170 = sphi 0, %s170
      %s172 = sphi 0, %s170
      %s173 = sphi 0, %s172
      %s187 = sphi 0, %s173
      %s191 = sphi 0, %s191
      %s193 = sphi 0, %s191
      %s194 = sphi 0, %s193
      %s208 = sphi 0, %s194
      %s212 = sphi 0, %s212
      %s214 = sphi 0, %s212
      %s215 = sphi 0, %s214
      %s229 = sphi 0, %s215
      %s233 = sphi 0, %s233
      %s235 = sphi 0, %s233
      %s236 = sphi 0, %s235
      %s250 = sphi 0, %s236
      %s254 = sphi 0, %s254
      %s256 = sphi 0, %s254
      %s257 = sphi 0, %s256
      %s271 = sphi 0, %s257
      %s275 = sphi 0, %s275
      %s277 = sphi 0, %s275
      %s278 = sphi 0, %s277
      %s292 = sphi 0, %s278
      %s296 = sphi 0, %s296
      %s298 = sphi 0, %s296
      %s299 = sphi 0, %s298
      %s313 = sphi 0, %s299
      %s317 = sphi 0, %s317
      %s319 = sphi 0, %s317
      %s320 = sphi 0, %s319
      %s334 = sphi 0, %s320
      %s338 = sphi 0, %s338
      %s340 = sphi 0, %s338
      %s341 = sphi 0, %s340
      %s355 = sphi 0, %s341
      %s359 = sphi 0, %s359
      %s361 = sphi 0, %s359
      %s362 = sphi 0, %s361
      %s376 = sphi 0, %s362
      %s380 = sphi 0, %s380
      %s382 = sphi 0, %s380
      %s383 = sphi 0, %s382
      %s397 = sphi 0, %s383
      %s401 = sphi 0, %s401
      %s403 = sphi 0, %s401
      %s404 = sphi 0, %s403
      %s418 = sphi 0, %s404
      %s422 = sphi 0, %s422
      %s424 = sphi 0, %s422
      %s425 = sphi 0, %s424
      %s439 = sphi 0, %s425
      %s443 = sphi 0, %s443
      %s445 = sphi 0, %s443
      %s446 = sphi 0, %s445
      %s460 = sphi 0, %s446
      %s464 = sphi 0, %s464
      %s466 = sphi 0, %s464
      %s467 = sphi 0, %s466
      %s481 = sphi 0, %s467
      %s485 = sphi 0, %s485
      %s487 = sphi 0, %s485
      %s488 = sphi 0, %s487
      %s502 = sphi 0, %s488
      %s506 = sphi 0, %s506
      %s508 = sphi 0, %s506
      %s509 = sphi 0, %s508
      %s523 = sphi 0, %s509
      %s527 = sphi 0, %s527
      %s529 = sphi 0, %s527
      %s530 = sphi 0, %s529
      %s544 = sphi 0, %s530
      %s550 = sphi 0, %s552
      %s553 = sphi 0, %s550
      %s554 = sphi 0, %s553
      %s570 = sphi 0, %s554
    $region4: #{decoder_block_forward.1} parent=1 // loop_header_branch
      %35 = sbr.rel (%p33) target = $region8
    $region5: #{decoder_block_forward.1} parent=1 // loop_body
      %s37 = ssub.s32 %s32, 1
      %s38 = ssub.s32 %s32, 2
      %s39 = sadd.s32 %s32, 1
      %s40 = ssub.s32 %s32, %s39
      %p41 = scmp.eq.s32.totalorder %s40, 0
      %s43 = sadd.s32 %s42, 1
      %s44 = scalar_select %p41, %s42, %s43
      %p47 = pneg %p41
      %p48 = scmp.eq.s32.totalorder %s32, 1
      %p49 = por %p47, %p48
      %p50 = scmp.ne.s32.totalorder %s42, %s45
      %p51 = scmp.eq.s32.totalorder %s32, 0
      %p52 = por %p50, %p51
      %p53 = scmp.ne.s32.totalorder %s42, %s45
      %p54 = scmp.eq.s32.totalorder %s37, 1
      %p55 = por %p53, %p54
      %p56 = scmp.ne.s32.totalorder %s45, %s46
      %p57 = scmp.eq.s32.totalorder %s37, 0
      %p58 = por %p56, %p57
      %p59 = scmp.ne.s32.totalorder %s45, %s46
      %p60 = scmp.eq.s32.totalorder %s38, 1
      %p61 = por %p59, %p60
      %p63 = scmp.ne.s32.totalorder %s46, %s62
      %p64 = scmp.eq.s32.totalorder %s38, 0
      %p65 = por %p63, %p64
      %s66 = ssub.s32 %s32, %s39
      %p67 = scmp.eq.s32.totalorder %s66, 0
      %s69 = sadd.s32 %s68, 1
      %s70 = scalar_select %p67, %s68, %s69
      %p73 = pneg %p67
      %p74 = scmp.eq.s32.totalorder %s32, 1
      %p75 = por %p73, %p74
      %p76 = scmp.ne.s32.totalorder %s68, %s71
      %p77 = scmp.eq.s32.totalorder %s32, 0
      %p78 = por %p76, %p77
      %p79 = scmp.ne.s32.totalorder %s68, %s71
      %p80 = scmp.eq.s32.totalorder %s37, 1
      %p81 = por %p79, %p80
      %p82 = scmp.ne.s32.totalorder %s71, %s72
      %p83 = scmp.eq.s32.totalorder %s37, 0
      %p84 = por %p82, %p83
      %p85 = scmp.ne.s32.totalorder %s71, %s72
      %p86 = scmp.eq.s32.totalorder %s38, 1
      %p87 = por %p85, %p86
      %p89 = scmp.ne.s32.totalorder %s72, %s88
      %p90 = scmp.eq.s32.totalorder %s38, 0
      %p91 = por %p89, %p90
      %s92 = ssub.s32 %s32, %s39
      %p93 = scmp.eq.s32.totalorder %s92, 0
      %s95 = sadd.s32 %s94, 1
      %s96 = scalar_select %p93, %s94, %s95
      %p99 = pneg %p93
      %p100 = scmp.eq.s32.totalorder %s32, 1
      %p101 = por %p99, %p100
      %p102 = scmp.ne.s32.totalorder %s94, %s97
      %p103 = scmp.eq.s32.totalorder %s32, 0
      %p104 = por %p102, %p103
      %p105 = scmp.ne.s32.totalorder %s94, %s97
      %p106 = scmp.eq.s32.totalorder %s37, 1
      %p107 = por %p105, %p106
      %p108 = scmp.ne.s32.totalorder %s97, %s98
      %p109 = scmp.eq.s32.totalorder %s37, 0
      %p110 = por %p108, %p109
      %p111 = scmp.ne.s32.totalorder %s97, %s98
      %p112 = scmp.eq.s32.totalorder %s38, 1
      %p113 = por %p111, %p112
      %p115 = scmp.ne.s32.totalorder %s98, %s114
      %p116 = scmp.eq.s32.totalorder %s38, 0
      %p117 = por %p115, %p116
      %s118 = ssub.s32 %s32, %s39
      %p119 = scmp.eq.s32.totalorder %s118, 0
      %s121 = sadd.s32 %s120, 1
      %s122 = scalar_select %p119, %s120, %s121
      %p125 = pneg %p119
      %p126 = scmp.eq.s32.totalorder %s32, 1
      %p127 = por %p125, %p126
      %p128 = scmp.ne.s32.totalorder %s120, %s123
      %p129 = scmp.eq.s32.totalorder %s32, 0
      %p130 = por %p128, %p129
      %p131 = scmp.ne.s32.totalorder %s120, %s123
      %p132 = scmp.eq.s32.totalorder %s37, 1
      %p133 = por %p131, %p132
      %p134 = scmp.ne.s32.totalorder %s123, %s124
      %p135 = scmp.eq.s32.totalorder %s37, 0
      %p136 = por %p134, %p135
      %p137 = scmp.ne.s32.totalorder %s123, %s124
      %p138 = scmp.eq.s32.totalorder %s38, 1
      %p139 = por %p137, %p138
      %p141 = scmp.ne.s32.totalorder %s124, %s140
      %p142 = scmp.eq.s32.totalorder %s38, 0
      %p143 = por %p141, %p142
      %s144 = ssub.s32 %s32, %s39
      %p145 = scmp.eq.s32.totalorder %s144, 0
      %s147 = sadd.s32 %s146, 1
      %s148 = scalar_select %p145, %s146, %s147
      %p151 = pneg %p145
      %p152 = scmp.eq.s32.totalorder %s32, 1
      %p153 = por %p151, %p152
      %p154 = scmp.ne.s32.totalorder %s146, %s149
      %p155 = scmp.eq.s32.totalorder %s32, 0
      %p156 = por %p154, %p155
      %p157 = scmp.ne.s32.totalorder %s146, %s149
      %p158 = scmp.eq.s32.totalorder %s37, 1
      %p159 = por %p157, %p158
      %p160 = scmp.ne.s32.totalorder %s149, %s150
      %p161 = scmp.eq.s32.totalorder %s37, 0
      %p162 = por %p160, %p161
      %p163 = scmp.ne.s32.totalorder %s149, %s150
      %p164 = scmp.eq.s32.totalorder %s38, 1
      %p165 = por %p163, %p164
      %p167 = scmp.ne.s32.totalorder %s150, %s166
      %p168 = scmp.eq.s32.totalorder %s38, 0
      %p169 = por %p167, %p168
      %s171 = sadd.s32 %s170, 1
      %p174 = scmp.eq.s32.totalorder %s32, 1
      %p175 = scmp.ne.s32.totalorder %s170, %s172
      %p176 = scmp.eq.s32.totalorder %s32, 0
      %p177 = por %p175, %p176
      %p178 = scmp.ne.s32.totalorder %s170, %s172
      %p179 = scmp.eq.s32.totalorder %s37, 1
      %p180 = por %p178, %p179
      %p181 = scmp.ne.s32.totalorder %s172, %s173
      %p182 = scmp.eq.s32.totalorder %s37, 0
      %p183 = por %p181, %p182
      %p184 = scmp.ne.s32.totalorder %s172, %s173
      %p185 = scmp.eq.s32.totalorder %s38, 1
      %p186 = por %p184, %p185
      %p188 = scmp.ne.s32.totalorder %s173, %s187
      %p189 = scmp.eq.s32.totalorder %s38, 0
      %p190 = por %p188, %p189
      %s192 = sadd.s32 %s191, 1
      %p195 = scmp.eq.s32.totalorder %s32, 1
      %p196 = scmp.ne.s32.totalorder %s191, %s193
      %p197 = scmp.eq.s32.totalorder %s32, 0
      %p198 = por %p196, %p197
      %p199 = scmp.ne.s32.totalorder %s191, %s193
      %p200 = scmp.eq.s32.totalorder %s37, 1
      %p201 = por %p199, %p200
      %p202 = scmp.ne.s32.totalorder %s193, %s194
      %p203 = scmp.eq.s32.totalorder %s37, 0
      %p204 = por %p202, %p203
      %p205 = scmp.ne.s32.totalorder %s193, %s194
      %p206 = scmp.eq.s32.totalorder %s38, 1
      %p207 = por %p205, %p206
      %p209 = scmp.ne.s32.totalorder %s194, %s208
      %p210 = scmp.eq.s32.totalorder %s38, 0
      %p211 = por %p209, %p210
      %s213 = sadd.s32 %s212, 1
      %p216 = scmp.eq.s32.totalorder %s32, 1
      %p217 = scmp.ne.s32.totalorder %s212, %s214
      %p218 = scmp.eq.s32.totalorder %s32, 0
      %p219 = por %p217, %p218
      %p220 = scmp.ne.s32.totalorder %s212, %s214
      %p221 = scmp.eq.s32.totalorder %s37, 1
      %p222 = por %p220, %p221
      %p223 = scmp.ne.s32.totalorder %s214, %s215
      %p224 = scmp.eq.s32.totalorder %s37, 0
      %p225 = por %p223, %p224
      %p226 = scmp.ne.s32.totalorder %s214, %s215
      %p227 = scmp.eq.s32.totalorder %s38, 1
      %p228 = por %p226, %p227
      %p230 = scmp.ne.s32.totalorder %s215, %s229
      %p231 = scmp.eq.s32.totalorder %s38, 0
      %p232 = por %p230, %p231
      %s234 = sadd.s32 %s233, 1
      %p237 = scmp.eq.s32.totalorder %s32, 1
      %p238 = scmp.ne.s32.totalorder %s233, %s235
      %p239 = scmp.eq.s32.totalorder %s32, 0
      %p240 = por %p238, %p239
      %p241 = scmp.ne.s32.totalorder %s233, %s235
      %p242 = scmp.eq.s32.totalorder %s37, 1
      %p243 = por %p241, %p242
      %p244 = scmp.ne.s32.totalorder %s235, %s236
      %p245 = scmp.eq.s32.totalorder %s37, 0
      %p246 = por %p244, %p245
      %p247 = scmp.ne.s32.totalorder %s235, %s236
      %p248 = scmp.eq.s32.totalorder %s38, 1
      %p249 = por %p247, %p248
      %p251 = scmp.ne.s32.totalorder %s236, %s250
      %p252 = scmp.eq.s32.totalorder %s38, 0
      %p253 = por %p251, %p252
      %s255 = sadd.s32 %s254, 1
      %p258 = scmp.eq.s32.totalorder %s32, 1
      %p259 = scmp.ne.s32.totalorder %s254, %s256
      %p260 = scmp.eq.s32.totalorder %s32, 0
      %p261 = por %p259, %p260
      %p262 = scmp.ne.s32.totalorder %s254, %s256
      %p263 = scmp.eq.s32.totalorder %s37, 1
      %p264 = por %p262, %p263
      %p265 = scmp.ne.s32.totalorder %s256, %s257
      %p266 = scmp.eq.s32.totalorder %s37, 0
      %p267 = por %p265, %p266
      %p268 = scmp.ne.s32.totalorder %s256, %s257
      %p269 = scmp.eq.s32.totalorder %s38, 1
      %p270 = por %p268, %p269
      %p272 = scmp.ne.s32.totalorder %s257, %s271
      %p273 = scmp.eq.s32.totalorder %s38, 0
      %p274 = por %p272, %p273
      %s276 = sadd.s32 %s275, 1
      %p279 = scmp.eq.s32.totalorder %s32, 1
      %p280 = scmp.ne.s32.totalorder %s275, %s277
      %p281 = scmp.eq.s32.totalorder %s32, 0
      %p282 = por %p280, %p281
      %p283 = scmp.ne.s32.totalorder %s275, %s277
      %p284 = scmp.eq.s32.totalorder %s37, 1
      %p285 = por %p283, %p284
      %p286 = scmp.ne.s32.totalorder %s277, %s278
      %p287 = scmp.eq.s32.totalorder %s37, 0
      %p288 = por %p286, %p287
      %p289 = scmp.ne.s32.totalorder %s277, %s278
      %p290 = scmp.eq.s32.totalorder %s38, 1
      %p291 = por %p289, %p290
      %p293 = scmp.ne.s32.totalorder %s278, %s292
      %p294 = scmp.eq.s32.totalorder %s38, 0
      %p295 = por %p293, %p294
      %s297 = sadd.s32 %s296, 1
      %p300 = scmp.eq.s32.totalorder %s32, 1
      %p301 = scmp.ne.s32.totalorder %s296, %s298
      %p302 = scmp.eq.s32.totalorder %s32, 0
      %p303 = por %p301, %p302
      %p304 = scmp.ne.s32.totalorder %s296, %s298
      %p305 = scmp.eq.s32.totalorder %s37, 1
      %p306 = por %p304, %p305
      %p307 = scmp.ne.s32.totalorder %s298, %s299
      %p308 = scmp.eq.s32.totalorder %s37, 0
      %p309 = por %p307, %p308
      %p310 = scmp.ne.s32.totalorder %s298, %s299
      %p311 = scmp.eq.s32.totalorder %s38, 1
      %p312 = por %p310, %p311
      %p314 = scmp.ne.s32.totalorder %s299, %s313
      %p315 = scmp.eq.s32.totalorder %s38, 0
      %p316 = por %p314, %p315
      %s318 = sadd.s32 %s317, 1
      %p321 = scmp.eq.s32.totalorder %s32, 1
      %p322 = scmp.ne.s32.totalorder %s317, %s319
      %p323 = scmp.eq.s32.totalorder %s32, 0
      %p324 = por %p322, %p323
      %p325 = scmp.ne.s32.totalorder %s317, %s319
      %p326 = scmp.eq.s32.totalorder %s37, 1
      %p327 = por %p325, %p326
      %p328 = scmp.ne.s32.totalorder %s319, %s320
      %p329 = scmp.eq.s32.totalorder %s37, 0
      %p330 = por %p328, %p329
      %p331 = scmp.ne.s32.totalorder %s319, %s320
      %p332 = scmp.eq.s32.totalorder %s38, 1
      %p333 = por %p331, %p332
      %p335 = scmp.ne.s32.totalorder %s320, %s334
      %p336 = scmp.eq.s32.totalorder %s38, 0
      %p337 = por %p335, %p336
      %s339 = sadd.s32 %s338, 1
      %p342 = scmp.eq.s32.totalorder %s32, 1
      %p343 = scmp.ne.s32.totalorder %s338, %s340
      %p344 = scmp.eq.s32.totalorder %s32, 0
      %p345 = por %p343, %p344
      %p346 = scmp.ne.s32.totalorder %s338, %s340
      %p347 = scmp.eq.s32.totalorder %s37, 1
      %p348 = por %p346, %p347
      %p349 = scmp.ne.s32.totalorder %s340, %s341
      %p350 = scmp.eq.s32.totalorder %s37, 0
      %p351 = por %p349, %p350
      %p352 = scmp.ne.s32.totalorder %s340, %s341
      %p353 = scmp.eq.s32.totalorder %s38, 1
      %p354 = por %p352, %p353
      %p356 = scmp.ne.s32.totalorder %s341, %s355
      %p357 = scmp.eq.s32.totalorder %s38, 0
      %p358 = por %p356, %p357
      %s360 = sadd.s32 %s359, 1
      %p363 = scmp.eq.s32.totalorder %s32, 1
      %p364 = scmp.ne.s32.totalorder %s359, %s361
      %p365 = scmp.eq.s32.totalorder %s32, 0
      %p366 = por %p364, %p365
      %p367 = scmp.ne.s32.totalorder %s359, %s361
      %p368 = scmp.eq.s32.totalorder %s37, 1
      %p369 = por %p367, %p368
      %p370 = scmp.ne.s32.totalorder %s361, %s362
      %p371 = scmp.eq.s32.totalorder %s37, 0
      %p372 = por %p370, %p371
      %p373 = scmp.ne.s32.totalorder %s361, %s362
      %p374 = scmp.eq.s32.totalorder %s38, 1
      %p375 = por %p373, %p374
      %p377 = scmp.ne.s32.totalorder %s362, %s376
      %p378 = scmp.eq.s32.totalorder %s38, 0
      %p379 = por %p377, %p378
      %s381 = sadd.s32 %s380, 1
      %p384 = scmp.eq.s32.totalorder %s32, 1
      %p385 = scmp.ne.s32.totalorder %s380, %s382
      %p386 = scmp.eq.s32.totalorder %s32, 0
      %p387 = por %p385, %p386
      %p388 = scmp.ne.s32.totalorder %s380, %s382
      %p389 = scmp.eq.s32.totalorder %s37, 1
      %p390 = por %p388, %p389
      %p391 = scmp.ne.s32.totalorder %s382, %s383
      %p392 = scmp.eq.s32.totalorder %s37, 0
      %p393 = por %p391, %p392
      %p394 = scmp.ne.s32.totalorder %s382, %s383
      %p395 = scmp.eq.s32.totalorder %s38, 1
      %p396 = por %p394, %p395
      %p398 = scmp.ne.s32.totalorder %s383, %s397
      %p399 = scmp.eq.s32.totalorder %s38, 0
      %p400 = por %p398, %p399
      %s402 = sadd.s32 %s401, 1
      %p405 = scmp.eq.s32.totalorder %s32, 1
      %p406 = scmp.ne.s32.totalorder %s401, %s403
      %p407 = scmp.eq.s32.totalorder %s32, 0
      %p408 = por %p406, %p407
      %p409 = scmp.ne.s32.totalorder %s401, %s403
      %p410 = scmp.eq.s32.totalorder %s37, 1
      %p411 = por %p409, %p410
      %p412 = scmp.ne.s32.totalorder %s403, %s404
      %p413 = scmp.eq.s32.totalorder %s37, 0
      %p414 = por %p412, %p413
      %p415 = scmp.ne.s32.totalorder %s403, %s404
      %p416 = scmp.eq.s32.totalorder %s38, 1
      %p417 = por %p415, %p416
      %p419 = scmp.ne.s32.totalorder %s404, %s418
      %p420 = scmp.eq.s32.totalorder %s38, 0
      %p421 = por %p419, %p420
      %s423 = sadd.s32 %s422, 1
      %p426 = scmp.eq.s32.totalorder %s32, 1
      %p427 = scmp.ne.s32.totalorder %s422, %s424
      %p428 = scmp.eq.s32.totalorder %s32, 0
      %p429 = por %p427, %p428
      %p430 = scmp.ne.s32.totalorder %s422, %s424
      %p431 = scmp.eq.s32.totalorder %s37, 1
      %p432 = por %p430, %p431
      %p433 = scmp.ne.s32.totalorder %s424, %s425
      %p434 = scmp.eq.s32.totalorder %s37, 0
      %p435 = por %p433, %p434
      %p436 = scmp.ne.s32.totalorder %s424, %s425
      %p437 = scmp.eq.s32.totalorder %s38, 1
      %p438 = por %p436, %p437
      %p440 = scmp.ne.s32.totalorder %s425, %s439
      %p441 = scmp.eq.s32.totalorder %s38, 0
      %p442 = por %p440, %p441
      %s444 = sadd.s32 %s443, 1
      %p447 = scmp.eq.s32.totalorder %s32, 1
      %p448 = scmp.ne.s32.totalorder %s443, %s445
      %p449 = scmp.eq.s32.totalorder %s32, 0
      %p450 = por %p448, %p449
      %p451 = scmp.ne.s32.totalorder %s443, %s445
      %p452 = scmp.eq.s32.totalorder %s37, 1
      %p453 = por %p451, %p452
      %p454 = scmp.ne.s32.totalorder %s445, %s446
      %p455 = scmp.eq.s32.totalorder %s37, 0
      %p456 = por %p454, %p455
      %p457 = scmp.ne.s32.totalorder %s445, %s446
      %p458 = scmp.eq.s32.totalorder %s38, 1
      %p459 = por %p457, %p458
      %p461 = scmp.ne.s32.totalorder %s446, %s460
      %p462 = scmp.eq.s32.totalorder %s38, 0
      %p463 = por %p461, %p462
      %s465 = sadd.s32 %s464, 1
      %p468 = scmp.eq.s32.totalorder %s32, 1
      %p469 = scmp.ne.s32.totalorder %s464, %s466
      %p470 = scmp.eq.s32.totalorder %s32, 0
      %p471 = por %p469, %p470
      %p472 = scmp.ne.s32.totalorder %s464, %s466
      %p473 = scmp.eq.s32.totalorder %s37, 1
      %p474 = por %p472, %p473
      %p475 = scmp.ne.s32.totalorder %s466, %s467
      %p476 = scmp.eq.s32.totalorder %s37, 0
      %p477 = por %p475, %p476
      %p478 = scmp.ne.s32.totalorder %s466, %s467
      %p479 = scmp.eq.s32.totalorder %s38, 1
      %p480 = por %p478, %p479
      %p482 = scmp.ne.s32.totalorder %s467, %s481
      %p483 = scmp.eq.s32.totalorder %s38, 0
      %p484 = por %p482, %p483
      %s486 = sadd.s32 %s485, 1
      %p489 = scmp.eq.s32.totalorder %s32, 1
      %p490 = scmp.ne.s32.totalorder %s485, %s487
      %p491 = scmp.eq.s32.totalorder %s32, 0
      %p492 = por %p490, %p491
      %p493 = scmp.ne.s32.totalorder %s485, %s487
      %p494 = scmp.eq.s32.totalorder %s37, 1
      %p495 = por %p493, %p494
      %p496 = scmp.ne.s32.totalorder %s487, %s488
      %p497 = scmp.eq.s32.totalorder %s37, 0
      %p498 = por %p496, %p497
      %p499 = scmp.ne.s32.totalorder %s487, %s488
      %p500 = scmp.eq.s32.totalorder %s38, 1
      %p501 = por %p499, %p500
      %p503 = scmp.ne.s32.totalorder %s488, %s502
      %p504 = scmp.eq.s32.totalorder %s38, 0
      %p505 = por %p503, %p504
      %s507 = sadd.s32 %s506, 1
      %p510 = scmp.eq.s32.totalorder %s32, 1
      %p511 = scmp.ne.s32.totalorder %s506, %s508
      %p512 = scmp.eq.s32.totalorder %s32, 0
      %p513 = por %p511, %p512
      %p514 = scmp.ne.s32.totalorder %s506, %s508
      %p515 = scmp.eq.s32.totalorder %s37, 1
      %p516 = por %p514, %p515
      %p517 = scmp.ne.s32.totalorder %s508, %s509
      %p518 = scmp.eq.s32.totalorder %s37, 0
      %p519 = por %p517, %p518
      %p520 = scmp.ne.s32.totalorder %s508, %s509
      %p521 = scmp.eq.s32.totalorder %s38, 1
      %p522 = por %p520, %p521
      %p524 = scmp.ne.s32.totalorder %s509, %s523
      %p525 = scmp.eq.s32.totalorder %s38, 0
      %p526 = por %p524, %p525
      %s528 = sadd.s32 %s527, 1
      %p531 = scmp.eq.s32.totalorder %s32, 1
      %p532 = scmp.ne.s32.totalorder %s527, %s529
      %p533 = scmp.eq.s32.totalorder %s32, 0
      %p534 = por %p532, %p533
      %p535 = scmp.ne.s32.totalorder %s527, %s529
      %p536 = scmp.eq.s32.totalorder %s37, 1
      %p537 = por %p535, %p536
      %p538 = scmp.ne.s32.totalorder %s529, %s530
      %p539 = scmp.eq.s32.totalorder %s37, 0
      %p540 = por %p538, %p539
      %p541 = scmp.ne.s32.totalorder %s529, %s530
      %p542 = scmp.eq.s32.totalorder %s38, 1
      %p543 = por %p541, %p542
      %p545 = scmp.ne.s32.totalorder %s530, %s544
      %p546 = scmp.eq.s32.totalorder %s38, 0
      %p547 = por %p545, %p546
      %s548 = ssub.s32 %s32, %s39
      %p549 = scmp.eq.s32.totalorder %s548, 0
      %s551 = sadd.s32 %s550, 1
      %s552 = scalar_select %p549, %s550, %s551
      %p555 = pneg %p549
      %p556 = scmp.eq.s32.totalorder %s32, 1
      %p557 = por %p555, %p556
      %p558 = scmp.ne.s32.totalorder %s550, %s553
      %p559 = scmp.eq.s32.totalorder %s32, 0
      %p560 = por %p558, %p559
      %p561 = scmp.ne.s32.totalorder %s550, %s553
      %p562 = scmp.eq.s32.totalorder %s37, 1
      %p563 = por %p561, %p562
      %p564 = scmp.ne.s32.totalorder %s553, %s554
      %p565 = scmp.eq.s32.totalorder %s37, 0
      %p566 = por %p564, %p565
      %p567 = scmp.ne.s32.totalorder %s553, %s554
      %p568 = scmp.eq.s32.totalorder %s38, 1
      %p569 = por %p567, %p568
      %p571 = scmp.ne.s32.totalorder %s554, %s570
      %p572 = scmp.eq.s32.totalorder %s38, 0
      %p573 = por %p571, %p572
      %p574 = scmp.le.s32.totalorder 1, %s32
      %p575 = scmp.lt.s32.totalorder %s32, 3
      %p576 = pnand %p574, %p575
      %p577 = pneg %p576
      // Predicated region
      $region9: #{decoder_block_forward.1} parent=5 // pred_check
        _
      $region10: #{decoder_block_forward.1} parent=5 // pred_check_branch
        %579 = sbr.rel (%p576) target = $region12
      $region11: #{decoder_block_forward.1} parent=5 // pred_region
        %s580 = ssub.s32 %s32, 1
        // Predicated region
        $region13: #{decoder_block_forward.1} parent=11 // pred_check
          %p581 = pneg %p183
        $region14: #{decoder_block_forward.1} parent=11 // pred_check_branch
          %583 = sbr.rel (%p581) target = $region16
        $region15: #{decoder_block_forward.1} parent=11 // pred_region
          _
        $region16: #{decoder_block_forward.1} parent=11 // pred_fallthru
          _
        // Predicated region
        $region17: #{decoder_block_forward.1} parent=11 // pred_check
          %p584 = pneg %p204
        $region18: #{decoder_block_forward.1} parent=11 // pred_check_branch
          %586 = sbr.rel (%p584) target = $region20
        $region19: #{decoder_block_forward.1} parent=11 // pred_region
          _
        $region20: #{decoder_block_forward.1} parent=11 // pred_fallthru
          _
        // Predicated region
        $region21: #{decoder_block_forward.1} parent=11 // pred_check
          %p587 = pneg %p225
        $region22: #{decoder_block_forward.1} parent=11 // pred_check_branch
          %589 = sbr.rel (%p587) target = $region24
        $region23: #{decoder_block_forward.1} parent=11 // pred_region
          _
        $region24: #{decoder_block_forward.1} parent=11 // pred_fallthru
          _
        // Predicated region
        $region25: #{decoder_block_forward.1} parent=11 // pred_check
          %p590 = pneg %p246
        $region26: #{decoder_block_forward.1} parent=11 // pred_check_branch
          %592 = sbr.rel (%p590) target = $region28
        $region27: #{decoder_block_forward.1} parent=11 // pred_region
          _
        $region28: #{decoder_block_forward.1} parent=11 // pred_fallthru
          _
        // Predicated region
        $region29: #{decoder_block_forward.1} parent=11 // pred_check
          %p593 = pneg %p267
        $region30: #{decoder_block_forward.1} parent=11 // pred_check_branch
          %595 = sbr.rel (%p593) target = $region32
        $region31: #{decoder_block_forward.1} parent=11 // pred_region
          _
        $region32: #{decoder_block_forward.1} parent=11 // pred_fallthru
          _
        // Predicated region
        $region33: #{decoder_block_forward.1} parent=11 // pred_check
          %p596 = pneg %p288
        $region34: #{decoder_block_forward.1} parent=11 // pred_check_branch
          %598 = sbr.rel (%p596) target = $region36
        $region35: #{decoder_block_forward.1} parent=11 // pred_region
          _
        $region36: #{decoder_block_forward.1} parent=11 // pred_fallthru
          _
        // Predicated region
        $region37: #{decoder_block_forward.1} parent=11 // pred_check
          %p599 = pneg %p309
        $region38: #{decoder_block_forward.1} parent=11 // pred_check_branch
          %601 = sbr.rel (%p599) target = $region40
        $region39: #{decoder_block_forward.1} parent=11 // pred_region
          _
        $region40: #{decoder_block_forward.1} parent=11 // pred_fallthru
          _
        // Predicated region
        $region41: #{decoder_block_forward.1} parent=11 // pred_check
          %p602 = pneg %p330
        $region42: #{decoder_block_forward.1} parent=11 // pred_check_branch
          %604 = sbr.rel (%p602) target = $region44
        $region43: #{decoder_block_forward.1} parent=11 // pred_region
          _
        $region44: #{decoder_block_forward.1} parent=11 // pred_fallthru
          _
        // Predicated region
        $region45: #{decoder_block_forward.1} parent=11 // pred_check
          %p605 = pneg %p351
        $region46: #{decoder_block_forward.1} parent=11 // pred_check_branch
          %607 = sbr.rel (%p605) target = $region48
        $region47: #{decoder_block_forward.1} parent=11 // pred_region
          _
        $region48: #{decoder_block_forward.1} parent=11 // pred_fallthru
          _
        // Predicated region
        $region49: #{decoder_block_forward.1} parent=11 // pred_check
          %p608 = pneg %p372
        $region50: #{decoder_block_forward.1} parent=11 // pred_check_branch
          %610 = sbr.rel (%p608) target = $region52
        $region51: #{decoder_block_forward.1} parent=11 // pred_region
          _
        $region52: #{decoder_block_forward.1} parent=11 // pred_fallthru
          _
        // Predicated region
        $region53: #{decoder_block_forward.1} parent=11 // pred_check
          %p611 = pneg %p393
        $region54: #{decoder_block_forward.1} parent=11 // pred_check_branch
          %613 = sbr.rel (%p611) target = $region56
        $region55: #{decoder_block_forward.1} parent=11 // pred_region
          _
        $region56: #{decoder_block_forward.1} parent=11 // pred_fallthru
          _
        // Predicated region
        $region57: #{decoder_block_forward.1} parent=11 // pred_check
          %p614 = pneg %p414
        $region58: #{decoder_block_forward.1} parent=11 // pred_check_branch
          %616 = sbr.rel (%p614) target = $region60
        $region59: #{decoder_block_forward.1} parent=11 // pred_region
          _
        $region60: #{decoder_block_forward.1} parent=11 // pred_fallthru
          _
        // Predicated region
        $region61: #{decoder_block_forward.1} parent=11 // pred_check
          %p617 = pneg %p435
        $region62: #{decoder_block_forward.1} parent=11 // pred_check_branch
          %619 = sbr.rel (%p617) target = $region64
        $region63: #{decoder_block_forward.1} parent=11 // pred_region
          _
        $region64: #{decoder_block_forward.1} parent=11 // pred_fallthru
          _
        // Predicated region
        $region65: #{decoder_block_forward.1} parent=11 // pred_check
          %p620 = pneg %p456
        $region66: #{decoder_block_forward.1} parent=11 // pred_check_branch
          %622 = sbr.rel (%p620) target = $region68
        $region67: #{decoder_block_forward.1} parent=11 // pred_region
          _
        $region68: #{decoder_block_forward.1} parent=11 // pred_fallthru
          _
        // Predicated region
        $region69: #{decoder_block_forward.1} parent=11 // pred_check
          %p623 = pneg %p477
        $region70: #{decoder_block_forward.1} parent=11 // pred_check_branch
          %625 = sbr.rel (%p623) target = $region72
        $region71: #{decoder_block_forward.1} parent=11 // pred_region
          _
        $region72: #{decoder_block_forward.1} parent=11 // pred_fallthru
          _
        // Predicated region
        $region73: #{decoder_block_forward.1} parent=11 // pred_check
          %p626 = pneg %p498
        $region74: #{decoder_block_forward.1} parent=11 // pred_check_branch
          %628 = sbr.rel (%p626) target = $region76
        $region75: #{decoder_block_forward.1} parent=11 // pred_region
          _
        $region76: #{decoder_block_forward.1} parent=11 // pred_fallthru
          _
        // Predicated region
        $region77: #{decoder_block_forward.1} parent=11 // pred_check
          %p629 = pneg %p519
        $region78: #{decoder_block_forward.1} parent=11 // pred_check_branch
          %631 = sbr.rel (%p629) target = $region80
        $region79: #{decoder_block_forward.1} parent=11 // pred_region
          _
        $region80: #{decoder_block_forward.1} parent=11 // pred_fallthru
          _
        // Predicated region
        $region81: #{decoder_block_forward.1} parent=11 // pred_check
          %p632 = pneg %p540
        $region82: #{decoder_block_forward.1} parent=11 // pred_check_branch
          %634 = sbr.rel (%p632) target = $region84
        $region83: #{decoder_block_forward.1} parent=11 // pred_region
          _
        $region84: #{decoder_block_forward.1} parent=11 // pred_fallthru
          _
      $region12: #{decoder_block_forward.1} parent=5 // pred_fallthru
        _
      %p635 = scmp.lt.s32.totalorder %s32, 2
      // Predicated region
      $region85: #{decoder_block_forward.1} parent=5 // pred_check
        %p636 = pneg %p635
      $region86: #{decoder_block_forward.1} parent=5 // pred_check_branch
        %638 = sbr.rel (%p636) target = $region88
      $region87: #{decoder_block_forward.1} parent=5 // pred_region
        // Predicated region
        $region89: #{decoder_block_forward.1} parent=87 // pred_check
          %p639 = pneg %p52
        $region90: #{decoder_block_forward.1} parent=87 // pred_check_branch
          %641 = sbr.rel (%p639) target = $region92
        $region91: #{decoder_block_forward.1} parent=87 // pred_region
          %p642 = scmp.lt.s32.totalorder %s32, 1
          %s643 = scalar_select %p642, %s32, 1
          %s644 = smul.addr %s643, 8
          %s645 = scalar_lea.vmem %s0, %s644
        $region92: #{decoder_block_forward.1} parent=87 // pred_fallthru
          _
        // Predicated region
        $region93: #{decoder_block_forward.1} parent=87 // pred_check
          %p646 = pneg %p78
        $region94: #{decoder_block_forward.1} parent=87 // pred_check_branch
          %648 = sbr.rel (%p646) target = $region96
        $region95: #{decoder_block_forward.1} parent=87 // pred_region
          %p649 = scmp.lt.s32.totalorder %s32, 1
          %s650 = scalar_select %p649, %s32, 1
          %s651 = smul.addr %s650, 2
          %s652 = smul.addr %s651, 8
          %s653 = scalar_lea.vmem %s1, %s652
        $region96: #{decoder_block_forward.1} parent=87 // pred_fallthru
          _
        // Predicated region
        $region97: #{decoder_block_forward.1} parent=87 // pred_check
          %p654 = pneg %p104
        $region98: #{decoder_block_forward.1} parent=87 // pred_check_branch
          %656 = sbr.rel (%p654) target = $region100
        $region99: #{decoder_block_forward.1} parent=87 // pred_region
          %p657 = scmp.lt.s32.totalorder %s32, 1
          %s658 = scalar_select %p657, %s32, 1
          %s659 = smul.addr %s658, 2
          %s660 = smul.addr %s659, 8
          %s661 = scalar_lea.vmem %s2, %s660
        $region100: #{decoder_block_forward.1} parent=87 // pred_fallthru
          _
        // Predicated region
        $region101: #{decoder_block_forward.1} parent=87 // pred_check
          %p662 = pneg %p130
        $region102: #{decoder_block_forward.1} parent=87 // pred_check_branch
          %664 = sbr.rel (%p662) target = $region104
        $region103: #{decoder_block_forward.1} parent=87 // pred_region
          %p665 = scmp.lt.s32.totalorder %s32, 1
          %s666 = scalar_select %p665, %s32, 1
          %s667 = smul.addr %s666, 8
          %s668 = scalar_lea.vmem %s3, %s667
        $region104: #{decoder_block_forward.1} parent=87 // pred_fallthru
          _
        // Predicated region
        $region105: #{decoder_block_forward.1} parent=87 // pred_check
          %p669 = pneg %p156
        $region106: #{decoder_block_forward.1} parent=87 // pred_check_branch
          %671 = sbr.rel (%p669) target = $region108
        $region107: #{decoder_block_forward.1} parent=87 // pred_region
          %p672 = scmp.lt.s32.totalorder %s32, 1
          %s673 = scalar_select %p672, %s32, 1
          %s674 = scalar_lea.vmem %s4, %s673
        $region108: #{decoder_block_forward.1} parent=87 // pred_fallthru
          _
      $region88: #{decoder_block_forward.1} parent=5 // pred_fallthru
        _
      %p675 = scmp.le.s32.totalorder 1, %s32
      %p676 = scmp.lt.s32.totalorder %s32, 3
      %p677 = pnand %p675, %p676
      %p678 = pneg %p677
      // Predicated region
      $region109: #{decoder_block_forward.1} parent=5 // pred_check
        _
      $region110: #{decoder_block_forward.1} parent=5 // pred_check_branch
        %680 = sbr.rel (%p677) target = $region112
      $region111: #{decoder_block_forward.1} parent=5 // pred_region
        %s681 = ssub.s32 %s32, 1
        %p682 = scmp.lt.s32.totalorder %s37, 1
        %s683 = scalar_select %p682, %s37, 1
        %s684 = smul.addr %s683, 8
        %s685 = scalar_lea.vmem %s0, %s684
        %p686 = pneg %p58
        %p687 = pneg %p55
        %p688 = scmp.lt.s32.totalorder %s37, 1
        %s689 = scalar_select %p688, %s37, 1
        %s690 = smul.addr %s689, 2
        %s691 = smul.addr %s690, 8
        %s692 = scalar_lea.vmem %s1, %s691
        %p693 = pneg %p84
        %p694 = pneg %p81
        %p695 = scmp.lt.s32.totalorder %s37, 1
        %s696 = scalar_select %p695, %s37, 1
        %s697 = smul.addr %s696, 2
        %s698 = smul.addr %s697, 8
        %s699 = scalar_lea.vmem %s2, %s698
        %p700 = pneg %p110
        %p701 = pneg %p107
        %p702 = scmp.lt.s32.totalorder %s37, 1
        %s703 = scalar_select %p702, %s37, 1
        %s704 = smul.addr %s703, 8
        %s705 = scalar_lea.vmem %s3, %s704
        %p706 = pneg %p136
        %p707 = pneg %p133
        %p708 = scmp.lt.s32.totalorder %s37, 1
        %s709 = scalar_select %p708, %s37, 1
        %s710 = scalar_lea.vmem %s4, %s709
        %p711 = pneg %p162
        %p712 = pneg %p159
        %p713 = pneg %p183
        %p714 = pneg %p180
        %p715 = pneg %p204
        %p716 = pneg %p201
        %p717 = pneg %p225
        %p718 = pneg %p222
        %p719 = pneg %p246
        %p720 = pneg %p243
        %p721 = pneg %p267
        %p722 = pneg %p264
        %p723 = pneg %p288
        %p724 = pneg %p285
        %p725 = pneg %p309
        %p726 = pneg %p306
        %p727 = pneg %p330
        %p728 = pneg %p327
        %p729 = pneg %p351
        %p730 = pneg %p348
        %p731 = pneg %p372
        %p732 = pneg %p369
        %p733 = pneg %p393
        %p734 = pneg %p390
        %p735 = pneg %p414
        %p736 = pneg %p411
        %p737 = pneg %p435
        %p738 = pneg %p432
        %p739 = pneg %p456
        %p740 = pneg %p453
        %p741 = pneg %p477
        %p742 = pneg %p474
        %p743 = pneg %p498
        %p744 = pneg %p495
        %p745 = pneg %p519
        %p746 = pneg %p516
        %p747 = pneg %p540
        %p748 = pneg %p537
        %p749 = pneg %p566
        %p750 = pneg %p563
        %s751 = sand.u32 %s553, 1
        %s752 = scalar_lea.sflag [#allocation3], %s751
        %s753 = sand.u32 %s553, 1
        %s754 = smul.addr %s753, 8
        %s755 = scalar_lea.vmem [#allocation2], %s754
        %p756 = scmp.lt.s32.totalorder %s37, 1
        %s757 = scalar_select %p756, %s37, 1
        %s758 = smul.addr %s757, 8
        %s759 = scalar_lea.vmem %s0, %s758
        %p760 = scmp.lt.s32.totalorder %s37, 1
        %s761 = scalar_select %p760, %s37, 1
        %s762 = smul.addr %s761, 2
        %s763 = smul.addr %s762, 8
        %s764 = scalar_lea.vmem %s1, %s763
        %p765 = scmp.lt.s32.totalorder %s37, 1
        %s766 = scalar_select %p765, %s37, 1
        %s767 = smul.addr %s766, 2
        %s768 = smul.addr %s767, 8
        %s769 = scalar_lea.vmem %s2, %s768
        %p770 = scmp.lt.s32.totalorder %s37, 1
        %s771 = scalar_select %p770, %s37, 1
        %s772 = smul.addr %s771, 8
        %s773 = scalar_lea.vmem %s3, %s772
        %p774 = scmp.lt.s32.totalorder %s37, 1
        %s775 = scalar_select %p774, %s37, 1
        %s776 = scalar_lea.vmem %s4, %s775
        %v778 = vld [vmem:[%s759] sm:$0xff]
        %v779 = vld [vmem:[%s764] sm:$0xff]
        %v780 = vld [vmem:[%s764 + $0x8] sm:$0xff]
        %v781 = vld [vmem:[%s769] sm:$0xff]
        %v782 = vld [vmem:[%s769 + $0x8] sm:$0xff]
        %v783 = vld [vmem:[%s773] sm:$0xff]
        %v784 = vld [vmem:[%s776] sm:$0x1]
        %v785 = vld [vmem:[%s5] sm:$0xf]
        %v786 = vld [vmem:[%s5 + $0x4] sm:$0xf]
        %v787 = vld [vmem:[%s5 + $0x8] sm:$0xf]
        %v788 = vld [vmem:[%s5 + $0xc] sm:$0xf]
        %v789 = vld [vmem:[%s5 + $0x10] sm:$0xf]
        %v790 = vld [vmem:[%s5 + $0x14] sm:$0xf]
        %v791 = vld [vmem:[%s5 + $0x18] sm:$0xf]
        %v792 = vld [vmem:[%s5 + $0x1c] sm:$0xf]
        %v793 = vld [vmem:[%s5 + $0x20] sm:$0xf]
        %v794 = vld [vmem:[%s5 + $0x24] sm:$0xf]
        %v795 = vld [vmem:[%s5 + $0x28] sm:$0xf]
        %v796 = vld [vmem:[%s5 + $0x2c] sm:$0xf]
        %v797 = vld [vmem:[%s5 + $0x30] sm:$0xf]
        %v798 = vld [vmem:[%s5 + $0x34] sm:$0xf]
        %v799 = vld [vmem:[%s5 + $0x38] sm:$0xf]
        %v800 = vld [vmem:[%s5 + $0x3c] sm:$0xf]
        %v801 = vld [vmem:[%s6] sm:$0xf]
        %v802 = vld [vmem:[%s6 + $0x4] sm:$0xf]
        %v803 = vld [vmem:[%s6 + $0x8] sm:$0xf]
        %v804 = vld [vmem:[%s6 + $0xc] sm:$0xf]
        %v805 = vld [vmem:[%s6 + $0x10] sm:$0xf]
        %v806 = vld [vmem:[%s6 + $0x14] sm:$0xf]
        %v807 = vld [vmem:[%s6 + $0x18] sm:$0xf]
        %v808 = vld [vmem:[%s6 + $0x1c] sm:$0xf]
        %v809 = vld [vmem:[%s6 + $0x20] sm:$0xf]
        %v810 = vld [vmem:[%s6 + $0x24] sm:$0xf]
        %v811 = vld [vmem:[%s6 + $0x28] sm:$0xf]
        %v812 = vld [vmem:[%s6 + $0x2c] sm:$0xf]
        %v813 = vld [vmem:[%s6 + $0x30] sm:$0xf]
        %v814 = vld [vmem:[%s6 + $0x34] sm:$0xf]
        %v815 = vld [vmem:[%s6 + $0x38] sm:$0xf]
        %v816 = vld [vmem:[%s6 + $0x3c] sm:$0xf]
        %v817 = vld [vmem:[%s7] sm:$0xf]
        %v818 = vld [vmem:[%s7 + $0x4] sm:$0xf]
        %v819 = vld [vmem:[%s7 + $0x8] sm:$0xf]
        %v820 = vld [vmem:[%s7 + $0xc] sm:$0xf]
        %v821 = vld [vmem:[%s7 + $0x10] sm:$0xf]
        %v822 = vld [vmem:[%s7 + $0x14] sm:$0xf]
        %v823 = vld [vmem:[%s7 + $0x18] sm:$0xf]
        %v824 = vld [vmem:[%s7 + $0x1c] sm:$0xf]
        %v825 = vld [vmem:[%s7 + $0x20] sm:$0xf]
        %v826 = vld [vmem:[%s7 + $0x24] sm:$0xf]
        %v827 = vld [vmem:[%s7 + $0x28] sm:$0xf]
        %v828 = vld [vmem:[%s7 + $0x2c] sm:$0xf]
        %v829 = vld [vmem:[%s7 + $0x30] sm:$0xf]
        %v830 = vld [vmem:[%s7 + $0x34] sm:$0xf]
        %v831 = vld [vmem:[%s7 + $0x38] sm:$0xf]
        %v832 = vld [vmem:[%s7 + $0x3c] sm:$0xf]
        %v833 = vld [vmem:[%s8] sm:$0xf]
        %v834 = vld [vmem:[%s8 + $0x4] sm:$0xf]
        %v835 = vld [vmem:[%s8 + $0x8] sm:$0xf]
        %v836 = vld [vmem:[%s8 + $0xc] sm:$0xf]
        %v837 = vld [vmem:[%s8 + $0x10] sm:$0xf]
        %v838 = vld [vmem:[%s8 + $0x14] sm:$0xf]
        %v839 = vld [vmem:[%s8 + $0x18] sm:$0xf]
        %v840 = vld [vmem:[%s8 + $0x1c] sm:$0xf]
        %v841 = vld [vmem:[%s8 + $0x20] sm:$0xf]
        %v842 = vld [vmem:[%s8 + $0x24] sm:$0xf]
        %v843 = vld [vmem:[%s8 + $0x28] sm:$0xf]
        %v844 = vld [vmem:[%s8 + $0x2c] sm:$0xf]
        %v845 = vld [vmem:[%s8 + $0x30] sm:$0xf]
        %v846 = vld [vmem:[%s8 + $0x34] sm:$0xf]
        %v847 = vld [vmem:[%s8 + $0x38] sm:$0xf]
        %v848 = vld [vmem:[%s8 + $0x3c] sm:$0xf]
        %v849 = vld [vmem:[%s9] sm:$0x1]
        %v850 = vld [vmem:[%s10] sm:$0x1]
        %v851 = vpack.c.bf16 %v778, %v778
        %v868 = vunpack.c.l.b16 %v785
        %v869 = vunpack.c.l.b16 %v786
        %v870 = vunpack.c.l.b16 %v787
        %v871 = vunpack.c.l.b16 %v788
        %v872 = vunpack.c.l.b16 %v789
        %v873 = vunpack.c.l.b16 %v790
        %v874 = vunpack.c.l.b16 %v791
        %v875 = vunpack.c.l.b16 %v792
        %v876 = vunpack.c.l.b16 %v793
        %v877 = vunpack.c.l.b16 %v794
        %v878 = vunpack.c.l.b16 %v795
        %v879 = vunpack.c.l.b16 %v796
        %v880 = vunpack.c.l.b16 %v797
        %v881 = vunpack.c.l.b16 %v798
        %v882 = vunpack.c.l.b16 %v799
        %v883 = vunpack.c.l.b16 %v800
        %v884 = vpack.c.b16 %v869, %v868
        %v885 = vpack.c.b16 %v871, %v870
        %v886 = vpack.c.b16 %v873, %v872
        %v887 = vpack.c.b16 %v875, %v874
        %v888 = vpack.c.b16 %v877, %v876
        %v889 = vpack.c.b16 %v879, %v878
        %v890 = vpack.c.b16 %v881, %v880
        %v891 = vpack.c.b16 %v883, %v882
        %900 = vmatprep.subr.bf16.mxu0 0
        %901 = vmatpush1.bf16.msra.mxu0 %v891
        %902 = vmatprep.subr.bf16.mxu0 0
        %903 = vmatpush1.bf16.msra.mxu0 %v890
        %904 = vmatprep.subr.bf16.mxu0 0
        %905 = vmatpush1.bf16.msra.mxu0 %v889
        %906 = vmatprep.subr.bf16.mxu0 0
        %907 = vmatpush1.bf16.msra.mxu0 %v888
        %908 = vmatprep.subr.bf16.mxu0 0
        %909 = vmatpush1.bf16.msra.mxu0 %v887
        %910 = vmatprep.subr.bf16.mxu0 0
        %911 = vmatpush1.bf16.msra.mxu0 %v886
        %912 = vmatprep.subr.bf16.mxu0 0
        %913 = vmatpush1.bf16.msra.mxu0 %v885
        %914 = vmatprep.subr.bf16.mxu0 0
        %915 = vmatpush1.bf16.msra.mxu0 %v884
        %916 = vmatprep.subr.bf16.mxu0 0
        %917 = vmatpush2.bf16.msra.mxu0 0
        %918 = vmatprep.subr.bf16.mxu0 0
        %919 = vmatpush2.bf16.msra.mxu0 0
        %920 = vmatprep.subr.bf16.mxu0 0
        %921 = vmatpush2.bf16.msra.mxu0 0
        %922 = vmatprep.subr.bf16.mxu0 0
        %923 = vmatpush2.bf16.msra.mxu0 0
        %924 = vmatprep.subr.bf16.mxu0 0
        %925 = vmatpush2.bf16.msra.mxu0 0
        %926 = vmatprep.subr.bf16.mxu0 0
        %927 = vmatpush2.bf16.msra.mxu0 0
        %928 = vmatprep.subr.bf16.mxu0 0
        %929 = vmatpush2.bf16.msra.mxu0 0
        %930 = vmatprep.subr.bf16.mxu0 0
        %931 = vmatpush2.bf16.msra.mxu0 0
        %932 = vmatprep.mubr.bf16.mxu0 0
        %933 = vmatmul.mubr.bf16.gmra.mxu0 %v851
        %v934 = vpop.f32.mrf.mxu0
        %v935 = vadd.f32 0.0, %v934
        %v936 = vpop.f32.mrf.mxu0
        %v937 = vpop.f32.mrf.mxu0
        %v938 = vpop.f32.mrf.mxu0
        %939 = vdwg.mxu0
        %v940 = vmul.f32 %v935, 0.088388346
        %v957 = vunpack.c.l.b16 %v801
        %v958 = vunpack.c.l.b16 %v802
        %v959 = vunpack.c.l.b16 %v803
        %v960 = vunpack.c.l.b16 %v804
        %v961 = vunpack.c.l.b16 %v805
        %v962 = vunpack.c.l.b16 %v806
        %v963 = vunpack.c.l.b16 %v807
        %v964 = vunpack.c.l.b16 %v808
        %v965 = vunpack.c.l.b16 %v809
        %v966 = vunpack.c.l.b16 %v810
        %v967 = vunpack.c.l.b16 %v811
        %v968 = vunpack.c.l.b16 %v812
        %v969 = vunpack.c.l.b16 %v813
        %v970 = vunpack.c.l.b16 %v814
        %v971 = vunpack.c.l.b16 %v815
        %v972 = vunpack.c.l.b16 %v816
        %v973 = vpack.c.b16 %v958, %v957
        %v974 = vpack.c.b16 %v960, %v959
        %v975 = vpack.c.b16 %v962, %v961
        %v976 = vpack.c.b16 %v964, %v963
        %v977 = vpack.c.b16 %v966, %v965
        %v978 = vpack.c.b16 %v968, %v967
        %v979 = vpack.c.b16 %v970, %v969
        %v980 = vpack.c.b16 %v972, %v971
        %989 = vmatprep.subr.bf16.mxu0 0
        %990 = vmatpush1.bf16.msra.mxu0 %v980
        %991 = vmatprep.subr.bf16.mxu0 0
        %992 = vmatpush1.bf16.msra.mxu0 %v979
        %993 = vmatprep.subr.bf16.mxu0 0
        %994 = vmatpush1.bf16.msra.mxu0 %v978
        %995 = vmatprep.subr.bf16.mxu0 0
        %996 = vmatpush1.bf16.msra.mxu0 %v977
        %997 = vmatprep.subr.bf16.mxu0 0
        %998 = vmatpush1.bf16.msra.mxu0 %v976
        %999 = vmatprep.subr.bf16.mxu0 0
        %1000 = vmatpush1.bf16.msra.mxu0 %v975
        %1001 = vmatprep.subr.bf16.mxu0 0
        %1002 = vmatpush1.bf16.msra.mxu0 %v974
        %1003 = vmatprep.subr.bf16.mxu0 0
        %1004 = vmatpush1.bf16.msra.mxu0 %v973
        %1005 = vmatprep.subr.bf16.mxu0 0
        %1006 = vmatpush2.bf16.msra.mxu0 0
        %1007 = vmatprep.subr.bf16.mxu0 0
        %1008 = vmatpush2.bf16.msra.mxu0 0
        %1009 = vmatprep.subr.bf16.mxu0 0
        %1010 = vmatpush2.bf16.msra.mxu0 0
        %1011 = vmatprep.subr.bf16.mxu0 0
        %1012 = vmatpush2.bf16.msra.mxu0 0
        %1013 = vmatprep.subr.bf16.mxu0 0
        %1014 = vmatpush2.bf16.msra.mxu0 0
        %1015 = vmatprep.subr.bf16.mxu0 0
        %1016 = vmatpush2.bf16.msra.mxu0 0
        %1017 = vmatprep.subr.bf16.mxu0 0
        %1018 = vmatpush2.bf16.msra.mxu0 0
        %1019 = vmatprep.subr.bf16.mxu0 0
        %1020 = vmatpush2.bf16.msra.mxu0 0
        %1021 = vmatprep.mubr.bf16.mxu0 0
        %1022 = vmatmul.mubr.bf16.gmra.mxu0 %v851
        %v1023 = vpop.f32.mrf.mxu0
        %v1024 = vadd.f32 0.0, %v1023
        %v1025 = vpop.f32.mrf.mxu0
        %v1026 = vpop.f32.mrf.mxu0
        %v1027 = vpop.f32.mrf.mxu0
        %1028 = vdwg.mxu0
        %v1045 = vunpack.c.l.b16 %v817
        %v1046 = vunpack.c.l.b16 %v818
        %v1047 = vunpack.c.l.b16 %v819
        %v1048 = vunpack.c.l.b16 %v820
        %v1049 = vunpack.c.l.b16 %v821
        %v1050 = vunpack.c.l.b16 %v822
        %v1051 = vunpack.c.l.b16 %v823
        %v1052 = vunpack.c.l.b16 %v824
        %v1053 = vunpack.c.l.b16 %v825
        %v1054 = vunpack.c.l.b16 %v826
        %v1055 = vunpack.c.l.b16 %v827
        %v1056 = vunpack.c.l.b16 %v828
        %v1057 = vunpack.c.l.b16 %v829
        %v1058 = vunpack.c.l.b16 %v830
        %v1059 = vunpack.c.l.b16 %v831
        %v1060 = vunpack.c.l.b16 %v832
        %v1061 = vpack.c.b16 %v1046, %v1045
        %v1062 = vpack.c.b16 %v1048, %v1047
        %v1063 = vpack.c.b16 %v1050, %v1049
        %v1064 = vpack.c.b16 %v1052, %v1051
        %v1065 = vpack.c.b16 %v1054, %v1053
        %v1066 = vpack.c.b16 %v1056, %v1055
        %v1067 = vpack.c.b16 %v1058, %v1057
        %v1068 = vpack.c.b16 %v1060, %v1059
        %1077 = vmatprep.subr.bf16.mxu0 0
        %1078 = vmatpush1.bf16.msra.mxu0 %v1068
        %1079 = vmatprep.subr.bf16.mxu0 0
        %1080 = vmatpush1.bf16.msra.mxu0 %v1067
        %1081 = vmatprep.subr.bf16.mxu0 0
        %1082 = vmatpush1.bf16.msra.mxu0 %v1066
        %1083 = vmatprep.subr.bf16.mxu0 0
        %1084 = vmatpush1.bf16.msra.mxu0 %v1065
        %1085 = vmatprep.subr.bf16.mxu0 0
        %1086 = vmatpush1.bf16.msra.mxu0 %v1064
        %1087 = vmatprep.subr.bf16.mxu0 0
        %1088 = vmatpush1.bf16.msra.mxu0 %v1063
        %1089 = vmatprep.subr.bf16.mxu0 0
        %1090 = vmatpush1.bf16.msra.mxu0 %v1062
        %1091 = vmatprep.subr.bf16.mxu0 0
        %1092 = vmatpush1.bf16.msra.mxu0 %v1061
        %1093 = vmatprep.subr.bf16.mxu0 0
        %1094 = vmatpush2.bf16.msra.mxu0 0
        %1095 = vmatprep.subr.bf16.mxu0 0
        %1096 = vmatpush2.bf16.msra.mxu0 0
        %1097 = vmatprep.subr.bf16.mxu0 0
        %1098 = vmatpush2.bf16.msra.mxu0 0
        %1099 = vmatprep.subr.bf16.mxu0 0
        %1100 = vmatpush2.bf16.msra.mxu0 0
        %1101 = vmatprep.subr.bf16.mxu0 0
        %1102 = vmatpush2.bf16.msra.mxu0 0
        %1103 = vmatprep.subr.bf16.mxu0 0
        %1104 = vmatpush2.bf16.msra.mxu0 0
        %1105 = vmatprep.subr.bf16.mxu0 0
        %1106 = vmatpush2.bf16.msra.mxu0 0
        %1107 = vmatprep.subr.bf16.mxu0 0
        %1108 = vmatpush2.bf16.msra.mxu0 0
        %1109 = vmatprep.mubr.bf16.mxu0 0
        %1110 = vmatmul.mubr.bf16.gmra.mxu0 %v851
        %v1111 = vpop.f32.mrf.mxu0
        %v1112 = vadd.f32 0.0, %v1111
        %v1113 = vpop.f32.mrf.mxu0
        %v1114 = vpop.f32.mrf.mxu0
        %v1115 = vpop.f32.mrf.mxu0
        %1116 = vdwg.mxu0
        %1118 = vrot.lane.b32.xlu0 %v940, 96
        %v1119 = vpop.permute.xlu0 %1118
        %1121 = vrot.lane.b32.xlu0 %v940, 64
        %v1122 = vpop.permute.xlu0 %1121
        %1124 = vrot.lane.b32.xlu0 %v940, 32
        %v1125 = vpop.permute.xlu0 %1124
        %v1127 = vcombine.low %v940, %v1122
        %v1128 = vcombine.high %v940, %v1122
        %v1130 = vunpack.c.l.s4 1983009808
        %v1131 = vunpack.c.0.s8 %v1130
        %v1132 = vlaneseq
        %v1133 = vshrl.u32 %v1132, 7
        %v1134 = vsub.s32 %v1131, %v1133
        %v1135 = vrot.slane %v1127, %v1134
        %v1137 = vunpack.c.l.s4 1983009808
        %v1138 = vunpack.c.0.s8 %v1137
        %v1139 = vlaneseq
        %v1140 = vshrl.u32 %v1139, 7
        %v1141 = vsub.s32 %v1138, %v1140
        %v1142 = vrot.slane %v1128, %v1141
        %v1143 = vcombine.low %v1119, %v1125
        %v1144 = vcombine.high %v1119, %v1125
        %v1146 = vunpack.c.l.s4 1983009808
        %v1147 = vunpack.c.0.s8 %v1146
        %v1148 = vlaneseq
        %v1149 = vshrl.u32 %v1148, 7
        %v1150 = vsub.s32 %v1147, %v1149
        %v1151 = vrot.slane %v1143, %v1150
        %v1153 = vunpack.c.l.s4 1983009808
        %v1154 = vunpack.c.0.s8 %v1153
        %v1155 = vlaneseq
        %v1156 = vshrl.u32 %v1155, 7
        %v1157 = vsub.s32 %v1154, %v1156
        %v1158 = vrot.slane %v1144, %v1157
        %v1159 = vcombine.low %v1135, %v1151
        %v1160 = vcombine.high %v1135, %v1151
        %v1162 = vunpack.c.l.s4 1934713408
        %v1163 = vunpack.c.0.s8 %v1162
        %v1164 = vlaneseq
        %v1165 = vshrl.u32 %v1164, 7
        %v1166 = vsub.s32 %v1163, %v1165
        %v1167 = vrot.slane %v1159, %v1166
        %v1169 = vunpack.c.l.s4 1934713408
        %v1170 = vunpack.c.0.s8 %v1169
        %v1171 = vlaneseq
        %v1172 = vshrl.u32 %v1171, 7
        %v1173 = vsub.s32 %v1170, %v1172
        %v1174 = vrot.slane %v1160, %v1173
        %v1175 = vcombine.low %v1142, %v1158
        %v1176 = vcombine.high %v1142, %v1158
        %v1178 = vunpack.c.l.s4 1934713408
        %v1179 = vunpack.c.0.s8 %v1178
        %v1180 = vlaneseq
        %v1181 = vshrl.u32 %v1180, 7
        %v1182 = vsub.s32 %v1179, %v1181
        %v1183 = vrot.slane %v1175, %v1182
        %v1185 = vunpack.c.l.s4 1934713408
        %v1186 = vunpack.c.0.s8 %v1185
        %v1187 = vlaneseq
        %v1188 = vshrl.u32 %v1187, 7
        %v1189 = vsub.s32 %v1186, %v1188
        %v1190 = vrot.slane %v1176, %v1189
        %v1191 = vcombine.high %v1167, 0.0
        %v1192 = vcombine.high %v1174, 0.0
        %v1193 = vcombine.high %v1183, 0.0
        %v1194 = vcombine.high %v1190, 0.0
        %v1195 = vcombine.low %v1167, %v1174
        %v1197 = vunpack.c.l.s4 1983009808
        %v1198 = vunpack.c.0.s8 %v1197
        %v1199 = vlaneseq
        %v1200 = vshrl.u32 %v1199, 7
        %v1201 = vsub.s32 %v1198, %v1200
        %v1202 = vrot.slane %v1195, %v1201
        %v1203 = vcombine.low %v1191, %v1192
        %v1205 = vunpack.c.l.s4 1983009808
        %v1206 = vunpack.c.0.s8 %v1205
        %v1207 = vlaneseq
        %v1208 = vshrl.u32 %v1207, 7
        %v1209 = vsub.s32 %v1206, %v1208
        %v1210 = vrot.slane %v1203, %v1209
        %v1211 = vcombine.low %v1183, %v1190
        %v1213 = vunpack.c.l.s4 1983009808
        %v1214 = vunpack.c.0.s8 %v1213
        %v1215 = vlaneseq
        %v1216 = vshrl.u32 %v1215, 7
        %v1217 = vsub.s32 %v1214, %v1216
        %v1218 = vrot.slane %v1211, %v1217
        %v1219 = vcombine.low %v1193, %v1194
        %v1221 = vunpack.c.l.s4 1983009808
        %v1222 = vunpack.c.0.s8 %v1221
        %v1223 = vlaneseq
        %v1224 = vshrl.u32 %v1223, 7
        %v1225 = vsub.s32 %v1222, %v1224
        %v1226 = vrot.slane %v1219, %v1225
        %v1227 = vcombine.low %v1202, %v1210
        %v1228 = vcombine.high %v1202, %v1210
        %v1230 = vunpack.c.l.s4 1934713408
        %v1231 = vunpack.c.0.s8 %v1230
        %v1232 = vlaneseq
        %v1233 = vshrl.u32 %v1232, 7
        %v1234 = vsub.s32 %v1231, %v1233
        %v1235 = vrot.slane %v1227, %v1234
        %v1237 = vunpack.c.l.s4 1934713408
        %v1238 = vunpack.c.0.s8 %v1237
        %v1239 = vlaneseq
        %v1240 = vshrl.u32 %v1239, 7
        %v1241 = vsub.s32 %v1238, %v1240
        %v1242 = vrot.slane %v1228, %v1241
        %v1243 = vcombine.low %v1218, %v1226
        %v1244 = vcombine.high %v1218, %v1226
        %v1246 = vunpack.c.l.s4 1934713408
        %v1247 = vunpack.c.0.s8 %v1246
        %v1248 = vlaneseq
        %v1249 = vshrl.u32 %v1248, 7
        %v1250 = vsub.s32 %v1247, %v1249
        %v1251 = vrot.slane %v1243, %v1250
        %v1253 = vunpack.c.l.s4 1934713408
        %v1254 = vunpack.c.0.s8 %v1253
        %v1255 = vlaneseq
        %v1256 = vshrl.u32 %v1255, 7
        %v1257 = vsub.s32 %v1254, %v1256
        %v1258 = vrot.slane %v1244, %v1257
        %v1259 = vcombine.low %v1235, %v1251
        %v1260 = vcombine.high %v1235, %v1251
        %v1261 = vcombine.low %v1242, %v1258
        %v1262 = vcombine.high %v1242, %v1258
        %v1263 = vpack.c.bf16 %v1259, %v1259
        %v1264 = vpack.c.bf16 %v1260, %v1260
        %v1265 = vpack.c.bf16 %v1261, %v1261
        %v1266 = vpack.c.bf16 %v1262, %v1262
        %1268 = vrot.lane.b32.xlu0 %v1024, 96
        %v1269 = vpop.permute.xlu0 %1268
        %1271 = vrot.lane.b32.xlu0 %v1024, 64
        %v1272 = vpop.permute.xlu0 %1271
        %1274 = vrot.lane.b32.xlu0 %v1024, 32
        %v1275 = vpop.permute.xlu0 %1274
        %v1277 = vcombine.low %v1024, %v1272
        %v1278 = vcombine.high %v1024, %v1272
        %v1280 = vunpack.c.l.s4 1983009808
        %v1281 = vunpack.c.0.s8 %v1280
        %v1282 = vlaneseq
        %v1283 = vshrl.u32 %v1282, 7
        %v1284 = vsub.s32 %v1281, %v1283
        %v1285 = vrot.slane %v1277, %v1284
        %v1287 = vunpack.c.l.s4 1983009808
        %v1288 = vunpack.c.0.s8 %v1287
        %v1289 = vlaneseq
        %v1290 = vshrl.u32 %v1289, 7
        %v1291 = vsub.s32 %v1288, %v1290
        %v1292 = vrot.slane %v1278, %v1291
        %v1293 = vcombine.low %v1269, %v1275
        %v1294 = vcombine.high %v1269, %v1275
        %v1296 = vunpack.c.l.s4 1983009808
        %v1297 = vunpack.c.0.s8 %v1296
        %v1298 = vlaneseq
        %v1299 = vshrl.u32 %v1298, 7
        %v1300 = vsub.s32 %v1297, %v1299
        %v1301 = vrot.slane %v1293, %v1300
        %v1303 = vunpack.c.l.s4 1983009808
        %v1304 = vunpack.c.0.s8 %v1303
        %v1305 = vlaneseq
        %v1306 = vshrl.u32 %v1305, 7
        %v1307 = vsub.s32 %v1304, %v1306
        %v1308 = vrot.slane %v1294, %v1307
        %v1309 = vcombine.low %v1285, %v1301
        %v1310 = vcombine.high %v1285, %v1301
        %v1312 = vunpack.c.l.s4 1934713408
        %v1313 = vunpack.c.0.s8 %v1312
        %v1314 = vlaneseq
        %v1315 = vshrl.u32 %v1314, 7
        %v1316 = vsub.s32 %v1313, %v1315
        %v1317 = vrot.slane %v1309, %v1316
        %v1319 = vunpack.c.l.s4 1934713408
        %v1320 = vunpack.c.0.s8 %v1319
        %v1321 = vlaneseq
        %v1322 = vshrl.u32 %v1321, 7
        %v1323 = vsub.s32 %v1320, %v1322
        %v1324 = vrot.slane %v1310, %v1323
        %v1325 = vcombine.low %v1292, %v1308
        %v1326 = vcombine.high %v1292, %v1308
        %v1328 = vunpack.c.l.s4 1934713408
        %v1329 = vunpack.c.0.s8 %v1328
        %v1330 = vlaneseq
        %v1331 = vshrl.u32 %v1330, 7
        %v1332 = vsub.s32 %v1329, %v1331
        %v1333 = vrot.slane %v1325, %v1332
        %v1335 = vunpack.c.l.s4 1934713408
        %v1336 = vunpack.c.0.s8 %v1335
        %v1337 = vlaneseq
        %v1338 = vshrl.u32 %v1337, 7
        %v1339 = vsub.s32 %v1336, %v1338
        %v1340 = vrot.slane %v1326, %v1339
        %v1341 = vcombine.high %v1317, 0.0
        %v1342 = vcombine.high %v1324, 0.0
        %v1343 = vcombine.high %v1333, 0.0
        %v1344 = vcombine.high %v1340, 0.0
        %v1345 = vcombine.low %v1317, %v1324
        %v1347 = vunpack.c.l.s4 1983009808
        %v1348 = vunpack.c.0.s8 %v1347
        %v1349 = vlaneseq
        %v1350 = vshrl.u32 %v1349, 7
        %v1351 = vsub.s32 %v1348, %v1350
        %v1352 = vrot.slane %v1345, %v1351
        %v1353 = vcombine.low %v1341, %v1342
        %v1355 = vunpack.c.l.s4 1983009808
        %v1356 = vunpack.c.0.s8 %v1355
        %v1357 = vlaneseq
        %v1358 = vshrl.u32 %v1357, 7
        %v1359 = vsub.s32 %v1356, %v1358
        %v1360 = vrot.slane %v1353, %v1359
        %v1361 = vcombine.low %v1333, %v1340
        %v1363 = vunpack.c.l.s4 1983009808
        %v1364 = vunpack.c.0.s8 %v1363
        %v1365 = vlaneseq
        %v1366 = vshrl.u32 %v1365, 7
        %v1367 = vsub.s32 %v1364, %v1366
        %v1368 = vrot.slane %v1361, %v1367
        %v1369 = vcombine.low %v1343, %v1344
        %v1371 = vunpack.c.l.s4 1983009808
        %v1372 = vunpack.c.0.s8 %v1371
        %v1373 = vlaneseq
        %v1374 = vshrl.u32 %v1373, 7
        %v1375 = vsub.s32 %v1372, %v1374
        %v1376 = vrot.slane %v1369, %v1375
        %v1377 = vcombine.low %v1352, %v1360
        %v1378 = vcombine.high %v1352, %v1360
        %v1380 = vunpack.c.l.s4 1934713408
        %v1381 = vunpack.c.0.s8 %v1380
        %v1382 = vlaneseq
        %v1383 = vshrl.u32 %v1382, 7
        %v1384 = vsub.s32 %v1381, %v1383
        %v1385 = vrot.slane %v1377, %v1384
        %v1387 = vunpack.c.l.s4 1934713408
        %v1388 = vunpack.c.0.s8 %v1387
        %v1389 = vlaneseq
        %v1390 = vshrl.u32 %v1389, 7
        %v1391 = vsub.s32 %v1388, %v1390
        %v1392 = vrot.slane %v1378, %v1391
        %v1393 = vcombine.low %v1368, %v1376
        %v1394 = vcombine.high %v1368, %v1376
        %v1396 = vunpack.c.l.s4 1934713408
        %v1397 = vunpack.c.0.s8 %v1396
        %v1398 = vlaneseq
        %v1399 = vshrl.u32 %v1398, 7
        %v1400 = vsub.s32 %v1397, %v1399
        %v1401 = vrot.slane %v1393, %v1400
        %v1403 = vunpack.c.l.s4 1934713408
        %v1404 = vunpack.c.0.s8 %v1403
        %v1405 = vlaneseq
        %v1406 = vshrl.u32 %v1405, 7
        %v1407 = vsub.s32 %v1404, %v1406
        %v1408 = vrot.slane %v1394, %v1407
        %v1409 = vcombine.low %v1385, %v1401
        %v1410 = vcombine.high %v1385, %v1401
        %v1411 = vcombine.low %v1392, %v1408
        %v1412 = vcombine.high %v1392, %v1408
        %v1413 = vpack.c.bf16 %v1409, %v1409
        %v1414 = vpack.c.bf16 %v1410, %v1410
        %v1415 = vpack.c.bf16 %v1411, %v1411
        %v1416 = vpack.c.bf16 %v1412, %v1412
        %1418 = vrot.lane.b32.xlu0 %v1112, 96
        %v1419 = vpop.permute.xlu0 %1418
        %1421 = vrot.lane.b32.xlu0 %v1112, 64
        %v1422 = vpop.permute.xlu0 %1421
        %1424 = vrot.lane.b32.xlu0 %v1112, 32
        %v1425 = vpop.permute.xlu0 %1424
        %v1427 = vcombine.low %v1112, %v1422
        %v1428 = vcombine.high %v1112, %v1422
        %v1430 = vunpack.c.l.s4 1983009808
        %v1431 = vunpack.c.0.s8 %v1430
        %v1432 = vlaneseq
        %v1433 = vshrl.u32 %v1432, 7
        %v1434 = vsub.s32 %v1431, %v1433
        %v1435 = vrot.slane %v1427, %v1434
        %v1437 = vunpack.c.l.s4 1983009808
        %v1438 = vunpack.c.0.s8 %v1437
        %v1439 = vlaneseq
        %v1440 = vshrl.u32 %v1439, 7
        %v1441 = vsub.s32 %v1438, %v1440
        %v1442 = vrot.slane %v1428, %v1441
        %v1443 = vcombine.low %v1419, %v1425
        %v1444 = vcombine.high %v1419, %v1425
        %v1446 = vunpack.c.l.s4 1983009808
        %v1447 = vunpack.c.0.s8 %v1446
        %v1448 = vlaneseq
        %v1449 = vshrl.u32 %v1448, 7
        %v1450 = vsub.s32 %v1447, %v1449
        %v1451 = vrot.slane %v1443, %v1450
        %v1453 = vunpack.c.l.s4 1983009808
        %v1454 = vunpack.c.0.s8 %v1453
        %v1455 = vlaneseq
        %v1456 = vshrl.u32 %v1455, 7
        %v1457 = vsub.s32 %v1454, %v1456
        %v1458 = vrot.slane %v1444, %v1457
        %v1459 = vcombine.low %v1435, %v1451
        %v1460 = vcombine.high %v1435, %v1451
        %v1462 = vunpack.c.l.s4 1934713408
        %v1463 = vunpack.c.0.s8 %v1462
        %v1464 = vlaneseq
        %v1465 = vshrl.u32 %v1464, 7
        %v1466 = vsub.s32 %v1463, %v1465
        %v1467 = vrot.slane %v1459, %v1466
        %v1469 = vunpack.c.l.s4 1934713408
        %v1470 = vunpack.c.0.s8 %v1469
        %v1471 = vlaneseq
        %v1472 = vshrl.u32 %v1471, 7
        %v1473 = vsub.s32 %v1470, %v1472
        %v1474 = vrot.slane %v1460, %v1473
        %v1475 = vcombine.low %v1442, %v1458
        %v1476 = vcombine.high %v1442, %v1458
        %v1478 = vunpack.c.l.s4 1934713408
        %v1479 = vunpack.c.0.s8 %v1478
        %v1480 = vlaneseq
        %v1481 = vshrl.u32 %v1480, 7
        %v1482 = vsub.s32 %v1479, %v1481
        %v1483 = vrot.slane %v1475, %v1482
        %v1485 = vunpack.c.l.s4 1934713408
        %v1486 = vunpack.c.0.s8 %v1485
        %v1487 = vlaneseq
        %v1488 = vshrl.u32 %v1487, 7
        %v1489 = vsub.s32 %v1486, %v1488
        %v1490 = vrot.slane %v1476, %v1489
        %v1491 = vcombine.high %v1467, 0.0
        %v1492 = vcombine.high %v1474, 0.0
        %v1493 = vcombine.high %v1483, 0.0
        %v1494 = vcombine.high %v1490, 0.0
        %v1495 = vcombine.low %v1467, %v1474
        %v1497 = vunpack.c.l.s4 1983009808
        %v1498 = vunpack.c.0.s8 %v1497
        %v1499 = vlaneseq
        %v1500 = vshrl.u32 %v1499, 7
        %v1501 = vsub.s32 %v1498, %v1500
        %v1502 = vrot.slane %v1495, %v1501
        %v1503 = vcombine.low %v1491, %v1492
        %v1505 = vunpack.c.l.s4 1983009808
        %v1506 = vunpack.c.0.s8 %v1505
        %v1507 = vlaneseq
        %v1508 = vshrl.u32 %v1507, 7
        %v1509 = vsub.s32 %v1506, %v1508
        %v1510 = vrot.slane %v1503, %v1509
        %v1511 = vcombine.low %v1483, %v1490
        %v1513 = vunpack.c.l.s4 1983009808
        %v1514 = vunpack.c.0.s8 %v1513
        %v1515 = vlaneseq
        %v1516 = vshrl.u32 %v1515, 7
        %v1517 = vsub.s32 %v1514, %v1516
        %v1518 = vrot.slane %v1511, %v1517
        %v1519 = vcombine.low %v1493, %v1494
        %v1521 = vunpack.c.l.s4 1983009808
        %v1522 = vunpack.c.0.s8 %v1521
        %v1523 = vlaneseq
        %v1524 = vshrl.u32 %v1523, 7
        %v1525 = vsub.s32 %v1522, %v1524
        %v1526 = vrot.slane %v1519, %v1525
        %v1527 = vcombine.low %v1502, %v1510
        %v1528 = vcombine.high %v1502, %v1510
        %v1530 = vunpack.c.l.s4 1934713408
        %v1531 = vunpack.c.0.s8 %v1530
        %v1532 = vlaneseq
        %v1533 = vshrl.u32 %v1532, 7
        %v1534 = vsub.s32 %v1531, %v1533
        %v1535 = vrot.slane %v1527, %v1534
        %v1537 = vunpack.c.l.s4 1934713408
        %v1538 = vunpack.c.0.s8 %v1537
        %v1539 = vlaneseq
        %v1540 = vshrl.u32 %v1539, 7
        %v1541 = vsub.s32 %v1538, %v1540
        %v1542 = vrot.slane %v1528, %v1541
        %v1543 = vcombine.low %v1518, %v1526
        %v1544 = vcombine.high %v1518, %v1526
        %v1546 = vunpack.c.l.s4 1934713408
        %v1547 = vunpack.c.0.s8 %v1546
        %v1548 = vlaneseq
        %v1549 = vshrl.u32 %v1548, 7
        %v1550 = vsub.s32 %v1547, %v1549
        %v1551 = vrot.slane %v1543, %v1550
        %v1553 = vunpack.c.l.s4 1934713408
        %v1554 = vunpack.c.0.s8 %v1553
        %v1555 = vlaneseq
        %v1556 = vshrl.u32 %v1555, 7
        %v1557 = vsub.s32 %v1554, %v1556
        %v1558 = vrot.slane %v1544, %v1557
        %v1559 = vcombine.low %v1535, %v1551
        %v1560 = vcombine.high %v1535, %v1551
        %v1561 = vcombine.low %v1542, %v1558
        %v1562 = vcombine.high %v1542, %v1558
        %v1563 = vpack.c.bf16 %v1559, %v1559
        %v1564 = vpack.c.bf16 %v1560, %v1560
        %v1565 = vpack.c.bf16 %v1561, %v1561
        %v1566 = vpack.c.bf16 %v1562, %v1562
        %vm1567 = vcmask 261120
        %v1569 = vsel %vm1567, %v1263, 0
        %v1572 = vsel %vm1567, %v1413, 0
        %1574 = vmatprep.subr.bf16.mxu0 0
        %1575 = vmatpush1.bf16.xpose.msra.mxu0 0
        %1576 = vmatprep.subr.bf16.mxu0 0
        %1577 = vmatpush1.bf16.xpose.msra.mxu0 0
        %1578 = vmatprep.subr.bf16.mxu0 0
        %1579 = vmatpush1.bf16.xpose.msra.mxu0 0
        %1580 = vmatprep.subr.bf16.mxu0 0
        %1581 = vmatpush1.bf16.xpose.msra.mxu0 0
        %1582 = vmatprep.subr.bf16.mxu0 0
        %1583 = vmatpush1.bf16.xpose.msra.mxu0 0
        %1584 = vmatprep.subr.bf16.mxu0 0
        %1585 = vmatpush1.bf16.xpose.msra.mxu0 0
        %1586 = vmatprep.subr.bf16.mxu0 0
        %1587 = vmatpush1.bf16.xpose.msra.mxu0 0
        %1588 = vmatprep.subr.bf16.mxu0 0
        %1589 = vmatpush1.bf16.xpose.msra.mxu0 %v1572
        %1590 = vmatprep.subr.bf16.mxu0 0
        %1591 = vmatpush2.bf16.xpose.msra.mxu0 0
        %1592 = vmatprep.subr.bf16.mxu0 0
        %1593 = vmatpush2.bf16.xpose.msra.mxu0 0
        %1594 = vmatprep.subr.bf16.mxu0 0
        %1595 = vmatpush2.bf16.xpose.msra.mxu0 0
        %1596 = vmatprep.subr.bf16.mxu0 0
        %1597 = vmatpush2.bf16.xpose.msra.mxu0 0
        %1598 = vmatprep.subr.bf16.mxu0 0
        %1599 = vmatpush2.bf16.xpose.msra.mxu0 0
        %1600 = vmatprep.subr.bf16.mxu0 0
        %1601 = vmatpush2.bf16.xpose.msra.mxu0 0
        %1602 = vmatprep.subr.bf16.mxu0 0
        %1603 = vmatpush2.bf16.xpose.msra.mxu0 0
        %1604 = vmatprep.subr.bf16.mxu0 0
        %1605 = vmatpush2.bf16.xpose.msra.mxu0 0
        %1606 = vmatprep.mubr.bf16.mxu0 0
        %1607 = vmatmul.mubr.bf16.gmra.mxu0 %v1569
        %v1608 = vpop.f32.mrf.mxu0
        %v1609 = vadd.f32 %v783, %v1608
        %v1610 = vpop.f32.mrf.mxu0
        %v1611 = vpop.f32.mrf.mxu0
        %v1612 = vpop.f32.mrf.mxu0
        %1613 = vdwg.mxu0
        %v1615 = vsel %vm1567, %v1264, 0
        %v1618 = vsel %vm1567, %v1414, 0
        %1620 = vmatprep.subr.bf16.mxu0 0
        %1621 = vmatpush1.bf16.xpose.msra.mxu0 0
        %1622 = vmatprep.subr.bf16.mxu0 0
        %1623 = vmatpush1.bf16.xpose.msra.mxu0 0
        %1624 = vmatprep.subr.bf16.mxu0 0
        %1625 = vmatpush1.bf16.xpose.msra.mxu0 0
        %1626 = vmatprep.subr.bf16.mxu0 0
        %1627 = vmatpush1.bf16.xpose.msra.mxu0 0
        %1628 = vmatprep.subr.bf16.mxu0 0
        %1629 = vmatpush1.bf16.xpose.msra.mxu0 0
        %1630 = vmatprep.subr.bf16.mxu0 0
        %1631 = vmatpush1.bf16.xpose.msra.mxu0 0
        %1632 = vmatprep.subr.bf16.mxu0 0
        %1633 = vmatpush1.bf16.xpose.msra.mxu0 0
        %1634 = vmatprep.subr.bf16.mxu0 0
        %1635 = vmatpush1.bf16.xpose.msra.mxu0 %v1618
        %1636 = vmatprep.subr.bf16.mxu0 0
        %1637 = vmatpush2.bf16.xpose.msra.mxu0 0
        %1638 = vmatprep.subr.bf16.mxu0 0
        %1639 = vmatpush2.bf16.xpose.msra.mxu0 0
        %1640 = vmatprep.subr.bf16.mxu0 0
        %1641 = vmatpush2.bf16.xpose.msra.mxu0 0
        %1642 = vmatprep.subr.bf16.mxu0 0
        %1643 = vmatpush2.bf16.xpose.msra.mxu0 0
        %1644 = vmatprep.subr.bf16.mxu0 0
        %1645 = vmatpush2.bf16.xpose.msra.mxu0 0
        %1646 = vmatprep.subr.bf16.mxu0 0
        %1647 = vmatpush2.bf16.xpose.msra.mxu0 0
        %1648 = vmatprep.subr.bf16.mxu0 0
        %1649 = vmatpush2.bf16.xpose.msra.mxu0 0
        %1650 = vmatprep.subr.bf16.mxu0 0
        %1651 = vmatpush2.bf16.xpose.msra.mxu0 0
        %1652 = vmatprep.mubr.bf16.mxu0 0
        %1653 = vmatmul.mubr.bf16.gmra.mxu0 %v1615
        %v1654 = vpop.f32.mrf.mxu0
        %v1655 = vadd.f32 %v783, %v1654
        %v1656 = vpop.f32.mrf.mxu0
        %v1657 = vpop.f32.mrf.mxu0
        %v1658 = vpop.f32.mrf.mxu0
        %1659 = vdwg.mxu0
        %v1661 = vsel %vm1567, %v1265, 0
        %v1664 = vsel %vm1567, %v1415, 0
        %1666 = vmatprep.subr.bf16.mxu0 0
        %1667 = vmatpush1.bf16.xpose.msra.mxu0 0
        %1668 = vmatprep.subr.bf16.mxu0 0
        %1669 = vmatpush1.bf16.xpose.msra.mxu0 0
        %1670 = vmatprep.subr.bf16.mxu0 0
        %1671 = vmatpush1.bf16.xpose.msra.mxu0 0
        %1672 = vmatprep.subr.bf16.mxu0 0
        %1673 = vmatpush1.bf16.xpose.msra.mxu0 0
        %1674 = vmatprep.subr.bf16.mxu0 0
        %1675 = vmatpush1.bf16.xpose.msra.mxu0 0
        %1676 = vmatprep.subr.bf16.mxu0 0
        %1677 = vmatpush1.bf16.xpose.msra.mxu0 0
        %1678 = vmatprep.subr.bf16.mxu0 0
        %1679 = vmatpush1.bf16.xpose.msra.mxu0 0
        %1680 = vmatprep.subr.bf16.mxu0 0
        %1681 = vmatpush1.bf16.xpose.msra.mxu0 %v1664
        %1682 = vmatprep.subr.bf16.mxu0 0
        %1683 = vmatpush2.bf16.xpose.msra.mxu0 0
        %1684 = vmatprep.subr.bf16.mxu0 0
        %1685 = vmatpush2.bf16.xpose.msra.mxu0 0
        %1686 = vmatprep.subr.bf16.mxu0 0
        %1687 = vmatpush2.bf16.xpose.msra.mxu0 0
        %1688 = vmatprep.subr.bf16.mxu0 0
        %1689 = vmatpush2.bf16.xpose.msra.mxu0 0
        %1690 = vmatprep.subr.bf16.mxu0 0
        %1691 = vmatpush2.bf16.xpose.msra.mxu0 0
        %1692 = vmatprep.subr.bf16.mxu0 0
        %1693 = vmatpush2.bf16.xpose.msra.mxu0 0
        %1694 = vmatprep.subr.bf16.mxu0 0
        %1695 = vmatpush2.bf16.xpose.msra.mxu0 0
        %1696 = vmatprep.subr.bf16.mxu0 0
        %1697 = vmatpush2.bf16.xpose.msra.mxu0 0
        %1698 = vmatprep.mubr.bf16.mxu0 0
        %1699 = vmatmul.mubr.bf16.gmra.mxu0 %v1661
        %v1700 = vpop.f32.mrf.mxu0
        %v1701 = vadd.f32 %v783, %v1700
        %v1702 = vpop.f32.mrf.mxu0
        %v1703 = vpop.f32.mrf.mxu0
        %v1704 = vpop.f32.mrf.mxu0
        %1705 = vdwg.mxu0
        %v1707 = vsel %vm1567, %v1266, 0
        %v1710 = vsel %vm1567, %v1416, 0
        %1712 = vmatprep.subr.bf16.mxu0 0
        %1713 = vmatpush1.bf16.xpose.msra.mxu0 0
        %1714 = vmatprep.subr.bf16.mxu0 0
        %1715 = vmatpush1.bf16.xpose.msra.mxu0 0
        %1716 = vmatprep.subr.bf16.mxu0 0
        %1717 = vmatpush1.bf16.xpose.msra.mxu0 0
        %1718 = vmatprep.subr.bf16.mxu0 0
        %1719 = vmatpush1.bf16.xpose.msra.mxu0 0
        %1720 = vmatprep.subr.bf16.mxu0 0
        %1721 = vmatpush1.bf16.xpose.msra.mxu0 0
        %1722 = vmatprep.subr.bf16.mxu0 0
        %1723 = vmatpush1.bf16.xpose.msra.mxu0 0
        %1724 = vmatprep.subr.bf16.mxu0 0
        %1725 = vmatpush1.bf16.xpose.msra.mxu0 0
        %1726 = vmatprep.subr.bf16.mxu0 0
        %1727 = vmatpush1.bf16.xpose.msra.mxu0 %v1710
        %1728 = vmatprep.subr.bf16.mxu0 0
        %1729 = vmatpush2.bf16.xpose.msra.mxu0 0
        %1730 = vmatprep.subr.bf16.mxu0 0
        %1731 = vmatpush2.bf16.xpose.msra.mxu0 0
        %1732 = vmatprep.subr.bf16.mxu0 0
        %1733 = vmatpush2.bf16.xpose.msra.mxu0 0
        %1734 = vmatprep.subr.bf16.mxu0 0
        %1735 = vmatpush2.bf16.xpose.msra.mxu0 0
        %1736 = vmatprep.subr.bf16.mxu0 0
        %1737 = vmatpush2.bf16.xpose.msra.mxu0 0
        %1738 = vmatprep.subr.bf16.mxu0 0
        %1739 = vmatpush2.bf16.xpose.msra.mxu0 0
        %1740 = vmatprep.subr.bf16.mxu0 0
        %1741 = vmatpush2.bf16.xpose.msra.mxu0 0
        %1742 = vmatprep.subr.bf16.mxu0 0
        %1743 = vmatpush2.bf16.xpose.msra.mxu0 0
        %1744 = vmatprep.mubr.bf16.mxu0 0
        %1745 = vmatmul.mubr.bf16.gmra.mxu0 %v1707
        %v1746 = vpop.f32.mrf.mxu0
        %v1747 = vadd.f32 %v783, %v1746
        %v1748 = vpop.f32.mrf.mxu0
        %v1749 = vpop.f32.mrf.mxu0
        %v1750 = vpop.f32.mrf.mxu0
        %1751 = vdwg.mxu0
        %vm1752 = vcmask 64512
        %v1753 = vsel %vm1752, %v1609, -inf
        %1754 = vmax.xlane.f32.xlu0 %v1753
        %v1755 = vpop.xlane.xlu0 %1754
        %v1756 = vsel %vm1752, %v1655, -inf
        %1757 = vmax.xlane.f32.xlu0 %v1756
        %v1758 = vpop.xlane.xlu0 %1757
        %v1759 = vsel %vm1752, %v1701, -inf
        %1760 = vmax.xlane.f32.xlu0 %v1759
        %v1761 = vpop.xlane.xlu0 %1760
        %v1762 = vsel %vm1752, %v1747, -inf
        %1763 = vmax.xlane.f32.xlu0 %v1762
        %v1764 = vpop.xlane.xlu0 %1763
        %v1765 = vsub.f32 %v1609, %v1755
        %v1766 = vsub.f32 %v1655, %v1758
        %v1767 = vsub.f32 %v1701, %v1761
        %v1768 = vsub.f32 %v1747, %v1764
        %v1769 = vmul.f32 %v1765, 1.442695
        %v1770 = vpow.pop %v1769
        %v1771 = vmul.f32 %v1766, 1.442695
        %v1772 = vpow.pop %v1771
        %v1773 = vmul.f32 %v1767, 1.442695
        %v1774 = vpow.pop %v1773
        %v1775 = vmul.f32 %v1768, 1.442695
        %v1776 = vpow.pop %v1775
        %v1777 = vsel %vm1752, %v1770, 0.0
        %1778 = vadd.xlane.f32.xlu0 %v1777
        %v1779 = vpop.xlane.xlu0 %1778
        %v1780 = vsel %vm1752, %v1772, 0.0
        %1781 = vadd.xlane.f32.xlu0 %v1780
        %v1782 = vpop.xlane.xlu0 %1781
        %v1783 = vsel %vm1752, %v1774, 0.0
        %1784 = vadd.xlane.f32.xlu0 %v1783
        %v1785 = vpop.xlane.xlu0 %1784
        %v1786 = vsel %vm1752, %v1776, 0.0
        %1787 = vadd.xlane.f32.xlu0 %v1786
        %v1788 = vpop.xlane.xlu0 %1787
        %v1789 = vpack.c.bf16 %v1770, %v1770
        %v1790 = vpack.c.bf16 %v1772, %v1772
        %v1791 = vpack.c.bf16 %v1774, %v1774
        %v1792 = vpack.c.bf16 %v1776, %v1776
        %v1794 = vsel %vm1752, %v1789, 0
        %vm1796 = vcmask 1043456
        %v1798 = vsel %vm1796, %v1563, 0
        %1800 = vmatprep.subr.bf16.mxu0 0
        %1801 = vmatpush1.bf16.msra.mxu0 0
        %1802 = vmatprep.subr.bf16.mxu0 0
        %1803 = vmatpush1.bf16.msra.mxu0 0
        %1804 = vmatprep.subr.bf16.mxu0 0
        %1805 = vmatpush1.bf16.msra.mxu0 0
        %1806 = vmatprep.subr.bf16.mxu0 0
        %1807 = vmatpush1.bf16.msra.mxu0 0
        %1808 = vmatprep.subr.bf16.mxu0 0
        %1809 = vmatpush1.bf16.msra.mxu0 0
        %1810 = vmatprep.subr.bf16.mxu0 0
        %1811 = vmatpush1.bf16.msra.mxu0 0
        %1812 = vmatprep.subr.bf16.mxu0 0
        %1813 = vmatpush1.bf16.msra.mxu0 0
        %1814 = vmatprep.subr.bf16.mxu0 0
        %1815 = vmatpush1.bf16.msra.mxu0 %v1798
        %1816 = vmatprep.subr.bf16.mxu0 0
        %1817 = vmatpush2.bf16.msra.mxu0 0
        %1818 = vmatprep.subr.bf16.mxu0 0
        %1819 = vmatpush2.bf16.msra.mxu0 0
        %1820 = vmatprep.subr.bf16.mxu0 0
        %1821 = vmatpush2.bf16.msra.mxu0 0
        %1822 = vmatprep.subr.bf16.mxu0 0
        %1823 = vmatpush2.bf16.msra.mxu0 0
        %1824 = vmatprep.subr.bf16.mxu0 0
        %1825 = vmatpush2.bf16.msra.mxu0 0
        %1826 = vmatprep.subr.bf16.mxu0 0
        %1827 = vmatpush2.bf16.msra.mxu0 0
        %1828 = vmatprep.subr.bf16.mxu0 0
        %1829 = vmatpush2.bf16.msra.mxu0 0
        %1830 = vmatprep.subr.bf16.mxu0 0
        %1831 = vmatpush2.bf16.msra.mxu0 0
        %1832 = vmatprep.mubr.bf16.mxu0 0
        %1833 = vmatmul.mubr.bf16.gmra.mxu0 %v1794
        %v1834 = vpop.f32.mrf.mxu0
        %v1835 = vadd.f32 0.0, %v1834
        %v1836 = vpop.f32.mrf.mxu0
        %v1837 = vpop.f32.mrf.mxu0
        %v1838 = vpop.f32.mrf.mxu0
        %1839 = vdwg.mxu0
        %v1841 = vsel %vm1752, %v1790, 0
        %v1844 = vsel %vm1796, %v1564, 0
        %1846 = vmatprep.subr.bf16.mxu0 0
        %1847 = vmatpush1.bf16.msra.mxu0 0
        %1848 = vmatprep.subr.bf16.mxu0 0
        %1849 = vmatpush1.bf16.msra.mxu0 0
        %1850 = vmatprep.subr.bf16.mxu0 0
        %1851 = vmatpush1.bf16.msra.mxu0 0
        %1852 = vmatprep.subr.bf16.mxu0 0
        %1853 = vmatpush1.bf16.msra.mxu0 0
        %1854 = vmatprep.subr.bf16.mxu0 0
        %1855 = vmatpush1.bf16.msra.mxu0 0
        %1856 = vmatprep.subr.bf16.mxu0 0
        %1857 = vmatpush1.bf16.msra.mxu0 0
        %1858 = vmatprep.subr.bf16.mxu0 0
        %1859 = vmatpush1.bf16.msra.mxu0 0
        %1860 = vmatprep.subr.bf16.mxu0 0
        %1861 = vmatpush1.bf16.msra.mxu0 %v1844
        %1862 = vmatprep.subr.bf16.mxu0 0
        %1863 = vmatpush2.bf16.msra.mxu0 0
        %1864 = vmatprep.subr.bf16.mxu0 0
        %1865 = vmatpush2.bf16.msra.mxu0 0
        %1866 = vmatprep.subr.bf16.mxu0 0
        %1867 = vmatpush2.bf16.msra.mxu0 0
        %1868 = vmatprep.subr.bf16.mxu0 0
        %1869 = vmatpush2.bf16.msra.mxu0 0
        %1870 = vmatprep.subr.bf16.mxu0 0
        %1871 = vmatpush2.bf16.msra.mxu0 0
        %1872 = vmatprep.subr.bf16.mxu0 0
        %1873 = vmatpush2.bf16.msra.mxu0 0
        %1874 = vmatprep.subr.bf16.mxu0 0
        %1875 = vmatpush2.bf16.msra.mxu0 0
        %1876 = vmatprep.subr.bf16.mxu0 0
        %1877 = vmatpush2.bf16.msra.mxu0 0
        %1878 = vmatprep.mubr.bf16.mxu0 0
        %1879 = vmatmul.mubr.bf16.gmra.mxu0 %v1841
        %v1880 = vpop.f32.mrf.mxu0
        %v1881 = vadd.f32 0.0, %v1880
        %v1882 = vpop.f32.mrf.mxu0
        %v1883 = vpop.f32.mrf.mxu0
        %v1884 = vpop.f32.mrf.mxu0
        %1885 = vdwg.mxu0
        %v1887 = vsel %vm1752, %v1791, 0
        %v1890 = vsel %vm1796, %v1565, 0
        %1892 = vmatprep.subr.bf16.mxu0 0
        %1893 = vmatpush1.bf16.msra.mxu0 0
        %1894 = vmatprep.subr.bf16.mxu0 0
        %1895 = vmatpush1.bf16.msra.mxu0 0
        %1896 = vmatprep.subr.bf16.mxu0 0
        %1897 = vmatpush1.bf16.msra.mxu0 0
        %1898 = vmatprep.subr.bf16.mxu0 0
        %1899 = vmatpush1.bf16.msra.mxu0 0
        %1900 = vmatprep.subr.bf16.mxu0 0
        %1901 = vmatpush1.bf16.msra.mxu0 0
        %1902 = vmatprep.subr.bf16.mxu0 0
        %1903 = vmatpush1.bf16.msra.mxu0 0
        %1904 = vmatprep.subr.bf16.mxu0 0
        %1905 = vmatpush1.bf16.msra.mxu0 0
        %1906 = vmatprep.subr.bf16.mxu0 0
        %1907 = vmatpush1.bf16.msra.mxu0 %v1890
        %1908 = vmatprep.subr.bf16.mxu0 0
        %1909 = vmatpush2.bf16.msra.mxu0 0
        %1910 = vmatprep.subr.bf16.mxu0 0
        %1911 = vmatpush2.bf16.msra.mxu0 0
        %1912 = vmatprep.subr.bf16.mxu0 0
        %1913 = vmatpush2.bf16.msra.mxu0 0
        %1914 = vmatprep.subr.bf16.mxu0 0
        %1915 = vmatpush2.bf16.msra.mxu0 0
        %1916 = vmatprep.subr.bf16.mxu0 0
        %1917 = vmatpush2.bf16.msra.mxu0 0
        %1918 = vmatprep.subr.bf16.mxu0 0
        %1919 = vmatpush2.bf16.msra.mxu0 0
        %1920 = vmatprep.subr.bf16.mxu0 0
        %1921 = vmatpush2.bf16.msra.mxu0 0
        %1922 = vmatprep.subr.bf16.mxu0 0
        %1923 = vmatpush2.bf16.msra.mxu0 0
        %1924 = vmatprep.mubr.bf16.mxu0 0
        %1925 = vmatmul.mubr.bf16.gmra.mxu0 %v1887
        %v1926 = vpop.f32.mrf.mxu0
        %v1927 = vadd.f32 0.0, %v1926
        %v1928 = vpop.f32.mrf.mxu0
        %v1929 = vpop.f32.mrf.mxu0
        %v1930 = vpop.f32.mrf.mxu0
        %1931 = vdwg.mxu0
        %v1933 = vsel %vm1752, %v1792, 0
        %v1936 = vsel %vm1796, %v1566, 0
        %1938 = vmatprep.subr.bf16.mxu0 0
        %1939 = vmatpush1.bf16.msra.mxu0 0
        %1940 = vmatprep.subr.bf16.mxu0 0
        %1941 = vmatpush1.bf16.msra.mxu0 0
        %1942 = vmatprep.subr.bf16.mxu0 0
        %1943 = vmatpush1.bf16.msra.mxu0 0
        %1944 = vmatprep.subr.bf16.mxu0 0
        %1945 = vmatpush1.bf16.msra.mxu0 0
        %1946 = vmatprep.subr.bf16.mxu0 0
        %1947 = vmatpush1.bf16.msra.mxu0 0
        %1948 = vmatprep.subr.bf16.mxu0 0
        %1949 = vmatpush1.bf16.msra.mxu0 0
        %1950 = vmatprep.subr.bf16.mxu0 0
        %1951 = vmatpush1.bf16.msra.mxu0 0
        %1952 = vmatprep.subr.bf16.mxu0 0
        %1953 = vmatpush1.bf16.msra.mxu0 %v1936
        %1954 = vmatprep.subr.bf16.mxu0 0
        %1955 = vmatpush2.bf16.msra.mxu0 0
        %1956 = vmatprep.subr.bf16.mxu0 0
        %1957 = vmatpush2.bf16.msra.mxu0 0
        %1958 = vmatprep.subr.bf16.mxu0 0
        %1959 = vmatpush2.bf16.msra.mxu0 0
        %1960 = vmatprep.subr.bf16.mxu0 0
        %1961 = vmatpush2.bf16.msra.mxu0 0
        %1962 = vmatprep.subr.bf16.mxu0 0
        %1963 = vmatpush2.bf16.msra.mxu0 0
        %1964 = vmatprep.subr.bf16.mxu0 0
        %1965 = vmatpush2.bf16.msra.mxu0 0
        %1966 = vmatprep.subr.bf16.mxu0 0
        %1967 = vmatpush2.bf16.msra.mxu0 0
        %1968 = vmatprep.subr.bf16.mxu0 0
        %1969 = vmatpush2.bf16.msra.mxu0 0
        %1970 = vmatprep.mubr.bf16.mxu0 0
        %1971 = vmatmul.mubr.bf16.gmra.mxu0 %v1933
        %v1972 = vpop.f32.mrf.mxu0
        %v1973 = vadd.f32 0.0, %v1972
        %v1974 = vpop.f32.mrf.mxu0
        %v1975 = vpop.f32.mrf.mxu0
        %v1976 = vpop.f32.mrf.mxu0
        %1977 = vdwg.mxu0
        %v1978 = vrcp.pop %v1779
        %v1979 = vrcp.pop %v1782
        %v1980 = vrcp.pop %v1785
        %v1981 = vrcp.pop %v1788
        %v1982 = vmul.f32 %v1835, %v1978
        %v1983 = vmul.f32 %v1881, %v1979
        %v1984 = vmul.f32 %v1927, %v1980
        %v1985 = vmul.f32 %v1973, %v1981
        %v1986 = vcombine.low %v1982, %v1984
        %v1987 = vcombine.high %v1982, %v1984
        %v1989 = vunpack.c.l.s4 1983009808
        %v1990 = vunpack.c.0.s8 %v1989
        %v1991 = vlaneseq
        %v1992 = vshrl.u32 %v1991, 7
        %v1993 = vsub.s32 %v1990, %v1992
        %v1994 = vrot.slane %v1986, %v1993
        %v1996 = vunpack.c.l.s4 1983009808
        %v1997 = vunpack.c.0.s8 %v1996
        %v1998 = vlaneseq
        %v1999 = vshrl.u32 %v1998, 7
        %v2000 = vsub.s32 %v1997, %v1999
        %v2001 = vrot.slane %v1987, %v2000
        %v2002 = vcombine.low %v1983, %v1985
        %v2003 = vcombine.high %v1983, %v1985
        %v2005 = vunpack.c.l.s4 1983009808
        %v2006 = vunpack.c.0.s8 %v2005
        %v2007 = vlaneseq
        %v2008 = vshrl.u32 %v2007, 7
        %v2009 = vsub.s32 %v2006, %v2008
        %v2010 = vrot.slane %v2002, %v2009
        %v2012 = vunpack.c.l.s4 1983009808
        %v2013 = vunpack.c.0.s8 %v2012
        %v2014 = vlaneseq
        %v2015 = vshrl.u32 %v2014, 7
        %v2016 = vsub.s32 %v2013, %v2015
        %v2017 = vrot.slane %v2003, %v2016
        %v2018 = vcombine.low %v1994, %v2010
        %v2019 = vcombine.high %v1994, %v2010
        %v2021 = vunpack.c.l.s4 1934713408
        %v2022 = vunpack.c.0.s8 %v2021
        %v2023 = vlaneseq
        %v2024 = vshrl.u32 %v2023, 7
        %v2025 = vsub.s32 %v2022, %v2024
        %v2026 = vrot.slane %v2018, %v2025
        %v2028 = vunpack.c.l.s4 1934713408
        %v2029 = vunpack.c.0.s8 %v2028
        %v2030 = vlaneseq
        %v2031 = vshrl.u32 %v2030, 7
        %v2032 = vsub.s32 %v2029, %v2031
        %v2033 = vrot.slane %v2019, %v2032
        %v2034 = vcombine.low %v2001, %v2017
        %v2035 = vcombine.high %v2001, %v2017
        %v2037 = vunpack.c.l.s4 1934713408
        %v2038 = vunpack.c.0.s8 %v2037
        %v2039 = vlaneseq
        %v2040 = vshrl.u32 %v2039, 7
        %v2041 = vsub.s32 %v2038, %v2040
        %v2042 = vrot.slane %v2034, %v2041
        %v2044 = vunpack.c.l.s4 1934713408
        %v2045 = vunpack.c.0.s8 %v2044
        %v2046 = vlaneseq
        %v2047 = vshrl.u32 %v2046, 7
        %v2048 = vsub.s32 %v2045, %v2047
        %v2049 = vrot.slane %v2035, %v2048
        %v2050 = vcombine.high %v2026, 0.0
        %v2051 = vcombine.high %v2033, 0.0
        %v2052 = vcombine.high %v2042, 0.0
        %v2053 = vcombine.high %v2049, 0.0
        %v2054 = vcombine.low %v2026, %v2033
        %v2056 = vunpack.c.l.s4 1983009808
        %v2057 = vunpack.c.0.s8 %v2056
        %v2058 = vlaneseq
        %v2059 = vshrl.u32 %v2058, 7
        %v2060 = vsub.s32 %v2057, %v2059
        %v2061 = vrot.slane %v2054, %v2060
        %v2062 = vcombine.low %v2050, %v2051
        %v2064 = vunpack.c.l.s4 1983009808
        %v2065 = vunpack.c.0.s8 %v2064
        %v2066 = vlaneseq
        %v2067 = vshrl.u32 %v2066, 7
        %v2068 = vsub.s32 %v2065, %v2067
        %v2069 = vrot.slane %v2062, %v2068
        %v2070 = vcombine.low %v2042, %v2049
        %v2072 = vunpack.c.l.s4 1983009808
        %v2073 = vunpack.c.0.s8 %v2072
        %v2074 = vlaneseq
        %v2075 = vshrl.u32 %v2074, 7
        %v2076 = vsub.s32 %v2073, %v2075
        %v2077 = vrot.slane %v2070, %v2076
        %v2078 = vcombine.low %v2052, %v2053
        %v2080 = vunpack.c.l.s4 1983009808
        %v2081 = vunpack.c.0.s8 %v2080
        %v2082 = vlaneseq
        %v2083 = vshrl.u32 %v2082, 7
        %v2084 = vsub.s32 %v2081, %v2083
        %v2085 = vrot.slane %v2078, %v2084
        %v2086 = vcombine.low %v2061, %v2069
        %v2087 = vcombine.high %v2061, %v2069
        %v2089 = vunpack.c.l.s4 1934713408
        %v2090 = vunpack.c.0.s8 %v2089
        %v2091 = vlaneseq
        %v2092 = vshrl.u32 %v2091, 7
        %v2093 = vsub.s32 %v2090, %v2092
        %v2094 = vrot.slane %v2086, %v2093
        %v2096 = vunpack.c.l.s4 1934713408
        %v2097 = vunpack.c.0.s8 %v2096
        %v2098 = vlaneseq
        %v2099 = vshrl.u32 %v2098, 7
        %v2100 = vsub.s32 %v2097, %v2099
        %v2101 = vrot.slane %v2087, %v2100
        %v2102 = vcombine.low %v2077, %v2085
        %v2103 = vcombine.high %v2077, %v2085
        %v2105 = vunpack.c.l.s4 1934713408
        %v2106 = vunpack.c.0.s8 %v2105
        %v2107 = vlaneseq
        %v2108 = vshrl.u32 %v2107, 7
        %v2109 = vsub.s32 %v2106, %v2108
        %v2110 = vrot.slane %v2102, %v2109
        %v2112 = vunpack.c.l.s4 1934713408
        %v2113 = vunpack.c.0.s8 %v2112
        %v2114 = vlaneseq
        %v2115 = vshrl.u32 %v2114, 7
        %v2116 = vsub.s32 %v2113, %v2115
        %v2117 = vrot.slane %v2103, %v2116
        %v2118 = vcombine.low %v2094, %v2110
        %v2119 = vcombine.high %v2094, %v2110
        %v2120 = vcombine.low %v2101, %v2117
        %v2121 = vcombine.high %v2101, %v2117
        %2123 = vrot.lane.b32.xlu0 %v2119, 32
        %v2124 = vpop.permute.xlu0 %2123
        %2127 = vrot.lane.b32.xlu0 %v2120, 64
        %v2128 = vpop.permute.xlu0 %2127
        %2131 = vrot.lane.b32.xlu0 %v2121, 96
        %v2132 = vpop.permute.xlu0 %2131
        %v2134 = vsel %vm1567, %v2118, %v2124
        %vm2135 = vcmask 523264
        %v2136 = vsel %vm2135, %v2134, %v2128
        %vm2137 = vcmask 785408
        %v2138 = vsel %vm2137, %v2136, %v2132
        %v2139 = vpack.c.bf16 %v2138, %v2138
        %v2156 = vunpack.c.l.b16 %v833
        %v2157 = vunpack.c.l.b16 %v834
        %v2158 = vunpack.c.l.b16 %v835
        %v2159 = vunpack.c.l.b16 %v836
        %v2160 = vunpack.c.l.b16 %v837
        %v2161 = vunpack.c.l.b16 %v838
        %v2162 = vunpack.c.l.b16 %v839
        %v2163 = vunpack.c.l.b16 %v840
        %v2164 = vunpack.c.l.b16 %v841
        %v2165 = vunpack.c.l.b16 %v842
        %v2166 = vunpack.c.l.b16 %v843
        %v2167 = vunpack.c.l.b16 %v844
        %v2168 = vunpack.c.l.b16 %v845
        %v2169 = vunpack.c.l.b16 %v846
        %v2170 = vunpack.c.l.b16 %v847
        %v2171 = vunpack.c.l.b16 %v848
        %v2172 = vpack.c.b16 %v2157, %v2156
        %v2173 = vpack.c.b16 %v2159, %v2158
        %v2174 = vpack.c.b16 %v2161, %v2160
        %v2175 = vpack.c.b16 %v2163, %v2162
        %v2176 = vpack.c.b16 %v2165, %v2164
        %v2177 = vpack.c.b16 %v2167, %v2166
        %v2178 = vpack.c.b16 %v2169, %v2168
        %v2179 = vpack.c.b16 %v2171, %v2170
        %2188 = vmatprep.subr.bf16.mxu0 0
        %2189 = vmatpush1.bf16.msra.mxu0 %v2179
        %2190 = vmatprep.subr.bf16.mxu0 0
        %2191 = vmatpush1.bf16.msra.mxu0 %v2178
        %2192 = vmatprep.subr.bf16.mxu0 0
        %2193 = vmatpush1.bf16.msra.mxu0 %v2177
        %2194 = vmatprep.subr.bf16.mxu0 0
        %2195 = vmatpush1.bf16.msra.mxu0 %v2176
        %2196 = vmatprep.subr.bf16.mxu0 0
        %2197 = vmatpush1.bf16.msra.mxu0 %v2175
        %2198 = vmatprep.subr.bf16.mxu0 0
        %2199 = vmatpush1.bf16.msra.mxu0 %v2174
        %2200 = vmatprep.subr.bf16.mxu0 0
        %2201 = vmatpush1.bf16.msra.mxu0 %v2173
        %2202 = vmatprep.subr.bf16.mxu0 0
        %2203 = vmatpush1.bf16.msra.mxu0 %v2172
        %2204 = vmatprep.subr.bf16.mxu0 0
        %2205 = vmatpush2.bf16.msra.mxu0 0
        %2206 = vmatprep.subr.bf16.mxu0 0
        %2207 = vmatpush2.bf16.msra.mxu0 0
        %2208 = vmatprep.subr.bf16.mxu0 0
        %2209 = vmatpush2.bf16.msra.mxu0 0
        %2210 = vmatprep.subr.bf16.mxu0 0
        %2211 = vmatpush2.bf16.msra.mxu0 0
        %2212 = vmatprep.subr.bf16.mxu0 0
        %2213 = vmatpush2.bf16.msra.mxu0 0
        %2214 = vmatprep.subr.bf16.mxu0 0
        %2215 = vmatpush2.bf16.msra.mxu0 0
        %2216 = vmatprep.subr.bf16.mxu0 0
        %2217 = vmatpush2.bf16.msra.mxu0 0
        %2218 = vmatprep.subr.bf16.mxu0 0
        %2219 = vmatpush2.bf16.msra.mxu0 0
        %2220 = vmatprep.mubr.bf16.mxu0 0
        %2221 = vmatmul.mubr.bf16.gmra.mxu0 %v2139
        %v2222 = vpop.f32.mrf.mxu0
        %v2223 = vadd.f32 %v778, %v2222
        %v2224 = vpop.f32.mrf.mxu0
        %v2225 = vpop.f32.mrf.mxu0
        %v2226 = vpop.f32.mrf.mxu0
        %2227 = vdwg.mxu0
        %2228 = vadd.xlane.f32.xlu0 %v2223
        %v2229 = vpop.xlane.xlu0 %2228
        %v2230 = vrcp.pop 128.0
        %v2231 = vmul.f32 %v2229, %v2230
        %v2232 = vsub.f32 %v2223, %v2231
        %v2233 = vmul.f32 %v2232, %v2232
        %2234 = vadd.xlane.f32.xlu0 %v2233
        %v2235 = vpop.xlane.xlu0 %2234
        %v2236 = vmul.f32 %v2235, %v2230
        %v2237 = vadd.f32 %v2236, 1e-05
        %v2238 = vrsqrt.pop %v2237
        %v2239 = vmul.f32 %v2232, %v2238
        %v2241 = vlaneseq
        %v2242 = vshrl.u32 %v2241, 7
        %v2243 = vsub.s32 0, %v2242
        %v2244 = vrot.slane %v849, %v2243
        %v2246 = vmul.f32 %v2239, %v2244
        %v2248 = vlaneseq
        %v2249 = vshrl.u32 %v2248, 7
        %v2250 = vsub.s32 0, %v2249
        %v2251 = vrot.slane %v850, %v2250
        %v2253 = vadd.f32 %v2246, %v2251
        %v2254 = vld [vmem:[%s11] sm:$0xf]
        %v2255 = vld [vmem:[%s11 + $0x4] sm:$0xf]
        %v2256 = vld [vmem:[%s11 + $0x8] sm:$0xf]
        %v2257 = vld [vmem:[%s11 + $0xc] sm:$0xf]
        %v2258 = vld [vmem:[%s11 + $0x10] sm:$0xf]
        %v2259 = vld [vmem:[%s11 + $0x14] sm:$0xf]
        %v2260 = vld [vmem:[%s11 + $0x18] sm:$0xf]
        %v2261 = vld [vmem:[%s11 + $0x1c] sm:$0xf]
        %v2262 = vld [vmem:[%s11 + $0x20] sm:$0xf]
        %v2263 = vld [vmem:[%s11 + $0x24] sm:$0xf]
        %v2264 = vld [vmem:[%s11 + $0x28] sm:$0xf]
        %v2265 = vld [vmem:[%s11 + $0x2c] sm:$0xf]
        %v2266 = vld [vmem:[%s11 + $0x30] sm:$0xf]
        %v2267 = vld [vmem:[%s11 + $0x34] sm:$0xf]
        %v2268 = vld [vmem:[%s11 + $0x38] sm:$0xf]
        %v2269 = vld [vmem:[%s11 + $0x3c] sm:$0xf]
        %v2270 = vld [vmem:[%s12] sm:$0xf]
        %v2271 = vld [vmem:[%s12 + $0x4] sm:$0xf]
        %v2272 = vld [vmem:[%s12 + $0x8] sm:$0xf]
        %v2273 = vld [vmem:[%s12 + $0xc] sm:$0xf]
        %v2274 = vld [vmem:[%s12 + $0x10] sm:$0xf]
        %v2275 = vld [vmem:[%s12 + $0x14] sm:$0xf]
        %v2276 = vld [vmem:[%s12 + $0x18] sm:$0xf]
        %v2277 = vld [vmem:[%s12 + $0x1c] sm:$0xf]
        %v2278 = vld [vmem:[%s12 + $0x20] sm:$0xf]
        %v2279 = vld [vmem:[%s12 + $0x24] sm:$0xf]
        %v2280 = vld [vmem:[%s12 + $0x28] sm:$0xf]
        %v2281 = vld [vmem:[%s12 + $0x2c] sm:$0xf]
        %v2282 = vld [vmem:[%s12 + $0x30] sm:$0xf]
        %v2283 = vld [vmem:[%s12 + $0x34] sm:$0xf]
        %v2284 = vld [vmem:[%s12 + $0x38] sm:$0xf]
        %v2285 = vld [vmem:[%s12 + $0x3c] sm:$0xf]
        %v2286 = vld [vmem:[%s13] sm:$0xf]
        %v2287 = vld [vmem:[%s13 + $0x4] sm:$0xf]
        %v2288 = vld [vmem:[%s13 + $0x8] sm:$0xf]
        %v2289 = vld [vmem:[%s13 + $0xc] sm:$0xf]
        %v2290 = vld [vmem:[%s13 + $0x10] sm:$0xf]
        %v2291 = vld [vmem:[%s13 + $0x14] sm:$0xf]
        %v2292 = vld [vmem:[%s13 + $0x18] sm:$0xf]
        %v2293 = vld [vmem:[%s13 + $0x1c] sm:$0xf]
        %v2294 = vld [vmem:[%s13 + $0x20] sm:$0xf]
        %v2295 = vld [vmem:[%s13 + $0x24] sm:$0xf]
        %v2296 = vld [vmem:[%s13 + $0x28] sm:$0xf]
        %v2297 = vld [vmem:[%s13 + $0x2c] sm:$0xf]
        %v2298 = vld [vmem:[%s13 + $0x30] sm:$0xf]
        %v2299 = vld [vmem:[%s13 + $0x34] sm:$0xf]
        %v2300 = vld [vmem:[%s13 + $0x38] sm:$0xf]
        %v2301 = vld [vmem:[%s13 + $0x3c] sm:$0xf]
        %v2302 = vld [vmem:[%s14] sm:$0xf]
        %v2303 = vld [vmem:[%s14 + $0x4] sm:$0xf]
        %v2304 = vld [vmem:[%s14 + $0x8] sm:$0xf]
        %v2305 = vld [vmem:[%s14 + $0xc] sm:$0xf]
        %v2306 = vld [vmem:[%s14 + $0x10] sm:$0xf]
        %v2307 = vld [vmem:[%s14 + $0x14] sm:$0xf]
        %v2308 = vld [vmem:[%s14 + $0x18] sm:$0xf]
        %v2309 = vld [vmem:[%s14 + $0x1c] sm:$0xf]
        %v2310 = vld [vmem:[%s14 + $0x20] sm:$0xf]
        %v2311 = vld [vmem:[%s14 + $0x24] sm:$0xf]
        %v2312 = vld [vmem:[%s14 + $0x28] sm:$0xf]
        %v2313 = vld [vmem:[%s14 + $0x2c] sm:$0xf]
        %v2314 = vld [vmem:[%s14 + $0x30] sm:$0xf]
        %v2315 = vld [vmem:[%s14 + $0x34] sm:$0xf]
        %v2316 = vld [vmem:[%s14 + $0x38] sm:$0xf]
        %v2317 = vld [vmem:[%s14 + $0x3c] sm:$0xf]
        %v2318 = vld [vmem:[%s15] sm:$0x1]
        %v2319 = vld [vmem:[%s16] sm:$0x1]
        %v2320 = vpack.c.bf16 %v2253, %v2253
        %v2321 = vpack.c.bf16 %v780, %v779
        %v2322 = vpack.c.bf16 %v782, %v781
        %v2339 = vunpack.c.l.b16 %v2254
        %v2340 = vunpack.c.l.b16 %v2255
        %v2341 = vunpack.c.l.b16 %v2256
        %v2342 = vunpack.c.l.b16 %v2257
        %v2343 = vunpack.c.l.b16 %v2258
        %v2344 = vunpack.c.l.b16 %v2259
        %v2345 = vunpack.c.l.b16 %v2260
        %v2346 = vunpack.c.l.b16 %v2261
        %v2347 = vunpack.c.l.b16 %v2262
        %v2348 = vunpack.c.l.b16 %v2263
        %v2349 = vunpack.c.l.b16 %v2264
        %v2350 = vunpack.c.l.b16 %v2265
        %v2351 = vunpack.c.l.b16 %v2266
        %v2352 = vunpack.c.l.b16 %v2267
        %v2353 = vunpack.c.l.b16 %v2268
        %v2354 = vunpack.c.l.b16 %v2269
        %v2355 = vpack.c.b16 %v2340, %v2339
        %v2356 = vpack.c.b16 %v2342, %v2341
        %v2357 = vpack.c.b16 %v2344, %v2343
        %v2358 = vpack.c.b16 %v2346, %v2345
        %v2359 = vpack.c.b16 %v2348, %v2347
        %v2360 = vpack.c.b16 %v2350, %v2349
        %v2361 = vpack.c.b16 %v2352, %v2351
        %v2362 = vpack.c.b16 %v2354, %v2353
        %2371 = vmatprep.subr.bf16.mxu0 0
        %2372 = vmatpush1.bf16.msra.mxu0 %v2362
        %2373 = vmatprep.subr.bf16.mxu0 0
        %2374 = vmatpush1.bf16.msra.mxu0 %v2361
        %2375 = vmatprep.subr.bf16.mxu0 0
        %2376 = vmatpush1.bf16.msra.mxu0 %v2360
        %2377 = vmatprep.subr.bf16.mxu0 0
        %2378 = vmatpush1.bf16.msra.mxu0 %v2359
        %2379 = vmatprep.subr.bf16.mxu0 0
        %2380 = vmatpush1.bf16.msra.mxu0 %v2358
        %2381 = vmatprep.subr.bf16.mxu0 0
        %2382 = vmatpush1.bf16.msra.mxu0 %v2357
        %2383 = vmatprep.subr.bf16.mxu0 0
        %2384 = vmatpush1.bf16.msra.mxu0 %v2356
        %2385 = vmatprep.subr.bf16.mxu0 0
        %2386 = vmatpush1.bf16.msra.mxu0 %v2355
        %2387 = vmatprep.subr.bf16.mxu0 0
        %2388 = vmatpush2.bf16.msra.mxu0 0
        %2389 = vmatprep.subr.bf16.mxu0 0
        %2390 = vmatpush2.bf16.msra.mxu0 0
        %2391 = vmatprep.subr.bf16.mxu0 0
        %2392 = vmatpush2.bf16.msra.mxu0 0
        %2393 = vmatprep.subr.bf16.mxu0 0
        %2394 = vmatpush2.bf16.msra.mxu0 0
        %2395 = vmatprep.subr.bf16.mxu0 0
        %2396 = vmatpush2.bf16.msra.mxu0 0
        %2397 = vmatprep.subr.bf16.mxu0 0
        %2398 = vmatpush2.bf16.msra.mxu0 0
        %2399 = vmatprep.subr.bf16.mxu0 0
        %2400 = vmatpush2.bf16.msra.mxu0 0
        %2401 = vmatprep.subr.bf16.mxu0 0
        %2402 = vmatpush2.bf16.msra.mxu0 0
        %2403 = vmatprep.mubr.bf16.mxu0 0
        %2404 = vmatmul.mubr.bf16.gmra.mxu0 %v2320
        %v2405 = vpop.f32.mrf.mxu0
        %v2406 = vadd.f32 0.0, %v2405
        %v2407 = vpop.f32.mrf.mxu0
        %v2408 = vpop.f32.mrf.mxu0
        %v2409 = vpop.f32.mrf.mxu0
        %2410 = vdwg.mxu0
        %v2411 = vmul.f32 %v2406, 0.088388346
        %v2428 = vunpack.c.l.b16 %v2270
        %v2429 = vunpack.c.l.b16 %v2271
        %v2430 = vunpack.c.l.b16 %v2272
        %v2431 = vunpack.c.l.b16 %v2273
        %v2432 = vunpack.c.l.b16 %v2274
        %v2433 = vunpack.c.l.b16 %v2275
        %v2434 = vunpack.c.l.b16 %v2276
        %v2435 = vunpack.c.l.b16 %v2277
        %v2436 = vunpack.c.l.b16 %v2278
        %v2437 = vunpack.c.l.b16 %v2279
        %v2438 = vunpack.c.l.b16 %v2280
        %v2439 = vunpack.c.l.b16 %v2281
        %v2440 = vunpack.c.l.b16 %v2282
        %v2441 = vunpack.c.l.b16 %v2283
        %v2442 = vunpack.c.l.b16 %v2284
        %v2443 = vunpack.c.l.b16 %v2285
        %v2444 = vpack.c.b16 %v2429, %v2428
        %v2445 = vpack.c.b16 %v2431, %v2430
        %v2446 = vpack.c.b16 %v2433, %v2432
        %v2447 = vpack.c.b16 %v2435, %v2434
        %v2448 = vpack.c.b16 %v2437, %v2436
        %v2449 = vpack.c.b16 %v2439, %v2438
        %v2450 = vpack.c.b16 %v2441, %v2440
        %v2451 = vpack.c.b16 %v2443, %v2442
        %2460 = vmatprep.subr.bf16.mxu0 0
        %2461 = vmatpush1.bf16.msra.mxu0 %v2451
        %2462 = vmatprep.subr.bf16.mxu0 0
        %2463 = vmatpush1.bf16.msra.mxu0 %v2450
        %2464 = vmatprep.subr.bf16.mxu0 0
        %2465 = vmatpush1.bf16.msra.mxu0 %v2449
        %2466 = vmatprep.subr.bf16.mxu0 0
        %2467 = vmatpush1.bf16.msra.mxu0 %v2448
        %2468 = vmatprep.subr.bf16.mxu0 0
        %2469 = vmatpush1.bf16.msra.mxu0 %v2447
        %2470 = vmatprep.subr.bf16.mxu0 0
        %2471 = vmatpush1.bf16.msra.mxu0 %v2446
        %2472 = vmatprep.subr.bf16.mxu0 0
        %2473 = vmatpush1.bf16.msra.mxu0 %v2445
        %2474 = vmatprep.subr.bf16.mxu0 0
        %2475 = vmatpush1.bf16.msra.mxu0 %v2444
        %2476 = vmatprep.subr.bf16.mxu0 0
        %2477 = vmatpush2.bf16.msra.mxu0 0
        %2478 = vmatprep.subr.bf16.mxu0 0
        %2479 = vmatpush2.bf16.msra.mxu0 0
        %2480 = vmatprep.subr.bf16.mxu0 0
        %2481 = vmatpush2.bf16.msra.mxu0 0
        %2482 = vmatprep.subr.bf16.mxu0 0
        %2483 = vmatpush2.bf16.msra.mxu0 0
        %2484 = vmatprep.subr.bf16.mxu0 0
        %2485 = vmatpush2.bf16.msra.mxu0 0
        %2486 = vmatprep.subr.bf16.mxu0 0
        %2487 = vmatpush2.bf16.msra.mxu0 0
        %2488 = vmatprep.subr.bf16.mxu0 0
        %2489 = vmatpush2.bf16.msra.mxu0 0
        %2490 = vmatprep.subr.bf16.mxu0 0
        %2491 = vmatpush2.bf16.msra.mxu0 0
        %2492 = vmatprep.mubr.bf16.mxu0 0
        %2493 = vmatmul.mubr.bf16.gmra.mxu0 %v2321
        %v2494 = vpop.f32.mrf.mxu0
        %v2495 = vadd.f32 0.0, %v2494
        %v2496 = vpop.f32.mrf.mxu0
        %v2497 = vpop.f32.mrf.mxu0
        %v2498 = vadd.f32 0.0, %v2497
        %v2499 = vpop.f32.mrf.mxu0
        %2500 = vdwg.mxu0
        %v2517 = vunpack.c.l.b16 %v2286
        %v2518 = vunpack.c.l.b16 %v2287
        %v2519 = vunpack.c.l.b16 %v2288
        %v2520 = vunpack.c.l.b16 %v2289
        %v2521 = vunpack.c.l.b16 %v2290
        %v2522 = vunpack.c.l.b16 %v2291
        %v2523 = vunpack.c.l.b16 %v2292
        %v2524 = vunpack.c.l.b16 %v2293
        %v2525 = vunpack.c.l.b16 %v2294
        %v2526 = vunpack.c.l.b16 %v2295
        %v2527 = vunpack.c.l.b16 %v2296
        %v2528 = vunpack.c.l.b16 %v2297
        %v2529 = vunpack.c.l.b16 %v2298
        %v2530 = vunpack.c.l.b16 %v2299
        %v2531 = vunpack.c.l.b16 %v2300
        %v2532 = vunpack.c.l.b16 %v2301
        %v2533 = vpack.c.b16 %v2518, %v2517
        %v2534 = vpack.c.b16 %v2520, %v2519
        %v2535 = vpack.c.b16 %v2522, %v2521
        %v2536 = vpack.c.b16 %v2524, %v2523
        %v2537 = vpack.c.b16 %v2526, %v2525
        %v2538 = vpack.c.b16 %v2528, %v2527
        %v2539 = vpack.c.b16 %v2530, %v2529
        %v2540 = vpack.c.b16 %v2532, %v2531
        %2549 = vmatprep.subr.bf16.mxu0 0
        %2550 = vmatpush1.bf16.msra.mxu0 %v2540
        %2551 = vmatprep.subr.bf16.mxu0 0
        %2552 = vmatpush1.bf16.msra.mxu0 %v2539
        %2553 = vmatprep.subr.bf16.mxu0 0
        %2554 = vmatpush1.bf16.msra.mxu0 %v2538
        %2555 = vmatprep.subr.bf16.mxu0 0
        %2556 = vmatpush1.bf16.msra.mxu0 %v2537
        %2557 = vmatprep.subr.bf16.mxu0 0
        %2558 = vmatpush1.bf16.msra.mxu0 %v2536
        %2559 = vmatprep.subr.bf16.mxu0 0
        %2560 = vmatpush1.bf16.msra.mxu0 %v2535
        %2561 = vmatprep.subr.bf16.mxu0 0
        %2562 = vmatpush1.bf16.msra.mxu0 %v2534
        %2563 = vmatprep.subr.bf16.mxu0 0
        %2564 = vmatpush1.bf16.msra.mxu0 %v2533
        %2565 = vmatprep.subr.bf16.mxu0 0
        %2566 = vmatpush2.bf16.msra.mxu0 0
        %2567 = vmatprep.subr.bf16.mxu0 0
        %2568 = vmatpush2.bf16.msra.mxu0 0
        %2569 = vmatprep.subr.bf16.mxu0 0
        %2570 = vmatpush2.bf16.msra.mxu0 0
        %2571 = vmatprep.subr.bf16.mxu0 0
        %2572 = vmatpush2.bf16.msra.mxu0 0
        %2573 = vmatprep.subr.bf16.mxu0 0
        %2574 = vmatpush2.bf16.msra.mxu0 0
        %2575 = vmatprep.subr.bf16.mxu0 0
        %2576 = vmatpush2.bf16.msra.mxu0 0
        %2577 = vmatprep.subr.bf16.mxu0 0
        %2578 = vmatpush2.bf16.msra.mxu0 0
        %2579 = vmatprep.subr.bf16.mxu0 0
        %2580 = vmatpush2.bf16.msra.mxu0 0
        %2581 = vmatprep.mubr.bf16.mxu0 0
        %2582 = vmatmul.mubr.bf16.gmra.mxu0 %v2322
        %v2583 = vpop.f32.mrf.mxu0
        %v2584 = vadd.f32 0.0, %v2583
        %v2585 = vpop.f32.mrf.mxu0
        %v2586 = vpop.f32.mrf.mxu0
        %v2587 = vadd.f32 0.0, %v2586
        %v2588 = vpop.f32.mrf.mxu0
        %2589 = vdwg.mxu0
        %2591 = vrot.lane.b32.xlu0 %v2411, 96
        %v2592 = vpop.permute.xlu0 %2591
        %2594 = vrot.lane.b32.xlu0 %v2411, 64
        %v2595 = vpop.permute.xlu0 %2594
        %2597 = vrot.lane.b32.xlu0 %v2411, 32
        %v2598 = vpop.permute.xlu0 %2597
        %v2600 = vcombine.low %v2411, %v2595
        %v2601 = vcombine.high %v2411, %v2595
        %v2603 = vunpack.c.l.s4 1983009808
        %v2604 = vunpack.c.0.s8 %v2603
        %v2605 = vlaneseq
        %v2606 = vshrl.u32 %v2605, 7
        %v2607 = vsub.s32 %v2604, %v2606
        %v2608 = vrot.slane %v2600, %v2607
        %v2610 = vunpack.c.l.s4 1983009808
        %v2611 = vunpack.c.0.s8 %v2610
        %v2612 = vlaneseq
        %v2613 = vshrl.u32 %v2612, 7
        %v2614 = vsub.s32 %v2611, %v2613
        %v2615 = vrot.slane %v2601, %v2614
        %v2616 = vcombine.low %v2592, %v2598
        %v2617 = vcombine.high %v2592, %v2598
        %v2619 = vunpack.c.l.s4 1983009808
        %v2620 = vunpack.c.0.s8 %v2619
        %v2621 = vlaneseq
        %v2622 = vshrl.u32 %v2621, 7
        %v2623 = vsub.s32 %v2620, %v2622
        %v2624 = vrot.slane %v2616, %v2623
        %v2626 = vunpack.c.l.s4 1983009808
        %v2627 = vunpack.c.0.s8 %v2626
        %v2628 = vlaneseq
        %v2629 = vshrl.u32 %v2628, 7
        %v2630 = vsub.s32 %v2627, %v2629
        %v2631 = vrot.slane %v2617, %v2630
        %v2632 = vcombine.low %v2608, %v2624
        %v2633 = vcombine.high %v2608, %v2624
        %v2635 = vunpack.c.l.s4 1934713408
        %v2636 = vunpack.c.0.s8 %v2635
        %v2637 = vlaneseq
        %v2638 = vshrl.u32 %v2637, 7
        %v2639 = vsub.s32 %v2636, %v2638
        %v2640 = vrot.slane %v2632, %v2639
        %v2642 = vunpack.c.l.s4 1934713408
        %v2643 = vunpack.c.0.s8 %v2642
        %v2644 = vlaneseq
        %v2645 = vshrl.u32 %v2644, 7
        %v2646 = vsub.s32 %v2643, %v2645
        %v2647 = vrot.slane %v2633, %v2646
        %v2648 = vcombine.low %v2615, %v2631
        %v2649 = vcombine.high %v2615, %v2631
        %v2651 = vunpack.c.l.s4 1934713408
        %v2652 = vunpack.c.0.s8 %v2651
        %v2653 = vlaneseq
        %v2654 = vshrl.u32 %v2653, 7
        %v2655 = vsub.s32 %v2652, %v2654
        %v2656 = vrot.slane %v2648, %v2655
        %v2658 = vunpack.c.l.s4 1934713408
        %v2659 = vunpack.c.0.s8 %v2658
        %v2660 = vlaneseq
        %v2661 = vshrl.u32 %v2660, 7
        %v2662 = vsub.s32 %v2659, %v2661
        %v2663 = vrot.slane %v2649, %v2662
        %v2664 = vcombine.high %v2640, 0.0
        %v2665 = vcombine.high %v2647, 0.0
        %v2666 = vcombine.high %v2656, 0.0
        %v2667 = vcombine.high %v2663, 0.0
        %v2668 = vcombine.low %v2640, %v2647
        %v2670 = vunpack.c.l.s4 1983009808
        %v2671 = vunpack.c.0.s8 %v2670
        %v2672 = vlaneseq
        %v2673 = vshrl.u32 %v2672, 7
        %v2674 = vsub.s32 %v2671, %v2673
        %v2675 = vrot.slane %v2668, %v2674
        %v2676 = vcombine.low %v2664, %v2665
        %v2678 = vunpack.c.l.s4 1983009808
        %v2679 = vunpack.c.0.s8 %v2678
        %v2680 = vlaneseq
        %v2681 = vshrl.u32 %v2680, 7
        %v2682 = vsub.s32 %v2679, %v2681
        %v2683 = vrot.slane %v2676, %v2682
        %v2684 = vcombine.low %v2656, %v2663
        %v2686 = vunpack.c.l.s4 1983009808
        %v2687 = vunpack.c.0.s8 %v2686
        %v2688 = vlaneseq
        %v2689 = vshrl.u32 %v2688, 7
        %v2690 = vsub.s32 %v2687, %v2689
        %v2691 = vrot.slane %v2684, %v2690
        %v2692 = vcombine.low %v2666, %v2667
        %v2694 = vunpack.c.l.s4 1983009808
        %v2695 = vunpack.c.0.s8 %v2694
        %v2696 = vlaneseq
        %v2697 = vshrl.u32 %v2696, 7
        %v2698 = vsub.s32 %v2695, %v2697
        %v2699 = vrot.slane %v2692, %v2698
        %v2700 = vcombine.low %v2675, %v2683
        %v2701 = vcombine.high %v2675, %v2683
        %v2703 = vunpack.c.l.s4 1934713408
        %v2704 = vunpack.c.0.s8 %v2703
        %v2705 = vlaneseq
        %v2706 = vshrl.u32 %v2705, 7
        %v2707 = vsub.s32 %v2704, %v2706
        %v2708 = vrot.slane %v2700, %v2707
        %v2710 = vunpack.c.l.s4 1934713408
        %v2711 = vunpack.c.0.s8 %v2710
        %v2712 = vlaneseq
        %v2713 = vshrl.u32 %v2712, 7
        %v2714 = vsub.s32 %v2711, %v2713
        %v2715 = vrot.slane %v2701, %v2714
        %v2716 = vcombine.low %v2691, %v2699
        %v2717 = vcombine.high %v2691, %v2699
        %v2719 = vunpack.c.l.s4 1934713408
        %v2720 = vunpack.c.0.s8 %v2719
        %v2721 = vlaneseq
        %v2722 = vshrl.u32 %v2721, 7
        %v2723 = vsub.s32 %v2720, %v2722
        %v2724 = vrot.slane %v2716, %v2723
        %v2726 = vunpack.c.l.s4 1934713408
        %v2727 = vunpack.c.0.s8 %v2726
        %v2728 = vlaneseq
        %v2729 = vshrl.u32 %v2728, 7
        %v2730 = vsub.s32 %v2727, %v2729
        %v2731 = vrot.slane %v2717, %v2730
        %v2732 = vcombine.low %v2708, %v2724
        %v2733 = vcombine.high %v2708, %v2724
        %v2734 = vcombine.low %v2715, %v2731
        %v2735 = vcombine.high %v2715, %v2731
        %v2736 = vpack.c.bf16 %v2732, %v2732
        %v2737 = vpack.c.bf16 %v2733, %v2733
        %v2738 = vpack.c.bf16 %v2734, %v2734
        %v2739 = vpack.c.bf16 %v2735, %v2735
        %2742 = vrot.lane.b32.xlu0 %v2495, 96
        %v2743 = vpop.permute.xlu0 %2742
        %2744 = vrot.lane.b32.xlu0 %v2498, 96
        %v2745 = vpop.permute.xlu0 %2744
        %2748 = vrot.lane.b32.xlu0 %v2495, 64
        %v2749 = vpop.permute.xlu0 %2748
        %2750 = vrot.lane.b32.xlu0 %v2498, 64
        %v2751 = vpop.permute.xlu0 %2750
        %2754 = vrot.lane.b32.xlu0 %v2495, 32
        %v2755 = vpop.permute.xlu0 %2754
        %2756 = vrot.lane.b32.xlu0 %v2498, 32
        %v2757 = vpop.permute.xlu0 %2756
        %v2760 = vcombine.low %v2495, %v2749
        %v2761 = vcombine.high %v2495, %v2749
        %v2763 = vunpack.c.l.s4 1983009808
        %v2764 = vunpack.c.0.s8 %v2763
        %v2765 = vlaneseq
        %v2766 = vshrl.u32 %v2765, 7
        %v2767 = vsub.s32 %v2764, %v2766
        %v2768 = vrot.slane %v2760, %v2767
        %v2770 = vunpack.c.l.s4 1983009808
        %v2771 = vunpack.c.0.s8 %v2770
        %v2772 = vlaneseq
        %v2773 = vshrl.u32 %v2772, 7
        %v2774 = vsub.s32 %v2771, %v2773
        %v2775 = vrot.slane %v2761, %v2774
        %v2776 = vcombine.low %v2743, %v2755
        %v2777 = vcombine.high %v2743, %v2755
        %v2779 = vunpack.c.l.s4 1983009808
        %v2780 = vunpack.c.0.s8 %v2779
        %v2781 = vlaneseq
        %v2782 = vshrl.u32 %v2781, 7
        %v2783 = vsub.s32 %v2780, %v2782
        %v2784 = vrot.slane %v2776, %v2783
        %v2786 = vunpack.c.l.s4 1983009808
        %v2787 = vunpack.c.0.s8 %v2786
        %v2788 = vlaneseq
        %v2789 = vshrl.u32 %v2788, 7
        %v2790 = vsub.s32 %v2787, %v2789
        %v2791 = vrot.slane %v2777, %v2790
        %v2792 = vcombine.low %v2768, %v2784
        %v2793 = vcombine.high %v2768, %v2784
        %v2795 = vunpack.c.l.s4 1934713408
        %v2796 = vunpack.c.0.s8 %v2795
        %v2797 = vlaneseq
        %v2798 = vshrl.u32 %v2797, 7
        %v2799 = vsub.s32 %v2796, %v2798
        %v2800 = vrot.slane %v2792, %v2799
        %v2802 = vunpack.c.l.s4 1934713408
        %v2803 = vunpack.c.0.s8 %v2802
        %v2804 = vlaneseq
        %v2805 = vshrl.u32 %v2804, 7
        %v2806 = vsub.s32 %v2803, %v2805
        %v2807 = vrot.slane %v2793, %v2806
        %v2808 = vcombine.low %v2775, %v2791
        %v2809 = vcombine.high %v2775, %v2791
        %v2811 = vunpack.c.l.s4 1934713408
        %v2812 = vunpack.c.0.s8 %v2811
        %v2813 = vlaneseq
        %v2814 = vshrl.u32 %v2813, 7
        %v2815 = vsub.s32 %v2812, %v2814
        %v2816 = vrot.slane %v2808, %v2815
        %v2818 = vunpack.c.l.s4 1934713408
        %v2819 = vunpack.c.0.s8 %v2818
        %v2820 = vlaneseq
        %v2821 = vshrl.u32 %v2820, 7
        %v2822 = vsub.s32 %v2819, %v2821
        %v2823 = vrot.slane %v2809, %v2822
        %v2824 = vcombine.high %v2800, 0.0
        %v2825 = vcombine.high %v2807, 0.0
        %v2826 = vcombine.high %v2816, 0.0
        %v2827 = vcombine.high %v2823, 0.0
        %v2828 = vcombine.low %v2498, %v2751
        %v2829 = vcombine.high %v2498, %v2751
        %v2831 = vunpack.c.l.s4 1983009808
        %v2832 = vunpack.c.0.s8 %v2831
        %v2833 = vlaneseq
        %v2834 = vshrl.u32 %v2833, 7
        %v2835 = vsub.s32 %v2832, %v2834
        %v2836 = vrot.slane %v2828, %v2835
        %v2838 = vunpack.c.l.s4 1983009808
        %v2839 = vunpack.c.0.s8 %v2838
        %v2840 = vlaneseq
        %v2841 = vshrl.u32 %v2840, 7
        %v2842 = vsub.s32 %v2839, %v2841
        %v2843 = vrot.slane %v2829, %v2842
        %v2844 = vcombine.low %v2745, %v2757
        %v2845 = vcombine.high %v2745, %v2757
        %v2847 = vunpack.c.l.s4 1983009808
        %v2848 = vunpack.c.0.s8 %v2847
        %v2849 = vlaneseq
        %v2850 = vshrl.u32 %v2849, 7
        %v2851 = vsub.s32 %v2848, %v2850
        %v2852 = vrot.slane %v2844, %v2851
        %v2854 = vunpack.c.l.s4 1983009808
        %v2855 = vunpack.c.0.s8 %v2854
        %v2856 = vlaneseq
        %v2857 = vshrl.u32 %v2856, 7
        %v2858 = vsub.s32 %v2855, %v2857
        %v2859 = vrot.slane %v2845, %v2858
        %v2860 = vcombine.low %v2836, %v2852
        %v2861 = vcombine.high %v2836, %v2852
        %v2863 = vunpack.c.l.s4 1934713408
        %v2864 = vunpack.c.0.s8 %v2863
        %v2865 = vlaneseq
        %v2866 = vshrl.u32 %v2865, 7
        %v2867 = vsub.s32 %v2864, %v2866
        %v2868 = vrot.slane %v2860, %v2867
        %v2870 = vunpack.c.l.s4 1934713408
        %v2871 = vunpack.c.0.s8 %v2870
        %v2872 = vlaneseq
        %v2873 = vshrl.u32 %v2872, 7
        %v2874 = vsub.s32 %v2871, %v2873
        %v2875 = vrot.slane %v2861, %v2874
        %v2876 = vcombine.low %v2843, %v2859
        %v2877 = vcombine.high %v2843, %v2859
        %v2879 = vunpack.c.l.s4 1934713408
        %v2880 = vunpack.c.0.s8 %v2879
        %v2881 = vlaneseq
        %v2882 = vshrl.u32 %v2881, 7
        %v2883 = vsub.s32 %v2880, %v2882
        %v2884 = vrot.slane %v2876, %v2883
        %v2886 = vunpack.c.l.s4 1934713408
        %v2887 = vunpack.c.0.s8 %v2886
        %v2888 = vlaneseq
        %v2889 = vshrl.u32 %v2888, 7
        %v2890 = vsub.s32 %v2887, %v2889
        %v2891 = vrot.slane %v2877, %v2890
        %v2892 = vcombine.high %v2868, 0.0
        %v2893 = vcombine.high %v2875, 0.0
        %v2894 = vcombine.high %v2884, 0.0
        %v2895 = vcombine.high %v2891, 0.0
        %v2896 = vcombine.low %v2800, %v2807
        %v2898 = vunpack.c.l.s4 1983009808
        %v2899 = vunpack.c.0.s8 %v2898
        %v2900 = vlaneseq
        %v2901 = vshrl.u32 %v2900, 7
        %v2902 = vsub.s32 %v2899, %v2901
        %v2903 = vrot.slane %v2896, %v2902
        %v2904 = vcombine.low %v2824, %v2825
        %v2906 = vunpack.c.l.s4 1983009808
        %v2907 = vunpack.c.0.s8 %v2906
        %v2908 = vlaneseq
        %v2909 = vshrl.u32 %v2908, 7
        %v2910 = vsub.s32 %v2907, %v2909
        %v2911 = vrot.slane %v2904, %v2910
        %v2912 = vcombine.low %v2816, %v2823
        %v2914 = vunpack.c.l.s4 1983009808
        %v2915 = vunpack.c.0.s8 %v2914
        %v2916 = vlaneseq
        %v2917 = vshrl.u32 %v2916, 7
        %v2918 = vsub.s32 %v2915, %v2917
        %v2919 = vrot.slane %v2912, %v2918
        %v2920 = vcombine.low %v2826, %v2827
        %v2922 = vunpack.c.l.s4 1983009808
        %v2923 = vunpack.c.0.s8 %v2922
        %v2924 = vlaneseq
        %v2925 = vshrl.u32 %v2924, 7
        %v2926 = vsub.s32 %v2923, %v2925
        %v2927 = vrot.slane %v2920, %v2926
        %v2928 = vcombine.low %v2903, %v2911
        %v2929 = vcombine.high %v2903, %v2911
        %v2931 = vunpack.c.l.s4 1934713408
        %v2932 = vunpack.c.0.s8 %v2931
        %v2933 = vlaneseq
        %v2934 = vshrl.u32 %v2933, 7
        %v2935 = vsub.s32 %v2932, %v2934
        %v2936 = vrot.slane %v2928, %v2935
        %v2938 = vunpack.c.l.s4 1934713408
        %v2939 = vunpack.c.0.s8 %v2938
        %v2940 = vlaneseq
        %v2941 = vshrl.u32 %v2940, 7
        %v2942 = vsub.s32 %v2939, %v2941
        %v2943 = vrot.slane %v2929, %v2942
        %v2944 = vcombine.low %v2919, %v2927
        %v2945 = vcombine.high %v2919, %v2927
        %v2947 = vunpack.c.l.s4 1934713408
        %v2948 = vunpack.c.0.s8 %v2947
        %v2949 = vlaneseq
        %v2950 = vshrl.u32 %v2949, 7
        %v2951 = vsub.s32 %v2948, %v2950
        %v2952 = vrot.slane %v2944, %v2951
        %v2954 = vunpack.c.l.s4 1934713408
        %v2955 = vunpack.c.0.s8 %v2954
        %v2956 = vlaneseq
        %v2957 = vshrl.u32 %v2956, 7
        %v2958 = vsub.s32 %v2955, %v2957
        %v2959 = vrot.slane %v2945, %v2958
        %v2960 = vcombine.low %v2936, %v2952
        %v2961 = vcombine.high %v2936, %v2952
        %v2962 = vcombine.low %v2943, %v2959
        %v2963 = vcombine.high %v2943, %v2959
        %v2964 = vcombine.low %v2868, %v2875
        %v2966 = vunpack.c.l.s4 1983009808
        %v2967 = vunpack.c.0.s8 %v2966
        %v2968 = vlaneseq
        %v2969 = vshrl.u32 %v2968, 7
        %v2970 = vsub.s32 %v2967, %v2969
        %v2971 = vrot.slane %v2964, %v2970
        %v2972 = vcombine.low %v2892, %v2893
        %v2974 = vunpack.c.l.s4 1983009808
        %v2975 = vunpack.c.0.s8 %v2974
        %v2976 = vlaneseq
        %v2977 = vshrl.u32 %v2976, 7
        %v2978 = vsub.s32 %v2975, %v2977
        %v2979 = vrot.slane %v2972, %v2978
        %v2980 = vcombine.low %v2884, %v2891
        %v2982 = vunpack.c.l.s4 1983009808
        %v2983 = vunpack.c.0.s8 %v2982
        %v2984 = vlaneseq
        %v2985 = vshrl.u32 %v2984, 7
        %v2986 = vsub.s32 %v2983, %v2985
        %v2987 = vrot.slane %v2980, %v2986
        %v2988 = vcombine.low %v2894, %v2895
        %v2990 = vunpack.c.l.s4 1983009808
        %v2991 = vunpack.c.0.s8 %v2990
        %v2992 = vlaneseq
        %v2993 = vshrl.u32 %v2992, 7
        %v2994 = vsub.s32 %v2991, %v2993
        %v2995 = vrot.slane %v2988, %v2994
        %v2996 = vcombine.low %v2971, %v2979
        %v2997 = vcombine.high %v2971, %v2979
        %v2999 = vunpack.c.l.s4 1934713408
        %v3000 = vunpack.c.0.s8 %v2999
        %v3001 = vlaneseq
        %v3002 = vshrl.u32 %v3001, 7
        %v3003 = vsub.s32 %v3000, %v3002
        %v3004 = vrot.slane %v2996, %v3003
        %v3006 = vunpack.c.l.s4 1934713408
        %v3007 = vunpack.c.0.s8 %v3006
        %v3008 = vlaneseq
        %v3009 = vshrl.u32 %v3008, 7
        %v3010 = vsub.s32 %v3007, %v3009
        %v3011 = vrot.slane %v2997, %v3010
        %v3012 = vcombine.low %v2987, %v2995
        %v3013 = vcombine.high %v2987, %v2995
        %v3015 = vunpack.c.l.s4 1934713408
        %v3016 = vunpack.c.0.s8 %v3015
        %v3017 = vlaneseq
        %v3018 = vshrl.u32 %v3017, 7
        %v3019 = vsub.s32 %v3016, %v3018
        %v3020 = vrot.slane %v3012, %v3019
        %v3022 = vunpack.c.l.s4 1934713408
        %v3023 = vunpack.c.0.s8 %v3022
        %v3024 = vlaneseq
        %v3025 = vshrl.u32 %v3024, 7
        %v3026 = vsub.s32 %v3023, %v3025
        %v3027 = vrot.slane %v3013, %v3026
        %v3028 = vcombine.low %v3004, %v3020
        %v3029 = vcombine.high %v3004, %v3020
        %v3030 = vcombine.low %v3011, %v3027
        %v3031 = vcombine.high %v3011, %v3027
        %v3032 = vpack.c.bf16 %v3028, %v2960
        %v3033 = vpack.c.bf16 %v3029, %v2961
        %v3034 = vpack.c.bf16 %v3030, %v2962
        %v3035 = vpack.c.bf16 %v3031, %v2963
        %3038 = vrot.lane.b32.xlu0 %v2584, 96
        %v3039 = vpop.permute.xlu0 %3038
        %3040 = vrot.lane.b32.xlu0 %v2587, 96
        %v3041 = vpop.permute.xlu0 %3040
        %3044 = vrot.lane.b32.xlu0 %v2584, 64
        %v3045 = vpop.permute.xlu0 %3044
        %3046 = vrot.lane.b32.xlu0 %v2587, 64
        %v3047 = vpop.permute.xlu0 %3046
        %3050 = vrot.lane.b32.xlu0 %v2584, 32
        %v3051 = vpop.permute.xlu0 %3050
        %3052 = vrot.lane.b32.xlu0 %v2587, 32
        %v3053 = vpop.permute.xlu0 %3052
        %v3056 = vcombine.low %v2584, %v3045
        %v3057 = vcombine.high %v2584, %v3045
        %v3059 = vunpack.c.l.s4 1983009808
        %v3060 = vunpack.c.0.s8 %v3059
        %v3061 = vlaneseq
        %v3062 = vshrl.u32 %v3061, 7
        %v3063 = vsub.s32 %v3060, %v3062
        %v3064 = vrot.slane %v3056, %v3063
        %v3066 = vunpack.c.l.s4 1983009808
        %v3067 = vunpack.c.0.s8 %v3066
        %v3068 = vlaneseq
        %v3069 = vshrl.u32 %v3068, 7
        %v3070 = vsub.s32 %v3067, %v3069
        %v3071 = vrot.slane %v3057, %v3070
        %v3072 = vcombine.low %v3039, %v3051
        %v3073 = vcombine.high %v3039, %v3051
        %v3075 = vunpack.c.l.s4 1983009808
        %v3076 = vunpack.c.0.s8 %v3075
        %v3077 = vlaneseq
        %v3078 = vshrl.u32 %v3077, 7
        %v3079 = vsub.s32 %v3076, %v3078
        %v3080 = vrot.slane %v3072, %v3079
        %v3082 = vunpack.c.l.s4 1983009808
        %v3083 = vunpack.c.0.s8 %v3082
        %v3084 = vlaneseq
        %v3085 = vshrl.u32 %v3084, 7
        %v3086 = vsub.s32 %v3083, %v3085
        %v3087 = vrot.slane %v3073, %v3086
        %v3088 = vcombine.low %v3064, %v3080
        %v3089 = vcombine.high %v3064, %v3080
        %v3091 = vunpack.c.l.s4 1934713408
        %v3092 = vunpack.c.0.s8 %v3091
        %v3093 = vlaneseq
        %v3094 = vshrl.u32 %v3093, 7
        %v3095 = vsub.s32 %v3092, %v3094
        %v3096 = vrot.slane %v3088, %v3095
        %v3098 = vunpack.c.l.s4 1934713408
        %v3099 = vunpack.c.0.s8 %v3098
        %v3100 = vlaneseq
        %v3101 = vshrl.u32 %v3100, 7
        %v3102 = vsub.s32 %v3099, %v3101
        %v3103 = vrot.slane %v3089, %v3102
        %v3104 = vcombine.low %v3071, %v3087
        %v3105 = vcombine.high %v3071, %v3087
        %v3107 = vunpack.c.l.s4 1934713408
        %v3108 = vunpack.c.0.s8 %v3107
        %v3109 = vlaneseq
        %v3110 = vshrl.u32 %v3109, 7
        %v3111 = vsub.s32 %v3108, %v3110
        %v3112 = vrot.slane %v3104, %v3111
        %v3114 = vunpack.c.l.s4 1934713408
        %v3115 = vunpack.c.0.s8 %v3114
        %v3116 = vlaneseq
        %v3117 = vshrl.u32 %v3116, 7
        %v3118 = vsub.s32 %v3115, %v3117
        %v3119 = vrot.slane %v3105, %v3118
        %v3120 = vcombine.high %v3096, 0.0
        %v3121 = vcombine.high %v3103, 0.0
        %v3122 = vcombine.high %v3112, 0.0
        %v3123 = vcombine.high %v3119, 0.0
        %v3124 = vcombine.low %v2587, %v3047
        %v3125 = vcombine.high %v2587, %v3047
        %v3127 = vunpack.c.l.s4 1983009808
        %v3128 = vunpack.c.0.s8 %v3127
        %v3129 = vlaneseq
        %v3130 = vshrl.u32 %v3129, 7
        %v3131 = vsub.s32 %v3128, %v3130
        %v3132 = vrot.slane %v3124, %v3131
        %v3134 = vunpack.c.l.s4 1983009808
        %v3135 = vunpack.c.0.s8 %v3134
        %v3136 = vlaneseq
        %v3137 = vshrl.u32 %v3136, 7
        %v3138 = vsub.s32 %v3135, %v3137
        %v3139 = vrot.slane %v3125, %v3138
        %v3140 = vcombine.low %v3041, %v3053
        %v3141 = vcombine.high %v3041, %v3053
        %v3143 = vunpack.c.l.s4 1983009808
        %v3144 = vunpack.c.0.s8 %v3143
        %v3145 = vlaneseq
        %v3146 = vshrl.u32 %v3145, 7
        %v3147 = vsub.s32 %v3144, %v3146
        %v3148 = vrot.slane %v3140, %v3147
        %v3150 = vunpack.c.l.s4 1983009808
        %v3151 = vunpack.c.0.s8 %v3150
        %v3152 = vlaneseq
        %v3153 = vshrl.u32 %v3152, 7
        %v3154 = vsub.s32 %v3151, %v3153
        %v3155 = vrot.slane %v3141, %v3154
        %v3156 = vcombine.low %v3132, %v3148
        %v3157 = vcombine.high %v3132, %v3148
        %v3159 = vunpack.c.l.s4 1934713408
        %v3160 = vunpack.c.0.s8 %v3159
        %v3161 = vlaneseq
        %v3162 = vshrl.u32 %v3161, 7
        %v3163 = vsub.s32 %v3160, %v3162
        %v3164 = vrot.slane %v3156, %v3163
        %v3166 = vunpack.c.l.s4 1934713408
        %v3167 = vunpack.c.0.s8 %v3166
        %v3168 = vlaneseq
        %v3169 = vshrl.u32 %v3168, 7
        %v3170 = vsub.s32 %v3167, %v3169
        %v3171 = vrot.slane %v3157, %v3170
        %v3172 = vcombine.low %v3139, %v3155
        %v3173 = vcombine.high %v3139, %v3155
        %v3175 = vunpack.c.l.s4 1934713408
        %v3176 = vunpack.c.0.s8 %v3175
        %v3177 = vlaneseq
        %v3178 = vshrl.u32 %v3177, 7
        %v3179 = vsub.s32 %v3176, %v3178
        %v3180 = vrot.slane %v3172, %v3179
        %v3182 = vunpack.c.l.s4 1934713408
        %v3183 = vunpack.c.0.s8 %v3182
        %v3184 = vlaneseq
        %v3185 = vshrl.u32 %v3184, 7
        %v3186 = vsub.s32 %v3183, %v3185
        %v3187 = vrot.slane %v3173, %v3186
        %v3188 = vcombine.high %v3164, 0.0
        %v3189 = vcombine.high %v3171, 0.0
        %v3190 = vcombine.high %v3180, 0.0
        %v3191 = vcombine.high %v3187, 0.0
        %v3192 = vcombine.low %v3096, %v3103
        %v3194 = vunpack.c.l.s4 1983009808
        %v3195 = vunpack.c.0.s8 %v3194
        %v3196 = vlaneseq
        %v3197 = vshrl.u32 %v3196, 7
        %v3198 = vsub.s32 %v3195, %v3197
        %v3199 = vrot.slane %v3192, %v3198
        %v3200 = vcombine.low %v3120, %v3121
        %v3202 = vunpack.c.l.s4 1983009808
        %v3203 = vunpack.c.0.s8 %v3202
        %v3204 = vlaneseq
        %v3205 = vshrl.u32 %v3204, 7
        %v3206 = vsub.s32 %v3203, %v3205
        %v3207 = vrot.slane %v3200, %v3206
        %v3208 = vcombine.low %v3112, %v3119
        %v3210 = vunpack.c.l.s4 1983009808
        %v3211 = vunpack.c.0.s8 %v3210
        %v3212 = vlaneseq
        %v3213 = vshrl.u32 %v3212, 7
        %v3214 = vsub.s32 %v3211, %v3213
        %v3215 = vrot.slane %v3208, %v3214
        %v3216 = vcombine.low %v3122, %v3123
        %v3218 = vunpack.c.l.s4 1983009808
        %v3219 = vunpack.c.0.s8 %v3218
        %v3220 = vlaneseq
        %v3221 = vshrl.u32 %v3220, 7
        %v3222 = vsub.s32 %v3219, %v3221
        %v3223 = vrot.slane %v3216, %v3222
        %v3224 = vcombine.low %v3199, %v3207
        %v3225 = vcombine.high %v3199, %v3207
        %v3227 = vunpack.c.l.s4 1934713408
        %v3228 = vunpack.c.0.s8 %v3227
        %v3229 = vlaneseq
        %v3230 = vshrl.u32 %v3229, 7
        %v3231 = vsub.s32 %v3228, %v3230
        %v3232 = vrot.slane %v3224, %v3231
        %v3234 = vunpack.c.l.s4 1934713408
        %v3235 = vunpack.c.0.s8 %v3234
        %v3236 = vlaneseq
        %v3237 = vshrl.u32 %v3236, 7
        %v3238 = vsub.s32 %v3235, %v3237
        %v3239 = vrot.slane %v3225, %v3238
        %v3240 = vcombine.low %v3215, %v3223
        %v3241 = vcombine.high %v3215, %v3223
        %v3243 = vunpack.c.l.s4 1934713408
        %v3244 = vunpack.c.0.s8 %v3243
        %v3245 = vlaneseq
        %v3246 = vshrl.u32 %v3245, 7
        %v3247 = vsub.s32 %v3244, %v3246
        %v3248 = vrot.slane %v3240, %v3247
        %v3250 = vunpack.c.l.s4 1934713408
        %v3251 = vunpack.c.0.s8 %v3250
        %v3252 = vlaneseq
        %v3253 = vshrl.u32 %v3252, 7
        %v3254 = vsub.s32 %v3251, %v3253
        %v3255 = vrot.slane %v3241, %v3254
        %v3256 = vcombine.low %v3232, %v3248
        %v3257 = vcombine.high %v3232, %v3248
        %v3258 = vcombine.low %v3239, %v3255
        %v3259 = vcombine.high %v3239, %v3255
        %v3260 = vcombine.low %v3164, %v3171
        %v3262 = vunpack.c.l.s4 1983009808
        %v3263 = vunpack.c.0.s8 %v3262
        %v3264 = vlaneseq
        %v3265 = vshrl.u32 %v3264, 7
        %v3266 = vsub.s32 %v3263, %v3265
        %v3267 = vrot.slane %v3260, %v3266
        %v3268 = vcombine.low %v3188, %v3189
        %v3270 = vunpack.c.l.s4 1983009808
        %v3271 = vunpack.c.0.s8 %v3270
        %v3272 = vlaneseq
        %v3273 = vshrl.u32 %v3272, 7
        %v3274 = vsub.s32 %v3271, %v3273
        %v3275 = vrot.slane %v3268, %v3274
        %v3276 = vcombine.low %v3180, %v3187
        %v3278 = vunpack.c.l.s4 1983009808
        %v3279 = vunpack.c.0.s8 %v3278
        %v3280 = vlaneseq
        %v3281 = vshrl.u32 %v3280, 7
        %v3282 = vsub.s32 %v3279, %v3281
        %v3283 = vrot.slane %v3276, %v3282
        %v3284 = vcombine.low %v3190, %v3191
        %v3286 = vunpack.c.l.s4 1983009808
        %v3287 = vunpack.c.0.s8 %v3286
        %v3288 = vlaneseq
        %v3289 = vshrl.u32 %v3288, 7
        %v3290 = vsub.s32 %v3287, %v3289
        %v3291 = vrot.slane %v3284, %v3290
        %v3292 = vcombine.low %v3267, %v3275
        %v3293 = vcombine.high %v3267, %v3275
        %v3295 = vunpack.c.l.s4 1934713408
        %v3296 = vunpack.c.0.s8 %v3295
        %v3297 = vlaneseq
        %v3298 = vshrl.u32 %v3297, 7
        %v3299 = vsub.s32 %v3296, %v3298
        %v3300 = vrot.slane %v3292, %v3299
        %v3302 = vunpack.c.l.s4 1934713408
        %v3303 = vunpack.c.0.s8 %v3302
        %v3304 = vlaneseq
        %v3305 = vshrl.u32 %v3304, 7
        %v3306 = vsub.s32 %v3303, %v3305
        %v3307 = vrot.slane %v3293, %v3306
        %v3308 = vcombine.low %v3283, %v3291
        %v3309 = vcombine.high %v3283, %v3291
        %v3311 = vunpack.c.l.s4 1934713408
        %v3312 = vunpack.c.0.s8 %v3311
        %v3313 = vlaneseq
        %v3314 = vshrl.u32 %v3313, 7
        %v3315 = vsub.s32 %v3312, %v3314
        %v3316 = vrot.slane %v3308, %v3315
        %v3318 = vunpack.c.l.s4 1934713408
        %v3319 = vunpack.c.0.s8 %v3318
        %v3320 = vlaneseq
        %v3321 = vshrl.u32 %v3320, 7
        %v3322 = vsub.s32 %v3319, %v3321
        %v3323 = vrot.slane %v3309, %v3322
        %v3324 = vcombine.low %v3300, %v3316
        %v3325 = vcombine.high %v3300, %v3316
        %v3326 = vcombine.low %v3307, %v3323
        %v3327 = vcombine.high %v3307, %v3323
        %v3328 = vpack.c.bf16 %v3324, %v3256
        %v3329 = vpack.c.bf16 %v3325, %v3257
        %v3330 = vpack.c.bf16 %v3326, %v3258
        %v3331 = vpack.c.bf16 %v3327, %v3259
        %v3333 = vlaneseq
        %v3334 = vshrl.u32 %v3333, 7
        %v3335 = vsub.s32 0, %v3334
        %v3336 = vrot.slane %v784, %v3335
        %v3339 = vsel %vm1567, %v2736, 0
        %v3342 = vsel %vm1567, %v3032, 0
        %3344 = vmatprep.subr.bf16.mxu0 0
        %3345 = vmatpush1.bf16.xpose.msra.mxu0 0
        %3346 = vmatprep.subr.bf16.mxu0 0
        %3347 = vmatpush1.bf16.xpose.msra.mxu0 0
        %3348 = vmatprep.subr.bf16.mxu0 0
        %3349 = vmatpush1.bf16.xpose.msra.mxu0 0
        %3350 = vmatprep.subr.bf16.mxu0 0
        %3351 = vmatpush1.bf16.xpose.msra.mxu0 0
        %3352 = vmatprep.subr.bf16.mxu0 0
        %3353 = vmatpush1.bf16.xpose.msra.mxu0 0
        %3354 = vmatprep.subr.bf16.mxu0 0
        %3355 = vmatpush1.bf16.xpose.msra.mxu0 0
        %3356 = vmatprep.subr.bf16.mxu0 0
        %3357 = vmatpush1.bf16.xpose.msra.mxu0 0
        %3358 = vmatprep.subr.bf16.mxu0 0
        %3359 = vmatpush1.bf16.xpose.msra.mxu0 %v3342
        %3360 = vmatprep.subr.bf16.mxu0 0
        %3361 = vmatpush2.bf16.xpose.msra.mxu0 0
        %3362 = vmatprep.subr.bf16.mxu0 0
        %3363 = vmatpush2.bf16.xpose.msra.mxu0 0
        %3364 = vmatprep.subr.bf16.mxu0 0
        %3365 = vmatpush2.bf16.xpose.msra.mxu0 0
        %3366 = vmatprep.subr.bf16.mxu0 0
        %3367 = vmatpush2.bf16.xpose.msra.mxu0 0
        %3368 = vmatprep.subr.bf16.mxu0 0
        %3369 = vmatpush2.bf16.xpose.msra.mxu0 0
        %3370 = vmatprep.subr.bf16.mxu0 0
        %3371 = vmatpush2.bf16.xpose.msra.mxu0 0
        %3372 = vmatprep.subr.bf16.mxu0 0
        %3373 = vmatpush2.bf16.xpose.msra.mxu0 0
        %3374 = vmatprep.subr.bf16.mxu0 0
        %3375 = vmatpush2.bf16.xpose.msra.mxu0 0
        %3376 = vmatprep.mubr.bf16.mxu0 0
        %3377 = vmatmul.mubr.bf16.gmra.mxu0 %v3339
        %v3378 = vpop.f32.mrf.mxu0
        %v3379 = vadd.f32 %v3336, %v3378
        %v3380 = vpop.f32.mrf.mxu0
        %v3381 = vpop.f32.mrf.mxu0
        %v3382 = vpop.f32.mrf.mxu0
        %3383 = vdwg.mxu0
        %v3385 = vsel %vm1567, %v2737, 0
        %v3388 = vsel %vm1567, %v3033, 0
        %3390 = vmatprep.subr.bf16.mxu0 0
        %3391 = vmatpush1.bf16.xpose.msra.mxu0 0
        %3392 = vmatprep.subr.bf16.mxu0 0
        %3393 = vmatpush1.bf16.xpose.msra.mxu0 0
        %3394 = vmatprep.subr.bf16.mxu0 0
        %3395 = vmatpush1.bf16.xpose.msra.mxu0 0
        %3396 = vmatprep.subr.bf16.mxu0 0
        %3397 = vmatpush1.bf16.xpose.msra.mxu0 0
        %3398 = vmatprep.subr.bf16.mxu0 0
        %3399 = vmatpush1.bf16.xpose.msra.mxu0 0
        %3400 = vmatprep.subr.bf16.mxu0 0
        %3401 = vmatpush1.bf16.xpose.msra.mxu0 0
        %3402 = vmatprep.subr.bf16.mxu0 0
        %3403 = vmatpush1.bf16.xpose.msra.mxu0 0
        %3404 = vmatprep.subr.bf16.mxu0 0
        %3405 = vmatpush1.bf16.xpose.msra.mxu0 %v3388
        %3406 = vmatprep.subr.bf16.mxu0 0
        %3407 = vmatpush2.bf16.xpose.msra.mxu0 0
        %3408 = vmatprep.subr.bf16.mxu0 0
        %3409 = vmatpush2.bf16.xpose.msra.mxu0 0
        %3410 = vmatprep.subr.bf16.mxu0 0
        %3411 = vmatpush2.bf16.xpose.msra.mxu0 0
        %3412 = vmatprep.subr.bf16.mxu0 0
        %3413 = vmatpush2.bf16.xpose.msra.mxu0 0
        %3414 = vmatprep.subr.bf16.mxu0 0
        %3415 = vmatpush2.bf16.xpose.msra.mxu0 0
        %3416 = vmatprep.subr.bf16.mxu0 0
        %3417 = vmatpush2.bf16.xpose.msra.mxu0 0
        %3418 = vmatprep.subr.bf16.mxu0 0
        %3419 = vmatpush2.bf16.xpose.msra.mxu0 0
        %3420 = vmatprep.subr.bf16.mxu0 0
        %3421 = vmatpush2.bf16.xpose.msra.mxu0 0
        %3422 = vmatprep.mubr.bf16.mxu0 0
        %3423 = vmatmul.mubr.bf16.gmra.mxu0 %v3385
        %v3424 = vpop.f32.mrf.mxu0
        %v3425 = vadd.f32 %v3336, %v3424
        %v3426 = vpop.f32.mrf.mxu0
        %v3427 = vpop.f32.mrf.mxu0
        %v3428 = vpop.f32.mrf.mxu0
        %3429 = vdwg.mxu0
        %v3431 = vsel %vm1567, %v2738, 0
        %v3434 = vsel %vm1567, %v3034, 0
        %3436 = vmatprep.subr.bf16.mxu0 0
        %3437 = vmatpush1.bf16.xpose.msra.mxu0 0
        %3438 = vmatprep.subr.bf16.mxu0 0
        %3439 = vmatpush1.bf16.xpose.msra.mxu0 0
        %3440 = vmatprep.subr.bf16.mxu0 0
        %3441 = vmatpush1.bf16.xpose.msra.mxu0 0
        %3442 = vmatprep.subr.bf16.mxu0 0
        %3443 = vmatpush1.bf16.xpose.msra.mxu0 0
        %3444 = vmatprep.subr.bf16.mxu0 0
        %3445 = vmatpush1.bf16.xpose.msra.mxu0 0
        %3446 = vmatprep.subr.bf16.mxu0 0
        %3447 = vmatpush1.bf16.xpose.msra.mxu0 0
        %3448 = vmatprep.subr.bf16.mxu0 0
        %3449 = vmatpush1.bf16.xpose.msra.mxu0 0
        %3450 = vmatprep.subr.bf16.mxu0 0
        %3451 = vmatpush1.bf16.xpose.msra.mxu0 %v3434
        %3452 = vmatprep.subr.bf16.mxu0 0
        %3453 = vmatpush2.bf16.xpose.msra.mxu0 0
        %3454 = vmatprep.subr.bf16.mxu0 0
        %3455 = vmatpush2.bf16.xpose.msra.mxu0 0
        %3456 = vmatprep.subr.bf16.mxu0 0
        %3457 = vmatpush2.bf16.xpose.msra.mxu0 0
        %3458 = vmatprep.subr.bf16.mxu0 0
        %3459 = vmatpush2.bf16.xpose.msra.mxu0 0
        %3460 = vmatprep.subr.bf16.mxu0 0
        %3461 = vmatpush2.bf16.xpose.msra.mxu0 0
        %3462 = vmatprep.subr.bf16.mxu0 0
        %3463 = vmatpush2.bf16.xpose.msra.mxu0 0
        %3464 = vmatprep.subr.bf16.mxu0 0
        %3465 = vmatpush2.bf16.xpose.msra.mxu0 0
        %3466 = vmatprep.subr.bf16.mxu0 0
        %3467 = vmatpush2.bf16.xpose.msra.mxu0 0
        %3468 = vmatprep.mubr.bf16.mxu0 0
        %3469 = vmatmul.mubr.bf16.gmra.mxu0 %v3431
        %v3470 = vpop.f32.mrf.mxu0
        %v3471 = vadd.f32 %v3336, %v3470
        %v3472 = vpop.f32.mrf.mxu0
        %v3473 = vpop.f32.mrf.mxu0
        %v3474 = vpop.f32.mrf.mxu0
        %3475 = vdwg.mxu0
        %v3477 = vsel %vm1567, %v2739, 0
        %v3480 = vsel %vm1567, %v3035, 0
        %3482 = vmatprep.subr.bf16.mxu0 0
        %3483 = vmatpush1.bf16.xpose.msra.mxu0 0
        %3484 = vmatprep.subr.bf16.mxu0 0
        %3485 = vmatpush1.bf16.xpose.msra.mxu0 0
        %3486 = vmatprep.subr.bf16.mxu0 0
        %3487 = vmatpush1.bf16.xpose.msra.mxu0 0
        %3488 = vmatprep.subr.bf16.mxu0 0
        %3489 = vmatpush1.bf16.xpose.msra.mxu0 0
        %3490 = vmatprep.subr.bf16.mxu0 0
        %3491 = vmatpush1.bf16.xpose.msra.mxu0 0
        %3492 = vmatprep.subr.bf16.mxu0 0
        %3493 = vmatpush1.bf16.xpose.msra.mxu0 0
        %3494 = vmatprep.subr.bf16.mxu0 0
        %3495 = vmatpush1.bf16.xpose.msra.mxu0 0
        %3496 = vmatprep.subr.bf16.mxu0 0
        %3497 = vmatpush1.bf16.xpose.msra.mxu0 %v3480
        %3498 = vmatprep.subr.bf16.mxu0 0
        %3499 = vmatpush2.bf16.xpose.msra.mxu0 0
        %3500 = vmatprep.subr.bf16.mxu0 0
        %3501 = vmatpush2.bf16.xpose.msra.mxu0 0
        %3502 = vmatprep.subr.bf16.mxu0 0
        %3503 = vmatpush2.bf16.xpose.msra.mxu0 0
        %3504 = vmatprep.subr.bf16.mxu0 0
        %3505 = vmatpush2.bf16.xpose.msra.mxu0 0
        %3506 = vmatprep.subr.bf16.mxu0 0
        %3507 = vmatpush2.bf16.xpose.msra.mxu0 0
        %3508 = vmatprep.subr.bf16.mxu0 0
        %3509 = vmatpush2.bf16.xpose.msra.mxu0 0
        %3510 = vmatprep.subr.bf16.mxu0 0
        %3511 = vmatpush2.bf16.xpose.msra.mxu0 0
        %3512 = vmatprep.subr.bf16.mxu0 0
        %3513 = vmatpush2.bf16.xpose.msra.mxu0 0
        %3514 = vmatprep.mubr.bf16.mxu0 0
        %3515 = vmatmul.mubr.bf16.gmra.mxu0 %v3477
        %v3516 = vpop.f32.mrf.mxu0
        %v3517 = vadd.f32 %v3336, %v3516
        %v3518 = vpop.f32.mrf.mxu0
        %v3519 = vpop.f32.mrf.mxu0
        %v3520 = vpop.f32.mrf.mxu0
        %3521 = vdwg.mxu0
        %vm3522 = vcmask 130048
        %v3523 = vsel %vm3522, %v3379, -inf
        %3524 = vmax.xlane.f32.xlu0 %v3523
        %v3525 = vpop.xlane.xlu0 %3524
        %v3526 = vsel %vm3522, %v3425, -inf
        %3527 = vmax.xlane.f32.xlu0 %v3526
        %v3528 = vpop.xlane.xlu0 %3527
        %v3529 = vsel %vm3522, %v3471, -inf
        %3530 = vmax.xlane.f32.xlu0 %v3529
        %v3531 = vpop.xlane.xlu0 %3530
        %v3532 = vsel %vm3522, %v3517, -inf
        %3533 = vmax.xlane.f32.xlu0 %v3532
        %v3534 = vpop.xlane.xlu0 %3533
        %v3535 = vsub.f32 %v3379, %v3525
        %v3536 = vsub.f32 %v3425, %v3528
        %v3537 = vsub.f32 %v3471, %v3531
        %v3538 = vsub.f32 %v3517, %v3534
        %v3539 = vmul.f32 %v3535, 1.442695
        %v3540 = vpow.pop %v3539
        %v3541 = vmul.f32 %v3536, 1.442695
        %v3542 = vpow.pop %v3541
        %v3543 = vmul.f32 %v3537, 1.442695
        %v3544 = vpow.pop %v3543
        %v3545 = vmul.f32 %v3538, 1.442695
        %v3546 = vpow.pop %v3545
        %v3547 = vsel %vm3522, %v3540, 0.0
        %3548 = vadd.xlane.f32.xlu0 %v3547
        %v3549 = vpop.xlane.xlu0 %3548
        %v3550 = vsel %vm3522, %v3542, 0.0
        %3551 = vadd.xlane.f32.xlu0 %v3550
        %v3552 = vpop.xlane.xlu0 %3551
        %v3553 = vsel %vm3522, %v3544, 0.0
        %3554 = vadd.xlane.f32.xlu0 %v3553
        %v3555 = vpop.xlane.xlu0 %3554
        %v3556 = vsel %vm3522, %v3546, 0.0
        %3557 = vadd.xlane.f32.xlu0 %v3556
        %v3558 = vpop.xlane.xlu0 %3557
        %v3559 = vpack.c.bf16 %v3540, %v3540
        %v3560 = vpack.c.bf16 %v3542, %v3542
        %v3561 = vpack.c.bf16 %v3544, %v3544
        %v3562 = vpack.c.bf16 %v3546, %v3546
        %v3564 = vsel %vm3522, %v3559, 0
        %3566 = vmatprep.subr.bf16.mxu0 0
        %3567 = vmatpush1.bf16.msra.mxu0 0
        %3568 = vmatprep.subr.bf16.mxu0 0
        %3569 = vmatpush1.bf16.msra.mxu0 0
        %3570 = vmatprep.subr.bf16.mxu0 0
        %3571 = vmatpush1.bf16.msra.mxu0 0
        %3572 = vmatprep.subr.bf16.mxu0 0
        %3573 = vmatpush1.bf16.msra.mxu0 0
        %3574 = vmatprep.subr.bf16.mxu0 0
        %3575 = vmatpush1.bf16.msra.mxu0 0
        %3576 = vmatprep.subr.bf16.mxu0 0
        %3577 = vmatpush1.bf16.msra.mxu0 0
        %3578 = vmatprep.subr.bf16.mxu0 0
        %3579 = vmatpush1.bf16.msra.mxu0 0
        %3580 = vmatprep.subr.bf16.mxu0 0
        %3581 = vmatpush1.bf16.msra.mxu0 %v3328
        %3582 = vmatprep.subr.bf16.mxu0 0
        %3583 = vmatpush2.bf16.msra.mxu0 0
        %3584 = vmatprep.subr.bf16.mxu0 0
        %3585 = vmatpush2.bf16.msra.mxu0 0
        %3586 = vmatprep.subr.bf16.mxu0 0
        %3587 = vmatpush2.bf16.msra.mxu0 0
        %3588 = vmatprep.subr.bf16.mxu0 0
        %3589 = vmatpush2.bf16.msra.mxu0 0
        %3590 = vmatprep.subr.bf16.mxu0 0
        %3591 = vmatpush2.bf16.msra.mxu0 0
        %3592 = vmatprep.subr.bf16.mxu0 0
        %3593 = vmatpush2.bf16.msra.mxu0 0
        %3594 = vmatprep.subr.bf16.mxu0 0
        %3595 = vmatpush2.bf16.msra.mxu0 0
        %3596 = vmatprep.subr.bf16.mxu0 0
        %3597 = vmatpush2.bf16.msra.mxu0 0
        %3598 = vmatprep.mubr.bf16.mxu0 0
        %3599 = vmatmul.mubr.bf16.gmra.mxu0 %v3564
        %v3600 = vpop.f32.mrf.mxu0
        %v3601 = vadd.f32 0.0, %v3600
        %v3602 = vpop.f32.mrf.mxu0
        %v3603 = vpop.f32.mrf.mxu0
        %v3604 = vpop.f32.mrf.mxu0
        %3605 = vdwg.mxu0
        %v3607 = vsel %vm3522, %v3560, 0
        %3609 = vmatprep.subr.bf16.mxu0 0
        %3610 = vmatpush1.bf16.msra.mxu0 0
        %3611 = vmatprep.subr.bf16.mxu0 0
        %3612 = vmatpush1.bf16.msra.mxu0 0
        %3613 = vmatprep.subr.bf16.mxu0 0
        %3614 = vmatpush1.bf16.msra.mxu0 0
        %3615 = vmatprep.subr.bf16.mxu0 0
        %3616 = vmatpush1.bf16.msra.mxu0 0
        %3617 = vmatprep.subr.bf16.mxu0 0
        %3618 = vmatpush1.bf16.msra.mxu0 0
        %3619 = vmatprep.subr.bf16.mxu0 0
        %3620 = vmatpush1.bf16.msra.mxu0 0
        %3621 = vmatprep.subr.bf16.mxu0 0
        %3622 = vmatpush1.bf16.msra.mxu0 0
        %3623 = vmatprep.subr.bf16.mxu0 0
        %3624 = vmatpush1.bf16.msra.mxu0 %v3329
        %3625 = vmatprep.subr.bf16.mxu0 0
        %3626 = vmatpush2.bf16.msra.mxu0 0
        %3627 = vmatprep.subr.bf16.mxu0 0
        %3628 = vmatpush2.bf16.msra.mxu0 0
        %3629 = vmatprep.subr.bf16.mxu0 0
        %3630 = vmatpush2.bf16.msra.mxu0 0
        %3631 = vmatprep.subr.bf16.mxu0 0
        %3632 = vmatpush2.bf16.msra.mxu0 0
        %3633 = vmatprep.subr.bf16.mxu0 0
        %3634 = vmatpush2.bf16.msra.mxu0 0
        %3635 = vmatprep.subr.bf16.mxu0 0
        %3636 = vmatpush2.bf16.msra.mxu0 0
        %3637 = vmatprep.subr.bf16.mxu0 0
        %3638 = vmatpush2.bf16.msra.mxu0 0
        %3639 = vmatprep.subr.bf16.mxu0 0
        %3640 = vmatpush2.bf16.msra.mxu0 0
        %3641 = vmatprep.mubr.bf16.mxu0 0
        %3642 = vmatmul.mubr.bf16.gmra.mxu0 %v3607
        %v3643 = vpop.f32.mrf.mxu0
        %v3644 = vadd.f32 0.0, %v3643
        %v3645 = vpop.f32.mrf.mxu0
        %v3646 = vpop.f32.mrf.mxu0
        %v3647 = vpop.f32.mrf.mxu0
        %3648 = vdwg.mxu0
        %v3650 = vsel %vm3522, %v3561, 0
        %3652 = vmatprep.subr.bf16.mxu0 0
        %3653 = vmatpush1.bf16.msra.mxu0 0
        %3654 = vmatprep.subr.bf16.mxu0 0
        %3655 = vmatpush1.bf16.msra.mxu0 0
        %3656 = vmatprep.subr.bf16.mxu0 0
        %3657 = vmatpush1.bf16.msra.mxu0 0
        %3658 = vmatprep.subr.bf16.mxu0 0
        %3659 = vmatpush1.bf16.msra.mxu0 0
        %3660 = vmatprep.subr.bf16.mxu0 0
        %3661 = vmatpush1.bf16.msra.mxu0 0
        %3662 = vmatprep.subr.bf16.mxu0 0
        %3663 = vmatpush1.bf16.msra.mxu0 0
        %3664 = vmatprep.subr.bf16.mxu0 0
        %3665 = vmatpush1.bf16.msra.mxu0 0
        %3666 = vmatprep.subr.bf16.mxu0 0
        %3667 = vmatpush1.bf16.msra.mxu0 %v3330
        %3668 = vmatprep.subr.bf16.mxu0 0
        %3669 = vmatpush2.bf16.msra.mxu0 0
        %3670 = vmatprep.subr.bf16.mxu0 0
        %3671 = vmatpush2.bf16.msra.mxu0 0
        %3672 = vmatprep.subr.bf16.mxu0 0
        %3673 = vmatpush2.bf16.msra.mxu0 0
        %3674 = vmatprep.subr.bf16.mxu0 0
        %3675 = vmatpush2.bf16.msra.mxu0 0
        %3676 = vmatprep.subr.bf16.mxu0 0
        %3677 = vmatpush2.bf16.msra.mxu0 0
        %3678 = vmatprep.subr.bf16.mxu0 0
        %3679 = vmatpush2.bf16.msra.mxu0 0
        %3680 = vmatprep.subr.bf16.mxu0 0
        %3681 = vmatpush2.bf16.msra.mxu0 0
        %3682 = vmatprep.subr.bf16.mxu0 0
        %3683 = vmatpush2.bf16.msra.mxu0 0
        %3684 = vmatprep.mubr.bf16.mxu0 0
        %3685 = vmatmul.mubr.bf16.gmra.mxu0 %v3650
        %v3686 = vpop.f32.mrf.mxu0
        %v3687 = vadd.f32 0.0, %v3686
        %v3688 = vpop.f32.mrf.mxu0
        %v3689 = vpop.f32.mrf.mxu0
        %v3690 = vpop.f32.mrf.mxu0
        %3691 = vdwg.mxu0
        %v3693 = vsel %vm3522, %v3562, 0
        %3695 = vmatprep.subr.bf16.mxu0 0
        %3696 = vmatpush1.bf16.msra.mxu0 0
        %3697 = vmatprep.subr.bf16.mxu0 0
        %3698 = vmatpush1.bf16.msra.mxu0 0
        %3699 = vmatprep.subr.bf16.mxu0 0
        %3700 = vmatpush1.bf16.msra.mxu0 0
        %3701 = vmatprep.subr.bf16.mxu0 0
        %3702 = vmatpush1.bf16.msra.mxu0 0
        %3703 = vmatprep.subr.bf16.mxu0 0
        %3704 = vmatpush1.bf16.msra.mxu0 0
        %3705 = vmatprep.subr.bf16.mxu0 0
        %3706 = vmatpush1.bf16.msra.mxu0 0
        %3707 = vmatprep.subr.bf16.mxu0 0
        %3708 = vmatpush1.bf16.msra.mxu0 0
        %3709 = vmatprep.subr.bf16.mxu0 0
        %3710 = vmatpush1.bf16.msra.mxu0 %v3331
        %3711 = vmatprep.subr.bf16.mxu0 0
        %3712 = vmatpush2.bf16.msra.mxu0 0
        %3713 = vmatprep.subr.bf16.mxu0 0
        %3714 = vmatpush2.bf16.msra.mxu0 0
        %3715 = vmatprep.subr.bf16.mxu0 0
        %3716 = vmatpush2.bf16.msra.mxu0 0
        %3717 = vmatprep.subr.bf16.mxu0 0
        %3718 = vmatpush2.bf16.msra.mxu0 0
        %3719 = vmatprep.subr.bf16.mxu0 0
        %3720 = vmatpush2.bf16.msra.mxu0 0
        %3721 = vmatprep.subr.bf16.mxu0 0
        %3722 = vmatpush2.bf16.msra.mxu0 0
        %3723 = vmatprep.subr.bf16.mxu0 0
        %3724 = vmatpush2.bf16.msra.mxu0 0
        %3725 = vmatprep.subr.bf16.mxu0 0
        %3726 = vmatpush2.bf16.msra.mxu0 0
        %3727 = vmatprep.mubr.bf16.mxu0 0
        %3728 = vmatmul.mubr.bf16.gmra.mxu0 %v3693
        %v3729 = vpop.f32.mrf.mxu0
        %v3730 = vadd.f32 0.0, %v3729
        %v3731 = vpop.f32.mrf.mxu0
        %v3732 = vpop.f32.mrf.mxu0
        %v3733 = vpop.f32.mrf.mxu0
        %3734 = vdwg.mxu0
        %v3735 = vrcp.pop %v3549
        %v3736 = vrcp.pop %v3552
        %v3737 = vrcp.pop %v3555
        %v3738 = vrcp.pop %v3558
        %v3739 = vmul.f32 %v3601, %v3735
        %v3740 = vmul.f32 %v3644, %v3736
        %v3741 = vmul.f32 %v3687, %v3737
        %v3742 = vmul.f32 %v3730, %v3738
        %v3743 = vcombine.low %v3739, %v3741
        %v3744 = vcombine.high %v3739, %v3741
        %v3746 = vunpack.c.l.s4 1983009808
        %v3747 = vunpack.c.0.s8 %v3746
        %v3748 = vlaneseq
        %v3749 = vshrl.u32 %v3748, 7
        %v3750 = vsub.s32 %v3747, %v3749
        %v3751 = vrot.slane %v3743, %v3750
        %v3753 = vunpack.c.l.s4 1983009808
        %v3754 = vunpack.c.0.s8 %v3753
        %v3755 = vlaneseq
        %v3756 = vshrl.u32 %v3755, 7
        %v3757 = vsub.s32 %v3754, %v3756
        %v3758 = vrot.slane %v3744, %v3757
        %v3759 = vcombine.low %v3740, %v3742
        %v3760 = vcombine.high %v3740, %v3742
        %v3762 = vunpack.c.l.s4 1983009808
        %v3763 = vunpack.c.0.s8 %v3762
        %v3764 = vlaneseq
        %v3765 = vshrl.u32 %v3764, 7
        %v3766 = vsub.s32 %v3763, %v3765
        %v3767 = vrot.slane %v3759, %v3766
        %v3769 = vunpack.c.l.s4 1983009808
        %v3770 = vunpack.c.0.s8 %v3769
        %v3771 = vlaneseq
        %v3772 = vshrl.u32 %v3771, 7
        %v3773 = vsub.s32 %v3770, %v3772
        %v3774 = vrot.slane %v3760, %v3773
        %v3775 = vcombine.low %v3751, %v3767
        %v3776 = vcombine.high %v3751, %v3767
        %v3778 = vunpack.c.l.s4 1934713408
        %v3779 = vunpack.c.0.s8 %v3778
        %v3780 = vlaneseq
        %v3781 = vshrl.u32 %v3780, 7
        %v3782 = vsub.s32 %v3779, %v3781
        %v3783 = vrot.slane %v3775, %v3782
        %v3785 = vunpack.c.l.s4 1934713408
        %v3786 = vunpack.c.0.s8 %v3785
        %v3787 = vlaneseq
        %v3788 = vshrl.u32 %v3787, 7
        %v3789 = vsub.s32 %v3786, %v3788
        %v3790 = vrot.slane %v3776, %v3789
        %v3791 = vcombine.low %v3758, %v3774
        %v3792 = vcombine.high %v3758, %v3774
        %v3794 = vunpack.c.l.s4 1934713408
        %v3795 = vunpack.c.0.s8 %v3794
        %v3796 = vlaneseq
        %v3797 = vshrl.u32 %v3796, 7
        %v3798 = vsub.s32 %v3795, %v3797
        %v3799 = vrot.slane %v3791, %v3798
        %v3801 = vunpack.c.l.s4 1934713408
        %v3802 = vunpack.c.0.s8 %v3801
        %v3803 = vlaneseq
        %v3804 = vshrl.u32 %v3803, 7
        %v3805 = vsub.s32 %v3802, %v3804
        %v3806 = vrot.slane %v3792, %v3805
        %v3807 = vcombine.high %v3783, 0.0
        %v3808 = vcombine.high %v3790, 0.0
        %v3809 = vcombine.high %v3799, 0.0
        %v3810 = vcombine.high %v3806, 0.0
        %v3811 = vcombine.low %v3783, %v3790
        %v3813 = vunpack.c.l.s4 1983009808
        %v3814 = vunpack.c.0.s8 %v3813
        %v3815 = vlaneseq
        %v3816 = vshrl.u32 %v3815, 7
        %v3817 = vsub.s32 %v3814, %v3816
        %v3818 = vrot.slane %v3811, %v3817
        %v3819 = vcombine.low %v3807, %v3808
        %v3821 = vunpack.c.l.s4 1983009808
        %v3822 = vunpack.c.0.s8 %v3821
        %v3823 = vlaneseq
        %v3824 = vshrl.u32 %v3823, 7
        %v3825 = vsub.s32 %v3822, %v3824
        %v3826 = vrot.slane %v3819, %v3825
        %v3827 = vcombine.low %v3799, %v3806
        %v3829 = vunpack.c.l.s4 1983009808
        %v3830 = vunpack.c.0.s8 %v3829
        %v3831 = vlaneseq
        %v3832 = vshrl.u32 %v3831, 7
        %v3833 = vsub.s32 %v3830, %v3832
        %v3834 = vrot.slane %v3827, %v3833
        %v3835 = vcombine.low %v3809, %v3810
        %v3837 = vunpack.c.l.s4 1983009808
        %v3838 = vunpack.c.0.s8 %v3837
        %v3839 = vlaneseq
        %v3840 = vshrl.u32 %v3839, 7
        %v3841 = vsub.s32 %v3838, %v3840
        %v3842 = vrot.slane %v3835, %v3841
        %v3843 = vcombine.low %v3818, %v3826
        %v3844 = vcombine.high %v3818, %v3826
        %v3846 = vunpack.c.l.s4 1934713408
        %v3847 = vunpack.c.0.s8 %v3846
        %v3848 = vlaneseq
        %v3849 = vshrl.u32 %v3848, 7
        %v3850 = vsub.s32 %v3847, %v3849
        %v3851 = vrot.slane %v3843, %v3850
        %v3853 = vunpack.c.l.s4 1934713408
        %v3854 = vunpack.c.0.s8 %v3853
        %v3855 = vlaneseq
        %v3856 = vshrl.u32 %v3855, 7
        %v3857 = vsub.s32 %v3854, %v3856
        %v3858 = vrot.slane %v3844, %v3857
        %v3859 = vcombine.low %v3834, %v3842
        %v3860 = vcombine.high %v3834, %v3842
        %v3862 = vunpack.c.l.s4 1934713408
        %v3863 = vunpack.c.0.s8 %v3862
        %v3864 = vlaneseq
        %v3865 = vshrl.u32 %v3864, 7
        %v3866 = vsub.s32 %v3863, %v3865
        %v3867 = vrot.slane %v3859, %v3866
        %v3869 = vunpack.c.l.s4 1934713408
        %v3870 = vunpack.c.0.s8 %v3869
        %v3871 = vlaneseq
        %v3872 = vshrl.u32 %v3871, 7
        %v3873 = vsub.s32 %v3870, %v3872
        %v3874 = vrot.slane %v3860, %v3873
        %v3875 = vcombine.low %v3851, %v3867
        %v3876 = vcombine.high %v3851, %v3867
        %v3877 = vcombine.low %v3858, %v3874
        %v3878 = vcombine.high %v3858, %v3874
        %3880 = vrot.lane.b32.xlu0 %v3876, 32
        %v3881 = vpop.permute.xlu0 %3880
        %3884 = vrot.lane.b32.xlu0 %v3877, 64
        %v3885 = vpop.permute.xlu0 %3884
        %3888 = vrot.lane.b32.xlu0 %v3878, 96
        %v3889 = vpop.permute.xlu0 %3888
        %v3891 = vsel %vm1567, %v3875, %v3881
        %v3892 = vsel %vm2135, %v3891, %v3885
        %v3893 = vsel %vm2137, %v3892, %v3889
        %v3894 = vpack.c.bf16 %v3893, %v3893
        %v3911 = vunpack.c.l.b16 %v2302
        %v3912 = vunpack.c.l.b16 %v2303
        %v3913 = vunpack.c.l.b16 %v2304
        %v3914 = vunpack.c.l.b16 %v2305
        %v3915 = vunpack.c.l.b16 %v2306
        %v3916 = vunpack.c.l.b16 %v2307
        %v3917 = vunpack.c.l.b16 %v2308
        %v3918 = vunpack.c.l.b16 %v2309
        %v3919 = vunpack.c.l.b16 %v2310
        %v3920 = vunpack.c.l.b16 %v2311
        %v3921 = vunpack.c.l.b16 %v2312
        %v3922 = vunpack.c.l.b16 %v2313
        %v3923 = vunpack.c.l.b16 %v2314
        %v3924 = vunpack.c.l.b16 %v2315
        %v3925 = vunpack.c.l.b16 %v2316
        %v3926 = vunpack.c.l.b16 %v2317
        %v3927 = vpack.c.b16 %v3912, %v3911
        %v3928 = vpack.c.b16 %v3914, %v3913
        %v3929 = vpack.c.b16 %v3916, %v3915
        %v3930 = vpack.c.b16 %v3918, %v3917
        %v3931 = vpack.c.b16 %v3920, %v3919
        %v3932 = vpack.c.b16 %v3922, %v3921
        %v3933 = vpack.c.b16 %v3924, %v3923
        %v3934 = vpack.c.b16 %v3926, %v3925
        %3943 = vmatprep.subr.bf16.mxu0 0
        %3944 = vmatpush1.bf16.msra.mxu0 %v3934
        %3945 = vmatprep.subr.bf16.mxu0 0
        %3946 = vmatpush1.bf16.msra.mxu0 %v3933
        %3947 = vmatprep.subr.bf16.mxu0 0
        %3948 = vmatpush1.bf16.msra.mxu0 %v3932
        %3949 = vmatprep.subr.bf16.mxu0 0
        %3950 = vmatpush1.bf16.msra.mxu0 %v3931
        %3951 = vmatprep.subr.bf16.mxu0 0
        %3952 = vmatpush1.bf16.msra.mxu0 %v3930
        %3953 = vmatprep.subr.bf16.mxu0 0
        %3954 = vmatpush1.bf16.msra.mxu0 %v3929
        %3955 = vmatprep.subr.bf16.mxu0 0
        %3956 = vmatpush1.bf16.msra.mxu0 %v3928
        %3957 = vmatprep.subr.bf16.mxu0 0
        %3958 = vmatpush1.bf16.msra.mxu0 %v3927
        %3959 = vmatprep.subr.bf16.mxu0 0
        %3960 = vmatpush2.bf16.msra.mxu0 0
        %3961 = vmatprep.subr.bf16.mxu0 0
        %3962 = vmatpush2.bf16.msra.mxu0 0
        %3963 = vmatprep.subr.bf16.mxu0 0
        %3964 = vmatpush2.bf16.msra.mxu0 0
        %3965 = vmatprep.subr.bf16.mxu0 0
        %3966 = vmatpush2.bf16.msra.mxu0 0
        %3967 = vmatprep.subr.bf16.mxu0 0
        %3968 = vmatpush2.bf16.msra.mxu0 0
        %3969 = vmatprep.subr.bf16.mxu0 0
        %3970 = vmatpush2.bf16.msra.mxu0 0
        %3971 = vmatprep.subr.bf16.mxu0 0
        %3972 = vmatpush2.bf16.msra.mxu0 0
        %3973 = vmatprep.subr.bf16.mxu0 0
        %3974 = vmatpush2.bf16.msra.mxu0 0
        %3975 = vmatprep.mubr.bf16.mxu0 0
        %3976 = vmatmul.mubr.bf16.gmra.mxu0 %v3894
        %v3977 = vpop.f32.mrf.mxu0
        %v3978 = vadd.f32 %v2253, %v3977
        %v3979 = vpop.f32.mrf.mxu0
        %v3980 = vpop.f32.mrf.mxu0
        %v3981 = vpop.f32.mrf.mxu0
        %3982 = vdwg.mxu0
        %3983 = vadd.xlane.f32.xlu0 %v3978
        %v3984 = vpop.xlane.xlu0 %3983
        %v3985 = vmul.f32 %v3984, %v2230
        %v3986 = vsub.f32 %v3978, %v3985
        %v3987 = vmul.f32 %v3986, %v3986
        %3988 = vadd.xlane.f32.xlu0 %v3987
        %v3989 = vpop.xlane.xlu0 %3988
        %v3990 = vmul.f32 %v3989, %v2230
        %v3991 = vadd.f32 %v3990, 1e-05
        %v3992 = vrsqrt.pop %v3991
        %v3993 = vmul.f32 %v3986, %v3992
        %v3995 = vlaneseq
        %v3996 = vshrl.u32 %v3995, 7
        %v3997 = vsub.s32 0, %v3996
        %v3998 = vrot.slane %v2318, %v3997
        %v4000 = vmul.f32 %v3993, %v3998
        %v4002 = vlaneseq
        %v4003 = vshrl.u32 %v4002, 7
        %v4004 = vsub.s32 0, %v4003
        %v4005 = vrot.slane %v2319, %v4004
        %v4007 = vadd.f32 %v4000, %v4005
        %v4008 = vpack.c.bf16 %v4007, %v4007
        %v4009 = vld [vmem:[%s17] sm:$0xff]
        %v4010 = vld [vmem:[%s17 + $0x8] sm:$0xff]
        %v4011 = vld [vmem:[%s17 + $0x10] sm:$0xff]
        %v4012 = vld [vmem:[%s17 + $0x18] sm:$0xff]
        %v4013 = vld [vmem:[%s17 + $0x20] sm:$0xff]
        %v4014 = vld [vmem:[%s17 + $0x28] sm:$0xff]
        %v4015 = vld [vmem:[%s17 + $0x30] sm:$0xff]
        %v4016 = vld [vmem:[%s17 + $0x38] sm:$0xff]
        %v4017 = vld [vmem:[%s17 + $0x40] sm:$0xff]
        %v4018 = vld [vmem:[%s17 + $0x48] sm:$0xff]
        %v4019 = vld [vmem:[%s17 + $0x50] sm:$0xff]
        %v4020 = vld [vmem:[%s17 + $0x58] sm:$0xff]
        %v4021 = vld [vmem:[%s17 + $0x60] sm:$0xff]
        %v4022 = vld [vmem:[%s17 + $0x68] sm:$0xff]
        %v4023 = vld [vmem:[%s17 + $0x70] sm:$0xff]
        %v4024 = vld [vmem:[%s17 + $0x78] sm:$0xff]
        %v4025 = vld [vmem:[%s18] sm:$0x3]
        %v4027 = vlaneseq
        %v4028 = vshrl.u32 %v4027, 7
        %v4029 = vsub.s32 0, %v4028
        %v4030 = vrot.slane %v4025, %v4029
        %v4031 = vlaneseq
        %v4032 = vshrl.u32 %v4031, 7
        %v4033 = vsub.s32 1, %v4032
        %v4034 = vrot.slane %v4025, %v4033
        %v4053 = vunpack.c.l.b16 %v4009
        %v4054 = vunpack.c.h.b16 %v4009
        %v4055 = vunpack.c.l.b16 %v4010
        %v4056 = vunpack.c.h.b16 %v4010
        %v4057 = vunpack.c.l.b16 %v4011
        %v4058 = vunpack.c.h.b16 %v4011
        %v4059 = vunpack.c.l.b16 %v4012
        %v4060 = vunpack.c.h.b16 %v4012
        %v4061 = vunpack.c.l.b16 %v4013
        %v4062 = vunpack.c.h.b16 %v4013
        %v4063 = vunpack.c.l.b16 %v4014
        %v4064 = vunpack.c.h.b16 %v4014
        %v4065 = vunpack.c.l.b16 %v4015
        %v4066 = vunpack.c.h.b16 %v4015
        %v4067 = vunpack.c.l.b16 %v4016
        %v4068 = vunpack.c.h.b16 %v4016
        %v4069 = vunpack.c.l.b16 %v4017
        %v4070 = vunpack.c.h.b16 %v4017
        %v4071 = vunpack.c.l.b16 %v4018
        %v4072 = vunpack.c.h.b16 %v4018
        %v4073 = vunpack.c.l.b16 %v4019
        %v4074 = vunpack.c.h.b16 %v4019
        %v4075 = vunpack.c.l.b16 %v4020
        %v4076 = vunpack.c.h.b16 %v4020
        %v4077 = vunpack.c.l.b16 %v4021
        %v4078 = vunpack.c.h.b16 %v4021
        %v4079 = vunpack.c.l.b16 %v4022
        %v4080 = vunpack.c.h.b16 %v4022
        %v4081 = vunpack.c.l.b16 %v4023
        %v4082 = vunpack.c.h.b16 %v4023
        %v4083 = vunpack.c.l.b16 %v4024
        %v4084 = vunpack.c.h.b16 %v4024
        %v4085 = vpack.c.b16 %v4055, %v4053
        %v4086 = vpack.c.b16 %v4056, %v4054
        %v4087 = vpack.c.b16 %v4059, %v4057
        %v4088 = vpack.c.b16 %v4060, %v4058
        %v4089 = vpack.c.b16 %v4063, %v4061
        %v4090 = vpack.c.b16 %v4064, %v4062
        %v4091 = vpack.c.b16 %v4067, %v4065
        %v4092 = vpack.c.b16 %v4068, %v4066
        %v4093 = vpack.c.b16 %v4071, %v4069
        %v4094 = vpack.c.b16 %v4072, %v4070
        %v4095 = vpack.c.b16 %v4075, %v4073
        %v4096 = vpack.c.b16 %v4076, %v4074
        %v4097 = vpack.c.b16 %v4079, %v4077
        %v4098 = vpack.c.b16 %v4080, %v4078
        %v4099 = vpack.c.b16 %v4083, %v4081
        %v4100 = vpack.c.b16 %v4084, %v4082
        %4117 = vmatprep.subr.bf16.mxu0 %v4100
        %4118 = vmatpush1.bf16.msra.mxu0 %v4099
        %4119 = vmatprep.subr.bf16.mxu0 %v4098
        %4120 = vmatpush1.bf16.msra.mxu0 %v4097
        %4121 = vmatprep.subr.bf16.mxu0 %v4096
        %4122 = vmatpush1.bf16.msra.mxu0 %v4095
        %4123 = vmatprep.subr.bf16.mxu0 %v4094
        %4124 = vmatpush1.bf16.msra.mxu0 %v4093
        %4125 = vmatprep.subr.bf16.mxu0 %v4092
        %4126 = vmatpush1.bf16.msra.mxu0 %v4091
        %4127 = vmatprep.subr.bf16.mxu0 %v4090
        %4128 = vmatpush1.bf16.msra.mxu0 %v4089
        %4129 = vmatprep.subr.bf16.mxu0 %v4088
        %4130 = vmatpush1.bf16.msra.mxu0 %v4087
        %4131 = vmatprep.subr.bf16.mxu0 %v4086
        %4132 = vmatpush1.bf16.msra.mxu0 %v4085
        %4133 = vmatprep.subr.bf16.mxu0 0
        %4134 = vmatpush2.bf16.msra.mxu0 0
        %4135 = vmatprep.subr.bf16.mxu0 0
        %4136 = vmatpush2.bf16.msra.mxu0 0
        %4137 = vmatprep.subr.bf16.mxu0 0
        %4138 = vmatpush2.bf16.msra.mxu0 0
        %4139 = vmatprep.subr.bf16.mxu0 0
        %4140 = vmatpush2.bf16.msra.mxu0 0
        %4141 = vmatprep.subr.bf16.mxu0 0
        %4142 = vmatpush2.bf16.msra.mxu0 0
        %4143 = vmatprep.subr.bf16.mxu0 0
        %4144 = vmatpush2.bf16.msra.mxu0 0
        %4145 = vmatprep.subr.bf16.mxu0 0
        %4146 = vmatpush2.bf16.msra.mxu0 0
        %4147 = vmatprep.subr.bf16.mxu0 0
        %4148 = vmatpush2.bf16.msra.mxu0 0
        %4149 = vmatprep.mubr.bf16.mxu0 0
        %4150 = vmatmul.mubr.bf16.gmra.mxu0 %v4008
        %v4151 = vpop.f32.mrf.mxu0
        %v4152 = vadd.f32 %v4030, %v4151
        %v4153 = vpop.f32.mrf.mxu0
        %v4154 = vadd.f32 %v4034, %v4153
        %v4155 = vpop.f32.mrf.mxu0
        %v4156 = vpop.f32.mrf.mxu0
        %4157 = vdwg.mxu0
        %v4158 = vmax.f32 %v4152, 0.0
        %v4159 = vmax.f32 %v4154, 0.0
        %v4160 = vpack.c.bf16 %v4158, %v4158
        %v4161 = vpack.c.bf16 %v4159, %v4159
        %v4162 = vld [vmem:[%s19] sm:$0xf]
        %v4163 = vld [vmem:[%s19 + $0x4] sm:$0xf]
        %v4164 = vld [vmem:[%s19 + $0x8] sm:$0xf]
        %v4165 = vld [vmem:[%s19 + $0xc] sm:$0xf]
        %v4166 = vld [vmem:[%s19 + $0x10] sm:$0xf]
        %v4167 = vld [vmem:[%s19 + $0x14] sm:$0xf]
        %v4168 = vld [vmem:[%s19 + $0x18] sm:$0xf]
        %v4169 = vld [vmem:[%s19 + $0x1c] sm:$0xf]
        %v4170 = vld [vmem:[%s19 + $0x20] sm:$0xf]
        %v4171 = vld [vmem:[%s19 + $0x24] sm:$0xf]
        %v4172 = vld [vmem:[%s19 + $0x28] sm:$0xf]
        %v4173 = vld [vmem:[%s19 + $0x2c] sm:$0xf]
        %v4174 = vld [vmem:[%s19 + $0x30] sm:$0xf]
        %v4175 = vld [vmem:[%s19 + $0x34] sm:$0xf]
        %v4176 = vld [vmem:[%s19 + $0x38] sm:$0xf]
        %v4177 = vld [vmem:[%s19 + $0x3c] sm:$0xf]
        %v4178 = vld [vmem:[%s19 + $0x40] sm:$0xf]
        %v4179 = vld [vmem:[%s19 + $0x44] sm:$0xf]
        %v4180 = vld [vmem:[%s19 + $0x48] sm:$0xf]
        %v4181 = vld [vmem:[%s19 + $0x4c] sm:$0xf]
        %v4182 = vld [vmem:[%s19 + $0x50] sm:$0xf]
        %v4183 = vld [vmem:[%s19 + $0x54] sm:$0xf]
        %v4184 = vld [vmem:[%s19 + $0x58] sm:$0xf]
        %v4185 = vld [vmem:[%s19 + $0x5c] sm:$0xf]
        %v4186 = vld [vmem:[%s19 + $0x60] sm:$0xf]
        %v4187 = vld [vmem:[%s19 + $0x64] sm:$0xf]
        %v4188 = vld [vmem:[%s19 + $0x68] sm:$0xf]
        %v4189 = vld [vmem:[%s19 + $0x6c] sm:$0xf]
        %v4190 = vld [vmem:[%s19 + $0x70] sm:$0xf]
        %v4191 = vld [vmem:[%s19 + $0x74] sm:$0xf]
        %v4192 = vld [vmem:[%s19 + $0x78] sm:$0xf]
        %v4193 = vld [vmem:[%s19 + $0x7c] sm:$0xf]
        %v4194 = vld [vmem:[%s20] sm:$0x1]
        %v4196 = vlaneseq
        %v4197 = vshrl.u32 %v4196, 7
        %v4198 = vsub.s32 0, %v4197
        %v4199 = vrot.slane %v4194, %v4198
        %v4233 = vunpack.c.l.b16 %v4162
        %v4234 = vunpack.c.l.b16 %v4163
        %v4235 = vunpack.c.l.b16 %v4164
        %v4236 = vunpack.c.l.b16 %v4165
        %v4237 = vunpack.c.l.b16 %v4166
        %v4238 = vunpack.c.l.b16 %v4167
        %v4239 = vunpack.c.l.b16 %v4168
        %v4240 = vunpack.c.l.b16 %v4169
        %v4241 = vunpack.c.l.b16 %v4170
        %v4242 = vunpack.c.l.b16 %v4171
        %v4243 = vunpack.c.l.b16 %v4172
        %v4244 = vunpack.c.l.b16 %v4173
        %v4245 = vunpack.c.l.b16 %v4174
        %v4246 = vunpack.c.l.b16 %v4175
        %v4247 = vunpack.c.l.b16 %v4176
        %v4248 = vunpack.c.l.b16 %v4177
        %v4249 = vunpack.c.l.b16 %v4178
        %v4250 = vunpack.c.l.b16 %v4179
        %v4251 = vunpack.c.l.b16 %v4180
        %v4252 = vunpack.c.l.b16 %v4181
        %v4253 = vunpack.c.l.b16 %v4182
        %v4254 = vunpack.c.l.b16 %v4183
        %v4255 = vunpack.c.l.b16 %v4184
        %v4256 = vunpack.c.l.b16 %v4185
        %v4257 = vunpack.c.l.b16 %v4186
        %v4258 = vunpack.c.l.b16 %v4187
        %v4259 = vunpack.c.l.b16 %v4188
        %v4260 = vunpack.c.l.b16 %v4189
        %v4261 = vunpack.c.l.b16 %v4190
        %v4262 = vunpack.c.l.b16 %v4191
        %v4263 = vunpack.c.l.b16 %v4192
        %v4264 = vunpack.c.l.b16 %v4193
        %v4265 = vpack.c.b16 %v4234, %v4233
        %v4266 = vpack.c.b16 %v4236, %v4235
        %v4267 = vpack.c.b16 %v4238, %v4237
        %v4268 = vpack.c.b16 %v4240, %v4239
        %v4269 = vpack.c.b16 %v4242, %v4241
        %v4270 = vpack.c.b16 %v4244, %v4243
        %v4271 = vpack.c.b16 %v4246, %v4245
        %v4272 = vpack.c.b16 %v4248, %v4247
        %v4273 = vpack.c.b16 %v4250, %v4249
        %v4274 = vpack.c.b16 %v4252, %v4251
        %v4275 = vpack.c.b16 %v4254, %v4253
        %v4276 = vpack.c.b16 %v4256, %v4255
        %v4277 = vpack.c.b16 %v4258, %v4257
        %v4278 = vpack.c.b16 %v4260, %v4259
        %v4279 = vpack.c.b16 %v4262, %v4261
        %v4280 = vpack.c.b16 %v4264, %v4263
        %4297 = vmatprep.subr.bf16.mxu0 0
        %4298 = vmatpush1.bf16.msra.mxu0 %v4272
        %4299 = vmatprep.subr.bf16.mxu0 0
        %4300 = vmatpush1.bf16.msra.mxu0 %v4271
        %4301 = vmatprep.subr.bf16.mxu0 0
        %4302 = vmatpush1.bf16.msra.mxu0 %v4270
        %4303 = vmatprep.subr.bf16.mxu0 0
        %4304 = vmatpush1.bf16.msra.mxu0 %v4269
        %4305 = vmatprep.subr.bf16.mxu0 0
        %4306 = vmatpush1.bf16.msra.mxu0 %v4268
        %4307 = vmatprep.subr.bf16.mxu0 0
        %4308 = vmatpush1.bf16.msra.mxu0 %v4267
        %4309 = vmatprep.subr.bf16.mxu0 0
        %4310 = vmatpush1.bf16.msra.mxu0 %v4266
        %4311 = vmatprep.subr.bf16.mxu0 0
        %4312 = vmatpush1.bf16.msra.mxu0 %v4265
        %4313 = vmatprep.subr.bf16.mxu0 0
        %4314 = vmatpush2.bf16.msra.mxu0 %v4280
        %4315 = vmatprep.subr.bf16.mxu0 0
        %4316 = vmatpush2.bf16.msra.mxu0 %v4279
        %4317 = vmatprep.subr.bf16.mxu0 0
        %4318 = vmatpush2.bf16.msra.mxu0 %v4278
        %4319 = vmatprep.subr.bf16.mxu0 0
        %4320 = vmatpush2.bf16.msra.mxu0 %v4277
        %4321 = vmatprep.subr.bf16.mxu0 0
        %4322 = vmatpush2.bf16.msra.mxu0 %v4276
        %4323 = vmatprep.subr.bf16.mxu0 0
        %4324 = vmatpush2.bf16.msra.mxu0 %v4275
        %4325 = vmatprep.subr.bf16.mxu0 0
        %4326 = vmatpush2.bf16.msra.mxu0 %v4274
        %4327 = vmatprep.subr.bf16.mxu0 0
        %4328 = vmatpush2.bf16.msra.mxu0 %v4273
        %4329 = vmatprep.mubr.bf16.mxu0 %v4161
        %4330 = vmatmul.mubr.bf16.gmra.mxu0 %v4160
        %v4331 = vpop.f32.mrf.mxu0
        %v4332 = vadd.f32 %v4199, %v4331
        %v4333 = vpop.f32.mrf.mxu0
        %v4334 = vpop.f32.mrf.mxu0
        %v4335 = vpop.f32.mrf.mxu0
        %4336 = vdwg.mxu0
        %v4337 = vadd.f32 %v4007, %v4332
        %v4338 = vld [vmem:[%s21] sm:$0x1]
        %v4339 = vld [vmem:[%s22] sm:$0x1]
        %4340 = vadd.xlane.f32.xlu0 %v4337
        %v4341 = vpop.xlane.xlu0 %4340
        %v4342 = vmul.f32 %v4341, %v2230
        %v4343 = vsub.f32 %v4337, %v4342
        %v4344 = vmul.f32 %v4343, %v4343
        %4345 = vadd.xlane.f32.xlu0 %v4344
        %v4346 = vpop.xlane.xlu0 %4345
        %v4347 = vmul.f32 %v4346, %v2230
        %v4348 = vadd.f32 %v4347, 1e-05
        %v4349 = vrsqrt.pop %v4348
        %v4350 = vmul.f32 %v4343, %v4349
        %v4352 = vlaneseq
        %v4353 = vshrl.u32 %v4352, 7
        %v4354 = vsub.s32 0, %v4353
        %v4355 = vrot.slane %v4338, %v4354
        %v4357 = vmul.f32 %v4350, %v4355
        %v4359 = vlaneseq
        %v4360 = vshrl.u32 %v4359, 7
        %v4361 = vsub.s32 0, %v4360
        %v4362 = vrot.slane %v4339, %v4361
        %v4364 = vadd.f32 %v4357, %v4362
        %4365 = vst [vmem:[%s755] sm:$0xff] %v4364
        %s4366 = sand.u32 %s553, 1
        %s4367 = scalar_lea.sflag [#allocation3], %s4366
        %s4368 = sand.u32 %s553, 1
        %s4369 = smul.addr %s4368, 8
        %s4370 = scalar_lea.vmem [#allocation2], %s4369
        // Predicated region
        $region113: #{decoder_block_forward.1} parent=111 // pred_check
          %p4371 = pneg %p563
        $region114: #{decoder_block_forward.1} parent=111 // pred_check_branch
          %4373 = sbr.rel (%p4371) target = $region116
        $region115: #{decoder_block_forward.1} parent=111 // pred_region
          %s4375 = ssub.s32 128, 128
          %4376 = vsyncadd %s4367, %s4375
          %s4377 = smul.addr %s37, 128
          %s4378 = scalar_lea.hbm %s23, %s4377
          %s4380 = sshll.u32 %s4370, 4
          %s4381 = int_to_ptr.vmem [resolvable:$true] %s4380
          %4383 = dma.vmem_to_hbm [thread:$0]  %s4381, 128, %s4378, %s4367
        $region116: #{decoder_block_forward.1} parent=111 // pred_fallthru
          _
      $region112: #{decoder_block_forward.1} parent=5 // pred_fallthru
        _
      %p4384 = scmp.le.s32.totalorder 2, %s32
      // Predicated region
      $region117: #{decoder_block_forward.1} parent=5 // pred_check
        %p4385 = pneg %p4384
      $region118: #{decoder_block_forward.1} parent=5 // pred_check_branch
        %4387 = sbr.rel (%p4385) target = $region120
      $region119: #{decoder_block_forward.1} parent=5 // pred_region
        %s4388 = ssub.s32 %s32, 2
        // Predicated region
        $region121: #{decoder_block_forward.1} parent=119 // pred_check
          %p4389 = pneg %p569
        $region122: #{decoder_block_forward.1} parent=119 // pred_check_branch
          %4391 = sbr.rel (%p4389) target = $region124
        $region123: #{decoder_block_forward.1} parent=119 // pred_region
          %s4392 = sand.u32 %s554, 1
          %s4393 = scalar_lea.sflag [#allocation3], %s4392
          %s4394 = sand.u32 %s554, 1
          %s4395 = smul.addr %s4394, 8
          %s4396 = scalar_lea.vmem [#allocation2], %s4395
          %4397 = dma.done %s4393, 128
        $region124: #{decoder_block_forward.1} parent=119 // pred_fallthru
          _
      $region120: #{decoder_block_forward.1} parent=5 // pred_fallthru
        _
    $region6: #{decoder_block_forward.1} parent=1 // loop_footer
      %s36 = sadd.s32 1, %s32
    $region7: #{decoder_block_forward.1} parent=1 // loop_footer_branch
      %31 = sbr.rel target = $region3
    $region8: #{decoder_block_forward.1} parent=1 // loop_exit
      _
    %4398 = vsyncpa [#allocation3], 1
    %s4399 = scalar_lea.sflag [#allocation3], 1
    %4400 = vsyncpa %s4399, 1

</llo_original>
